<compile_context>
chip_gen: v5e
topology: v5e:2x2
jax: 0.10.0
libtpu: 0.0.40
codegen_flags: <defaults>
</compile_context>

<pallas_src>
import jax
import jax.numpy as jnp
from jax.experimental import pallas as pl
from jax.experimental.pallas import tpu as pltpu

B = 2
H = 16
W = 16
HW = H * W              # 256
L = B * HW              # 512  (batch folded onto lanes -> fully lane-dense)
CIN = 1                 # img_channel
WIDTH = 16              # width
DW = 2 * WIDTH          # dw_channel = c * DW_Expand
FFN = 2 * WIDTH         # ffn_channel = c * FFN_Expand
EPS = 1e-6

# ---- packed-parameter layout ------------------------------------------------
# W slab: stacked (rows, 16) matmul operands (contraction dim on lanes).
ROW_C1 = 0              # (32, 16)  conv1  (LN1 affine folded in)
ROW_SCA = 32            # (16, 16)  sca 1x1
ROW_C3 = 48             # (16, 16)  conv3  (beta folded in)
ROW_C4 = 64             # (32, 16)  conv4  (LN2 affine folded in)
ROW_C5 = 96             # (16, 16)  conv5  (gamma folded in)
ROW_INTRO = 112         # (16, 16)  intro taps, cols 0..8 used
ROW_END = 128           # (16, 16)  ending taps, rows 0..8 used
W_ROWS = 144

# V slab: per-channel vectors as columns (length 16/32, zero-padded to 32).
CMAX = 32
COL_INTRO_B = 0
COL_C1_B = 1            # folded: c1_b + c1_w^T n1_b
COL_C2_W = 2            # 9 columns: 2..10 (depthwise taps, per channel)
COL_C2_B = 11
COL_SCA_B = 12
COL_C3_B = 13           # folded: c3_b * beta
COL_C4_B = 14           # folded: c4_b + c4_w^T n2_b
COL_C5_B = 15           # folded: c5_b * gamma
COL_END_B = 16
NCOLS = 17

# mask slab: (10, L) f32 -- 9 tap validity masks + image-0 lane selector
MASK_ROWS = 10
ROW_IMG0 = 9


# ---------------------------------------------------------------------------
# fused NAFNet kernel: single grid step, channel-major (C, B*HW) layout
# ---------------------------------------------------------------------------
def nafnet_kernel(x_ref, w_ref, v_ref, m_ref, o_ref, xs_ref):
    xin = x_ref[...]                                      # (1, L) both images on lanes

    def vcol(j, n):
        return v_ref[0:n, j:j + 1]                        # (n, 1) lane-broadcastable

    def mrow(k):
        return m_ref[k:k + 1, :]                          # (1, L)

    def shifted(t, k):
        dh, dw = k // 3 - 1, k % 3 - 1
        s = (-(dh * W + dw)) % L
        return t if s == 0 else pltpu.roll(t, shift=s, axis=1)

    def wmat(row0, n):
        return w_ref[row0:row0 + n, :]                    # (n, 16)

    def dotp(a, b):
        return jnp.dot(a, b, preferred_element_type=jnp.float32)

    # ---- intro 3x3 conv (1 -> 16): masked-shifted rows -> one MXU matmul -----
    xs_ref[9:16, :] = jnp.zeros((7, L), jnp.float32)      # pad rows for a clean K=16 dot
    for k in range(9):
        if k == 4:
            xs_ref[4:5, :] = xin                          # center tap: always valid
        else:
            xs_ref[k:k + 1, :] = mrow(k) * shifted(xin, k)
    x0 = dotp(wmat(ROW_INTRO, WIDTH), xs_ref[...]) + vcol(COL_INTRO_B, WIDTH)   # (16, L)

    # ---------------- NAFBlock ----------------
    # LayerNorm2d #1 (affine folded into conv1) + conv1 (16 -> 32)
    mu = jnp.mean(x0, axis=0, keepdims=True)
    var = jnp.mean((x0 - mu) ** 2, axis=0, keepdims=True)
    t = (x0 - mu) * jax.lax.rsqrt(var + EPS)
    t = dotp(wmat(ROW_C1, DW), t) + vcol(COL_C1_B, DW)                          # (32, L)

    # depthwise 3x3 (groups = 32): per-channel tap weight * masked roll
    d = vcol(COL_C2_W + 4, DW) * t                        # center tap, no mask/roll
    for k in range(9):
        if k == 4:
            continue
        d = d + vcol(COL_C2_W + k, DW) * (mrow(k) * shifted(t, k))
    d = d + vcol(COL_C2_B, DW)

    # SimpleGate
    g = d[:DW // 2, :] * d[DW // 2:, :]                   # (16, L)

    # SCA: per-image global average pool -> 1x1 matvec -> channel-wise scale
    p0 = jnp.mean(g[:, :HW], axis=1, keepdims=True)       # (16, 1) image 0
    p1 = jnp.mean(g[:, HW:], axis=1, keepdims=True)       # (16, 1) image 1
    s0 = dotp(wmat(ROW_SCA, WIDTH), p0) + vcol(COL_SCA_B, WIDTH)
    s1 = dotp(wmat(ROW_SCA, WIDTH), p1) + vcol(COL_SCA_B, WIDTH)
    img0 = m_ref[ROW_IMG0:ROW_IMG0 + 1, :]                # (1, L): 1.0 on image-0 lanes
    g = g * (s1 + (s0 - s1) * img0)

    # conv3 (beta folded in) + residual 1
    y = x0 + dotp(wmat(ROW_C3, WIDTH), g) + vcol(COL_C3_B, WIDTH)

    # LayerNorm2d #2 (affine folded into conv4) + conv4 (16 -> 32)
    mu = jnp.mean(y, axis=0, keepdims=True)
    var = jnp.mean((y - mu) ** 2, axis=0, keepdims=True)
    t = (y - mu) * jax.lax.rsqrt(var + EPS)
    t = dotp(wmat(ROW_C4, FFN), t) + vcol(COL_C4_B, FFN)

    # SimpleGate + conv5 (gamma folded in) + residual 2
    g2 = t[:FFN // 2, :] * t[FFN // 2:, :]
    z = y + dotp(wmat(ROW_C5, WIDTH), g2) + vcol(COL_C5_B, WIDTH)
    # -------------------------------------------

    # ---- ending 3x3 conv (16 -> 1): channel reduction on the MXU first -------
    u = dotp(w_ref[ROW_END:ROW_END + 9, :], z)            # (9, L) per-tap channel sums
    out = xin + v_ref[0:1, COL_END_B:COL_END_B + 1]       # global residual + bias
    for k in range(9):
        if k == 4:
            out = out + u[4:5, :]
        else:
            out = out + mrow(k) * shifted(u[k:k + 1, :], k)
    o_ref[...] = out                                      # (1, L) lane-dense


# ---------------------------------------------------------------------------
# parameter packing (LN/beta/gamma folds + mask precompute, done once off-path)
# ---------------------------------------------------------------------------
def pack_params(p):
    f32 = jnp.float32
    n1_w = jnp.asarray(p['n1_w'], f32); n1_b = jnp.asarray(p['n1_b'], f32)
    n2_w = jnp.asarray(p['n2_w'], f32); n2_b = jnp.asarray(p['n2_b'], f32)
    beta = jnp.asarray(p['beta'], f32).reshape(-1)
    gamma = jnp.asarray(p['gamma'], f32).reshape(-1)
    c1_w = jnp.asarray(p['c1_w'], f32)     # (16, 32) (Cin, Cout)
    c3_w = jnp.asarray(p['c3_w'], f32)     # (16, 16)
    c4_w = jnp.asarray(p['c4_w'], f32)     # (16, 32)
    c5_w = jnp.asarray(p['c5_w'], f32)     # (16, 16)
    sca_w = jnp.asarray(p['sca_w'], f32)   # (16, 16)

    # folded matmul operands, stored as (Cout, Cin)
    wm1 = (c1_w * n1_w[:, None]).T                         # LN1 weight folded
    wm4 = (c4_w * n2_w[:, None]).T                         # LN2 weight folded
    wm3 = c3_w.T * beta[:, None]                           # beta folded
    wm5 = c5_w.T * gamma[:, None]                          # gamma folded
    wmsca = sca_w.T

    intro_w = jnp.asarray(p['intro_w'], f32)               # (3,3,1,16) HWIO
    wi = intro_w.reshape(9, WIDTH).T                       # (16, 9): [o, k]
    wi = jnp.pad(wi, ((0, 0), (0, WIDTH - 9)))             # (16, 16)

    end_w = jnp.asarray(p['end_w'], f32)                   # (3,3,16,1) HWIO
    we = end_w.reshape(9, WIDTH)                           # (9, 16): [k, c]
    we = jnp.pad(we, ((0, WIDTH - 9), (0, 0)))             # (16, 16)

    w_slab = jnp.concatenate([wm1, wmsca, wm3, wm4, wm5, wi, we], axis=0)  # (144, 16)

    def pc(vec):
        vec = jnp.asarray(vec, f32).reshape(-1)
        return jnp.pad(vec, (0, CMAX - vec.shape[0]))

    b1f = jnp.asarray(p['c1_b'], f32) + c1_w.T @ n1_b      # LN1 bias folded
    b4f = jnp.asarray(p['c4_b'], f32) + c4_w.T @ n2_b      # LN2 bias folded
    b3f = jnp.asarray(p['c3_b'], f32) * beta               # beta folded
    b5f = jnp.asarray(p['c5_b'], f32) * gamma              # gamma folded

    cols = [None] * NCOLS
    cols[COL_INTRO_B] = pc(p['intro_b'])
    cols[COL_C1_B] = pc(b1f)
    for k in range(9):
        cols[COL_C2_W + k] = pc(p['c2_w'][k // 3, k % 3, 0, :])
    cols[COL_C2_B] = pc(p['c2_b'])
    cols[COL_SCA_B] = pc(p['sca_b'])
    cols[COL_C3_B] = pc(b3f)
    cols[COL_C4_B] = pc(b4f)
    cols[COL_C5_B] = pc(b5f)
    cols[COL_END_B] = pc(p['end_b'])
    v_slab = jnp.stack(cols, axis=1)                       # (32, 17)

    # precomputed 'SAME'-padding masks on the folded (B*HW) lane axis
    lane = jnp.arange(L)
    q = lane % HW
    rr = q // W
    cc = q % W
    rows = []
    for k in range(9):
        dh, dw = k // 3 - 1, k % 3 - 1
        m = ((rr + dh >= 0) & (rr + dh < H) & (cc + dw >= 0) & (cc + dw < W))
        rows.append(m.astype(f32))
    rows.append((lane < HW).astype(f32))                   # image-0 lane selector
    m_slab = jnp.stack(rows, axis=0)                       # (10, 512)

    return w_slab, v_slab, m_slab


# ---------------------------------------------------------------------------
# wrapper: NCHW in / NCHW out (CIN=1 -> pure reshapes, no transpose / pad)
# ---------------------------------------------------------------------------
def nafnet_pallas(x_nchw, packed):
    w_slab, v_slab, m_slab = packed
    x_row = x_nchw.reshape(1, L).astype(jnp.float32)       # batch folded onto lanes

    out_row = pl.pallas_call(
        nafnet_kernel,
        out_shape=jax.ShapeDtypeStruct((1, L), jnp.float32),
        grid=(1,),                                         # single step (one TC; the
        in_specs=[                                         # kernel is latency-bound)
            pl.BlockSpec((1, L), lambda i: (0, 0)),
            pl.BlockSpec((W_ROWS, WIDTH), lambda i: (0, 0)),
            pl.BlockSpec((CMAX, NCOLS), lambda i: (0, 0)),
            pl.BlockSpec((MASK_ROWS, L), lambda i: (0, 0)),
        ],
        out_specs=pl.BlockSpec((1, L), lambda i: (0, 0)),
        scratch_shapes=[pltpu.VMEM((WIDTH, L), jnp.float32)],
        compiler_params=pltpu.CompilerParams(dimension_semantics=("arbitrary",)),
        cost_estimate=pl.CostEstimate(flops=2_600_000, transcendentals=2048,
                                      bytes_accessed=40_000),
    )(x_row, w_slab, v_slab, m_slab)

    return out_row.reshape(B, CIN, H, W)


# ---------------------------------------------------------------------------
# pure-JAX reference (same math, using lax.conv) for the correctness check
# ---------------------------------------------------------------------------
def nafnet_ref(x_nchw, p):
    x = jnp.transpose(x_nchw, (0, 2, 3, 1)).astype(jnp.float32)

    def conv(t, w, b, groups=1):
        y = jax.lax.conv_general_dilated(
            t, w, (1, 1), 'SAME',
            dimension_numbers=('NHWC', 'HWIO', 'NHWC'),
            feature_group_count=groups)
        return y + b.reshape(1, 1, 1, -1)

    def ln(t, w, b):
        mu = t.mean(-1, keepdims=True)
        var = ((t - mu) ** 2).mean(-1, keepdims=True)
        return (t - mu) / jnp.sqrt(var + EPS) * w.reshape(1, 1, 1, -1) + b.reshape(1, 1, 1, -1)

    x0 = conv(x, p['intro_w'], p['intro_b'])
    t = ln(x0, p['n1_w'], p['n1_b'])
    t = jnp.einsum('bhwc,cd->bhwd', t, p['c1_w']) + p['c1_b'].reshape(1, 1, 1, -1)
    t = conv(t, p['c2_w'], p['c2_b'], groups=DW)
    t = t[..., :DW // 2] * t[..., DW // 2:]
    pooled = t.mean(axis=(1, 2), keepdims=True)
    sca = jnp.einsum('bhwc,cd->bhwd', pooled, p['sca_w']) + p['sca_b'].reshape(1, 1, 1, -1)
    t = t * sca
    t = jnp.einsum('bhwc,cd->bhwd', t, p['c3_w']) + p['c3_b'].reshape(1, 1, 1, -1)
    y = x0 + t * p['beta'].reshape(1, 1, 1, -1)
    t = ln(y, p['n2_w'], p['n2_b'])
    t = jnp.einsum('bhwc,cd->bhwd', t, p['c4_w']) + p['c4_b'].reshape(1, 1, 1, -1)
    t = t[..., :FFN // 2] * t[..., FFN // 2:]
    t = jnp.einsum('bhwc,cd->bhwd', t, p['c5_w']) + p['c5_b'].reshape(1, 1, 1, -1)
    z = y + t * p['gamma'].reshape(1, 1, 1, -1)
    out = conv(z, p['end_w'], p['end_b']) + x
    return jnp.transpose(out, (0, 3, 1, 2))


# ---------------------------------------------------------------------------
# deterministic synthetic parameters (shapes from the module's __init__)
# ---------------------------------------------------------------------------
def init_params(key):
    keys = jax.random.split(key, 24)
    r = lambda k, s, sc=0.2: (sc * jax.random.normal(k, s)).astype(jnp.float32)
    return {
        'intro_w': r(keys[0], (3, 3, CIN, WIDTH)),        # HWIO
        'intro_b': r(keys[1], (WIDTH,), 0.05),
        'n1_w': (1.0 + r(keys[2], (WIDTH,), 0.1)),
        'n1_b': r(keys[3], (WIDTH,), 0.05),
        'c1_w': r(keys[4], (WIDTH, DW)),                  # 1x1 conv as (Cin, Cout)
        'c1_b': r(keys[5], (DW,), 0.05),
        'c2_w': r(keys[6], (3, 3, 1, DW)),                # depthwise, HWIO groups=DW
        'c2_b': r(keys[7], (DW,), 0.05),
        'sca_w': r(keys[8], (DW // 2, DW // 2)),
        'sca_b': r(keys[9], (DW // 2,), 0.05),
        'c3_w': r(keys[10], (DW // 2, WIDTH)),
        'c3_b': r(keys[11], (WIDTH,), 0.05),
        'beta': r(keys[12], (WIDTH,), 0.1),
        'n2_w': (1.0 + r(keys[13], (WIDTH,), 0.1)),
        'n2_b': r(keys[14], (WIDTH,), 0.05),
        'c4_w': r(keys[15], (WIDTH, FFN)),
        'c4_b': r(keys[16], (FFN,), 0.05),
        'c5_w': r(keys[17], (FFN // 2, WIDTH)),
        'c5_b': r(keys[18], (WIDTH,), 0.05),
        'gamma': r(keys[19], (WIDTH,), 0.1),
        'end_w': r(keys[20], (3, 3, WIDTH, CIN)),         # HWIO
        'end_b': r(keys[21], (CIN,), 0.05),
    }


if __name__ == "__main__":
    key = jax.random.PRNGKey(0)
    pkey, xkey = jax.random.split(key)
    params = init_params(pkey)
    packed = pack_params(params)
    x = jax.random.normal(xkey, (B, CIN, H, W), jnp.float32)   # NCHW like PyTorch

    out = nafnet_pallas(x, packed)
    out = jax.block_until_ready(out)
    assert out.shape == (B, CIN, H, W)

    ref = nafnet_ref(x, params)
    max_err = float(jnp.max(jnp.abs(out - ref)))
    if not bool(jnp.allclose(out, ref, atol=1e-3, rtol=1e-3)):
        raise AssertionError(f"Pallas output mismatch vs reference, max abs err = {max_err}")

    print("KERNEL_OK")
</pallas_src>

<mosaic_0001>
module attributes {stable_mosaic.version = 11 : i64} {
  func.func @nafnet_kernel(%arg0: i32, %arg1: memref<1x512xf32, #tpu.memory_space<vmem>>, %arg2: memref<144x16xf32, #tpu.memory_space<vmem>>, %arg3: memref<32x17xf32, #tpu.memory_space<vmem>>, %arg4: memref<10x512xf32, #tpu.memory_space<vmem>>, %arg5: memref<1x512xf32, #tpu.memory_space<vmem>>, %arg6: memref<16x512xf32, #tpu.memory_space<vmem>>) attributes {dimension_semantics = [#tpu.dimension_semantics<arbitrary>], iteration_bounds = array<i64: 1>, scalar_prefetch = 0 : i64, scratch_operands = 1 : i64, tpu.core_type = #tpu.core_type<tc>, window_params = [{pipeline_mode = #tpu.pipeline_mode<synchronous>, transform_indices = @transform_0, window_bounds = array<i64: 1, 512>}, {pipeline_mode = #tpu.pipeline_mode<synchronous>, transform_indices = @transform_1, window_bounds = array<i64: 144, 16>}, {pipeline_mode = #tpu.pipeline_mode<synchronous>, transform_indices = @transform_2, window_bounds = array<i64: 32, 17>}, {pipeline_mode = #tpu.pipeline_mode<synchronous>, transform_indices = @transform_3, window_bounds = array<i64: 10, 512>}, {pipeline_mode = #tpu.pipeline_mode<synchronous>, transform_indices = @transform_4, window_bounds = array<i64: 1, 512>}]} {
    %c0 = arith.constant 0 : index
    %c0_0 = arith.constant 0 : index
    %0 = vector.load %arg1[%c0, %c0_0] : memref<1x512xf32, #tpu.memory_space<vmem>>, vector<1x512xf32>
    %cst = arith.constant 0.000000e+00 : f32
    %1 = vector.broadcast %cst : f32 to vector<7x512xf32>
    %c9 = arith.constant 9 : index
    %c0_1 = arith.constant 0 : index
    %2 = vector.load %arg6[%c9, %c0_1] : memref<16x512xf32, #tpu.memory_space<vmem>>, vector<7x512xf32>
    tpu.vector_store %arg6[%c9, %c0_1], %1 {strides = array<i32>} : memref<16x512xf32, #tpu.memory_space<vmem>>, vector<7x512xf32>,
    %c0_2 = arith.constant 0 : index
    %c0_3 = arith.constant 0 : index
    %3 = vector.load %arg4[%c0_2, %c0_3] : memref<10x512xf32, #tpu.memory_space<vmem>>, vector<1x512xf32>
    %c17_i32 = arith.constant 17 : i32
    %4 = tpu.dynamic_rotate %0 by %c17_i32 dim 1 : vector<1x512xf32>, i32 -> vector<1x512xf32>
    %5 = arith.mulf %3, %4 : vector<1x512xf32>
    %c0_4 = arith.constant 0 : index
    %c0_5 = arith.constant 0 : index
    %6 = vector.load %arg6[%c0_4, %c0_5] : memref<16x512xf32, #tpu.memory_space<vmem>>, vector<1x512xf32>
    tpu.vector_store %arg6[%c0_4, %c0_5], %5 {strides = array<i32>} : memref<16x512xf32, #tpu.memory_space<vmem>>, vector<1x512xf32>,
    %c1 = arith.constant 1 : index
    %c0_6 = arith.constant 0 : index
    %7 = vector.load %arg4[%c1, %c0_6] : memref<10x512xf32, #tpu.memory_space<vmem>>, vector<1x512xf32>
    %c16_i32 = arith.constant 16 : i32
    %8 = tpu.dynamic_rotate %0 by %c16_i32 dim 1 : vector<1x512xf32>, i32 -> vector<1x512xf32>
    %9 = arith.mulf %7, %8 : vector<1x512xf32>
    %c1_7 = arith.constant 1 : index
    %c0_8 = arith.constant 0 : index
    %10 = vector.load %arg6[%c1_7, %c0_8] : memref<16x512xf32, #tpu.memory_space<vmem>>, vector<1x512xf32>
    tpu.vector_store %arg6[%c1_7, %c0_8], %9 {strides = array<i32>} : memref<16x512xf32, #tpu.memory_space<vmem>>, vector<1x512xf32>,
    %c2 = arith.constant 2 : index
    %c0_9 = arith.constant 0 : index
    %11 = vector.load %arg4[%c2, %c0_9] : memref<10x512xf32, #tpu.memory_space<vmem>>, vector<1x512xf32>
    %c15_i32 = arith.constant 15 : i32
    %12 = tpu.dynamic_rotate %0 by %c15_i32 dim 1 : vector<1x512xf32>, i32 -> vector<1x512xf32>
    %13 = arith.mulf %11, %12 : vector<1x512xf32>
    %c2_10 = arith.constant 2 : index
    %c0_11 = arith.constant 0 : index
    %14 = vector.load %arg6[%c2_10, %c0_11] : memref<16x512xf32, #tpu.memory_space<vmem>>, vector<1x512xf32>
    tpu.vector_store %arg6[%c2_10, %c0_11], %13 {strides = array<i32>} : memref<16x512xf32, #tpu.memory_space<vmem>>, vector<1x512xf32>,
    %c3 = arith.constant 3 : index
    %c0_12 = arith.constant 0 : index
    %15 = vector.load %arg4[%c3, %c0_12] : memref<10x512xf32, #tpu.memory_space<vmem>>, vector<1x512xf32>
    %c1_i32 = arith.constant 1 : i32
    %16 = tpu.dynamic_rotate %0 by %c1_i32 dim 1 : vector<1x512xf32>, i32 -> vector<1x512xf32>
    %17 = arith.mulf %15, %16 : vector<1x512xf32>
    %c3_13 = arith.constant 3 : index
    %c0_14 = arith.constant 0 : index
    %18 = vector.load %arg6[%c3_13, %c0_14] : memref<16x512xf32, #tpu.memory_space<vmem>>, vector<1x512xf32>
    tpu.vector_store %arg6[%c3_13, %c0_14], %17 {strides = array<i32>} : memref<16x512xf32, #tpu.memory_space<vmem>>, vector<1x512xf32>,
    %c4 = arith.constant 4 : index
    %c0_15 = arith.constant 0 : index
    %19 = vector.load %arg6[%c4, %c0_15] : memref<16x512xf32, #tpu.memory_space<vmem>>, vector<1x512xf32>
    tpu.vector_store %arg6[%c4, %c0_15], %0 {strides = array<i32>} : memref<16x512xf32, #tpu.memory_space<vmem>>, vector<1x512xf32>,
    %c5 = arith.constant 5 : index
    %c0_16 = arith.constant 0 : index
    %20 = vector.load %arg4[%c5, %c0_16] : memref<10x512xf32, #tpu.memory_space<vmem>>, vector<1x512xf32>
    %c511_i32 = arith.constant 511 : i32
    %21 = tpu.dynamic_rotate %0 by %c511_i32 dim 1 : vector<1x512xf32>, i32 -> vector<1x512xf32>
    %22 = arith.mulf %20, %21 : vector<1x512xf32>
    %c5_17 = arith.constant 5 : index
    %c0_18 = arith.constant 0 : index
    %23 = vector.load %arg6[%c5_17, %c0_18] : memref<16x512xf32, #tpu.memory_space<vmem>>, vector<1x512xf32>
    tpu.vector_store %arg6[%c5_17, %c0_18], %22 {strides = array<i32>} : memref<16x512xf32, #tpu.memory_space<vmem>>, vector<1x512xf32>,
    %c6 = arith.constant 6 : index
    %c0_19 = arith.constant 0 : index
    %24 = vector.load %arg4[%c6, %c0_19] : memref<10x512xf32, #tpu.memory_space<vmem>>, vector<1x512xf32>
    %c497_i32 = arith.constant 497 : i32
    %25 = tpu.dynamic_rotate %0 by %c497_i32 dim 1 : vector<1x512xf32>, i32 -> vector<1x512xf32>
    %26 = arith.mulf %24, %25 : vector<1x512xf32>
    %c6_20 = arith.constant 6 : index
    %c0_21 = arith.constant 0 : index
    %27 = vector.load %arg6[%c6_20, %c0_21] : memref<16x512xf32, #tpu.memory_space<vmem>>, vector<1x512xf32>
    tpu.vector_store %arg6[%c6_20, %c0_21], %26 {strides = array<i32>} : memref<16x512xf32, #tpu.memory_space<vmem>>, vector<1x512xf32>,
    %c7 = arith.constant 7 : index
    %c0_22 = arith.constant 0 : index
    %28 = vector.load %arg4[%c7, %c0_22] : memref<10x512xf32, #tpu.memory_space<vmem>>, vector<1x512xf32>
    %c496_i32 = arith.constant 496 : i32
    %29 = tpu.dynamic_rotate %0 by %c496_i32 dim 1 : vector<1x512xf32>, i32 -> vector<1x512xf32>
    %30 = arith.mulf %28, %29 : vector<1x512xf32>
    %c7_23 = arith.constant 7 : index
    %c0_24 = arith.constant 0 : index
    %31 = vector.load %arg6[%c7_23, %c0_24] : memref<16x512xf32, #tpu.memory_space<vmem>>, vector<1x512xf32>
    tpu.vector_store %arg6[%c7_23, %c0_24], %30 {strides = array<i32>} : memref<16x512xf32, #tpu.memory_space<vmem>>, vector<1x512xf32>,
    %c8 = arith.constant 8 : index
    %c0_25 = arith.constant 0 : index
    %32 = vector.load %arg4[%c8, %c0_25] : memref<10x512xf32, #tpu.memory_space<vmem>>, vector<1x512xf32>
    %c495_i32 = arith.constant 495 : i32
    %33 = tpu.dynamic_rotate %0 by %c495_i32 dim 1 : vector<1x512xf32>, i32 -> vector<1x512xf32>
    %34 = arith.mulf %32, %33 : vector<1x512xf32>
    %c8_26 = arith.constant 8 : index
    %c0_27 = arith.constant 0 : index
    %35 = vector.load %arg6[%c8_26, %c0_27] : memref<16x512xf32, #tpu.memory_space<vmem>>, vector<1x512xf32>
    tpu.vector_store %arg6[%c8_26, %c0_27], %34 {strides = array<i32>} : memref<16x512xf32, #tpu.memory_space<vmem>>, vector<1x512xf32>,
    %c112 = arith.constant 112 : index
    %c0_28 = arith.constant 0 : index
    %36 = vector.load %arg2[%c112, %c0_28] : memref<144x16xf32, #tpu.memory_space<vmem>>, vector<16x16xf32>
    %c0_29 = arith.constant 0 : index
    %c0_30 = arith.constant 0 : index
    %37 = vector.load %arg6[%c0_29, %c0_30] : memref<16x512xf32, #tpu.memory_space<vmem>>, vector<16x512xf32>
    %cst_31 = arith.constant dense<0.000000e+00> : vector<16x512xf32>
    %38 = tpu.matmul %36, %37, %cst_31 {dimension_numbers = #tpu.dot_dimension_numbers<[1], [0], [0], [1], [0, 0, 1, 1], [], []>} : vector<16x16xf32>, vector<16x512xf32>, vector<16x512xf32> -> vector<16x512xf32>
    %c0_32 = arith.constant 0 : index
    %c0_33 = arith.constant 0 : index
    %39 = vector.load %arg3[%c0_32, %c0_33] : memref<32x17xf32, #tpu.memory_space<vmem>>, vector<16x1xf32>
    %40 = vector.broadcast %39 : vector<16x1xf32> to vector<16x512xf32>
    %41 = arith.addf %38, %40 : vector<16x512xf32>
    %cst_34 = arith.constant dense<0.000000e+00> : vector<512xf32>
    %42 = vector.multi_reduction <add>, %41, %cst_34 [0] : vector<16x512xf32> to vector<512xf32>
    %43 = vector.shape_cast %42 : vector<512xf32> to vector<1x512xf32>
    %cst_35 = arith.constant 1.600000e+01 : f32
    %44 = vector.broadcast %cst_35 : f32 to vector<1x512xf32>
    %45 = arith.divf %43, %44 : vector<1x512xf32>
    %46 = vector.broadcast %45 : vector<1x512xf32> to vector<16x512xf32>
    %47 = arith.subf %41, %46 : vector<16x512xf32>
    %48 = arith.mulf %47, %47 : vector<16x512xf32>
    %cst_36 = arith.constant dense<0.000000e+00> : vector<512xf32>
    %49 = vector.multi_reduction <add>, %48, %cst_36 [0] : vector<16x512xf32> to vector<512xf32>
    %50 = vector.shape_cast %49 : vector<512xf32> to vector<1x512xf32>
    %cst_37 = arith.constant 1.600000e+01 : f32
    %51 = vector.broadcast %cst_37 : f32 to vector<1x512xf32>
    %52 = arith.divf %50, %51 : vector<1x512xf32>
    %53 = vector.broadcast %45 : vector<1x512xf32> to vector<16x512xf32>
    %54 = arith.subf %41, %53 : vector<16x512xf32>
    %cst_38 = arith.constant 9.99999997E-7 : f32
    %55 = vector.broadcast %cst_38 : f32 to vector<1x512xf32>
    %56 = arith.addf %52, %55 : vector<1x512xf32>
    %57 = math.rsqrt %56 : vector<1x512xf32>
    %58 = vector.broadcast %57 : vector<1x512xf32> to vector<16x512xf32>
    %59 = arith.mulf %54, %58 : vector<16x512xf32>
    %c0_39 = arith.constant 0 : index
    %c0_40 = arith.constant 0 : index
    %60 = vector.load %arg2[%c0_39, %c0_40] : memref<144x16xf32, #tpu.memory_space<vmem>>, vector<32x16xf32>
    %cst_41 = arith.constant dense<0.000000e+00> : vector<32x512xf32>
    %61 = tpu.matmul %60, %59, %cst_41 {dimension_numbers = #tpu.dot_dimension_numbers<[1], [0], [0], [1], [0, 0, 1, 1], [], []>} : vector<32x16xf32>, vector<16x512xf32>, vector<32x512xf32> -> vector<32x512xf32>
    %c0_42 = arith.constant 0 : index
    %c1_43 = arith.constant 1 : index
    %62 = vector.load %arg3[%c0_42, %c1_43] : memref<32x17xf32, #tpu.memory_space<vmem>>, vector<32x1xf32>
    %63 = vector.broadcast %62 : vector<32x1xf32> to vector<32x512xf32>
    %64 = arith.addf %61, %63 : vector<32x512xf32>
    %c0_44 = arith.constant 0 : index
    %c6_45 = arith.constant 6 : index
    %65 = vector.load %arg3[%c0_44, %c6_45] : memref<32x17xf32, #tpu.memory_space<vmem>>, vector<32x1xf32>
    %66 = vector.broadcast %65 : vector<32x1xf32> to vector<32x512xf32>
    %67 = arith.mulf %66, %64 : vector<32x512xf32>
    %c0_46 = arith.constant 0 : index
    %c2_47 = arith.constant 2 : index
    %68 = vector.load %arg3[%c0_46, %c2_47] : memref<32x17xf32, #tpu.memory_space<vmem>>, vector<32x1xf32>
    %c0_48 = arith.constant 0 : index
    %c0_49 = arith.constant 0 : index
    %69 = vector.load %arg4[%c0_48, %c0_49] : memref<10x512xf32, #tpu.memory_space<vmem>>, vector<1x512xf32>
    %c17_i32_50 = arith.constant 17 : i32
    %70 = tpu.dynamic_rotate %64 by %c17_i32_50 dim 1 : vector<32x512xf32>, i32 -> vector<32x512xf32>
    %71 = vector.broadcast %69 : vector<1x512xf32> to vector<32x512xf32>
    %72 = arith.mulf %71, %70 : vector<32x512xf32>
    %73 = vector.broadcast %68 : vector<32x1xf32> to vector<32x512xf32>
    %74 = arith.mulf %73, %72 : vector<32x512xf32>
    %75 = arith.addf %67, %74 : vector<32x512xf32>
    %c0_51 = arith.constant 0 : index
    %c3_52 = arith.constant 3 : index
    %76 = vector.load %arg3[%c0_51, %c3_52] : memref<32x17xf32, #tpu.memory_space<vmem>>, vector<32x1xf32>
    %c1_53 = arith.constant 1 : index
    %c0_54 = arith.constant 0 : index
    %77 = vector.load %arg4[%c1_53, %c0_54] : memref<10x512xf32, #tpu.memory_space<vmem>>, vector<1x512xf32>
    %c16_i32_55 = arith.constant 16 : i32
    %78 = tpu.dynamic_rotate %64 by %c16_i32_55 dim 1 : vector<32x512xf32>, i32 -> vector<32x512xf32>
    %79 = vector.broadcast %77 : vector<1x512xf32> to vector<32x512xf32>
    %80 = arith.mulf %79, %78 : vector<32x512xf32>
    %81 = vector.broadcast %76 : vector<32x1xf32> to vector<32x512xf32>
    %82 = arith.mulf %81, %80 : vector<32x512xf32>
    %83 = arith.addf %75, %82 : vector<32x512xf32>
    %c0_56 = arith.constant 0 : index
    %c4_57 = arith.constant 4 : index
    %84 = vector.load %arg3[%c0_56, %c4_57] : memref<32x17xf32, #tpu.memory_space<vmem>>, vector<32x1xf32>
    %c2_58 = arith.constant 2 : index
    %c0_59 = arith.constant 0 : index
    %85 = vector.load %arg4[%c2_58, %c0_59] : memref<10x512xf32, #tpu.memory_space<vmem>>, vector<1x512xf32>
    %c15_i32_60 = arith.constant 15 : i32
    %86 = tpu.dynamic_rotate %64 by %c15_i32_60 dim 1 : vector<32x512xf32>, i32 -> vector<32x512xf32>
    %87 = vector.broadcast %85 : vector<1x512xf32> to vector<32x512xf32>
    %88 = arith.mulf %87, %86 : vector<32x512xf32>
    %89 = vector.broadcast %84 : vector<32x1xf32> to vector<32x512xf32>
    %90 = arith.mulf %89, %88 : vector<32x512xf32>
    %91 = arith.addf %83, %90 : vector<32x512xf32>
    %c0_61 = arith.constant 0 : index
    %c5_62 = arith.constant 5 : index
    %92 = vector.load %arg3[%c0_61, %c5_62] : memref<32x17xf32, #tpu.memory_space<vmem>>, vector<32x1xf32>
    %c3_63 = arith.constant 3 : index
    %c0_64 = arith.constant 0 : index
    %93 = vector.load %arg4[%c3_63, %c0_64] : memref<10x512xf32, #tpu.memory_space<vmem>>, vector<1x512xf32>
    %c1_i32_65 = arith.constant 1 : i32
    %94 = tpu.dynamic_rotate %64 by %c1_i32_65 dim 1 : vector<32x512xf32>, i32 -> vector<32x512xf32>
    %95 = vector.broadcast %93 : vector<1x512xf32> to vector<32x512xf32>
    %96 = arith.mulf %95, %94 : vector<32x512xf32>
    %97 = vector.broadcast %92 : vector<32x1xf32> to vector<32x512xf32>
    %98 = arith.mulf %97, %96 : vector<32x512xf32>
    %99 = arith.addf %91, %98 : vector<32x512xf32>
    %c0_66 = arith.constant 0 : index
    %c7_67 = arith.constant 7 : index
    %100 = vector.load %arg3[%c0_66, %c7_67] : memref<32x17xf32, #tpu.memory_space<vmem>>, vector<32x1xf32>
    %c5_68 = arith.constant 5 : index
    %c0_69 = arith.constant 0 : index
    %101 = vector.load %arg4[%c5_68, %c0_69] : memref<10x512xf32, #tpu.memory_space<vmem>>, vector<1x512xf32>
    %c511_i32_70 = arith.constant 511 : i32
    %102 = tpu.dynamic_rotate %64 by %c511_i32_70 dim 1 : vector<32x512xf32>, i32 -> vector<32x512xf32>
    %103 = vector.broadcast %101 : vector<1x512xf32> to vector<32x512xf32>
    %104 = arith.mulf %103, %102 : vector<32x512xf32>
    %105 = vector.broadcast %100 : vector<32x1xf32> to vector<32x512xf32>
    %106 = arith.mulf %105, %104 : vector<32x512xf32>
    %107 = arith.addf %99, %106 : vector<32x512xf32>
    %c0_71 = arith.constant 0 : index
    %c8_72 = arith.constant 8 : index
    %108 = vector.load %arg3[%c0_71, %c8_72] : memref<32x17xf32, #tpu.memory_space<vmem>>, vector<32x1xf32>
    %c6_73 = arith.constant 6 : index
    %c0_74 = arith.constant 0 : index
    %109 = vector.load %arg4[%c6_73, %c0_74] : memref<10x512xf32, #tpu.memory_space<vmem>>, vector<1x512xf32>
    %c497_i32_75 = arith.constant 497 : i32
    %110 = tpu.dynamic_rotate %64 by %c497_i32_75 dim 1 : vector<32x512xf32>, i32 -> vector<32x512xf32>
    %111 = vector.broadcast %109 : vector<1x512xf32> to vector<32x512xf32>
    %112 = arith.mulf %111, %110 : vector<32x512xf32>
    %113 = vector.broadcast %108 : vector<32x1xf32> to vector<32x512xf32>
    %114 = arith.mulf %113, %112 : vector<32x512xf32>
    %115 = arith.addf %107, %114 : vector<32x512xf32>
    %c0_76 = arith.constant 0 : index
    %c9_77 = arith.constant 9 : index
    %116 = vector.load %arg3[%c0_76, %c9_77] : memref<32x17xf32, #tpu.memory_space<vmem>>, vector<32x1xf32>
    %c7_78 = arith.constant 7 : index
    %c0_79 = arith.constant 0 : index
    %117 = vector.load %arg4[%c7_78, %c0_79] : memref<10x512xf32, #tpu.memory_space<vmem>>, vector<1x512xf32>
    %c496_i32_80 = arith.constant 496 : i32
    %118 = tpu.dynamic_rotate %64 by %c496_i32_80 dim 1 : vector<32x512xf32>, i32 -> vector<32x512xf32>
    %119 = vector.broadcast %117 : vector<1x512xf32> to vector<32x512xf32>
    %120 = arith.mulf %119, %118 : vector<32x512xf32>
    %121 = vector.broadcast %116 : vector<32x1xf32> to vector<32x512xf32>
    %122 = arith.mulf %121, %120 : vector<32x512xf32>
    %123 = arith.addf %115, %122 : vector<32x512xf32>
    %c0_81 = arith.constant 0 : index
    %c10 = arith.constant 10 : index
    %124 = vector.load %arg3[%c0_81, %c10] : memref<32x17xf32, #tpu.memory_space<vmem>>, vector<32x1xf32>
    %c8_82 = arith.constant 8 : index
    %c0_83 = arith.constant 0 : index
    %125 = vector.load %arg4[%c8_82, %c0_83] : memref<10x512xf32, #tpu.memory_space<vmem>>, vector<1x512xf32>
    %c495_i32_84 = arith.constant 495 : i32
    %126 = tpu.dynamic_rotate %64 by %c495_i32_84 dim 1 : vector<32x512xf32>, i32 -> vector<32x512xf32>
    %127 = vector.broadcast %125 : vector<1x512xf32> to vector<32x512xf32>
    %128 = arith.mulf %127, %126 : vector<32x512xf32>
    %129 = vector.broadcast %124 : vector<32x1xf32> to vector<32x512xf32>
    %130 = arith.mulf %129, %128 : vector<32x512xf32>
    %131 = arith.addf %123, %130 : vector<32x512xf32>
    %c0_85 = arith.constant 0 : index
    %c11 = arith.constant 11 : index
    %132 = vector.load %arg3[%c0_85, %c11] : memref<32x17xf32, #tpu.memory_space<vmem>>, vector<32x1xf32>
    %133 = vector.broadcast %132 : vector<32x1xf32> to vector<32x512xf32>
    %134 = arith.addf %131, %133 : vector<32x512xf32>
    %135 = vector.extract_strided_slice %134 {offsets = [0, 0], sizes = [16, 512], strides = [1, 1]} : vector<32x512xf32> to vector<16x512xf32>
    %136 = vector.extract_strided_slice %134 {offsets = [16, 0], sizes = [16, 512], strides = [1, 1]} : vector<32x512xf32> to vector<16x512xf32>
    %137 = arith.mulf %135, %136 : vector<16x512xf32>
    %138 = vector.extract_strided_slice %137 {offsets = [0, 0], sizes = [16, 256], strides = [1, 1]} : vector<16x512xf32> to vector<16x256xf32>
    %cst_86 = arith.constant dense<0.000000e+00> : vector<16xf32>
    %139 = vector.multi_reduction <add>, %138, %cst_86 [1] : vector<16x256xf32> to vector<16xf32>
    %140 = vector.shape_cast %139 : vector<16xf32> to vector<16x1xf32>
    %cst_87 = arith.constant 2.560000e+02 : f32
    %141 = vector.broadcast %cst_87 : f32 to vector<16x1xf32>
    %142 = arith.divf %140, %141 : vector<16x1xf32>
    %143 = vector.extract_strided_slice %137 {offsets = [0, 256], sizes = [16, 256], strides = [1, 1]} : vector<16x512xf32> to vector<16x256xf32>
    %cst_88 = arith.constant dense<0.000000e+00> : vector<16xf32>
    %144 = vector.multi_reduction <add>, %143, %cst_88 [1] : vector<16x256xf32> to vector<16xf32>
    %145 = vector.shape_cast %144 : vector<16xf32> to vector<16x1xf32>
    %cst_89 = arith.constant 2.560000e+02 : f32
    %146 = vector.broadcast %cst_89 : f32 to vector<16x1xf32>
    %147 = arith.divf %145, %146 : vector<16x1xf32>
    %c32 = arith.constant 32 : index
    %c0_90 = arith.constant 0 : index
    %148 = vector.load %arg2[%c32, %c0_90] : memref<144x16xf32, #tpu.memory_space<vmem>>, vector<16x16xf32>
    %cst_91 = arith.constant dense<0.000000e+00> : vector<16x1xf32>
    %149 = tpu.matmul %148, %142, %cst_91 {dimension_numbers = #tpu.dot_dimension_numbers<[1], [0], [0], [1], [0, 0, 1, 1], [], []>} : vector<16x16xf32>, vector<16x1xf32>, vector<16x1xf32> -> vector<16x1xf32>
    %c0_92 = arith.constant 0 : index
    %c12 = arith.constant 12 : index
    %150 = vector.load %arg3[%c0_92, %c12] : memref<32x17xf32, #tpu.memory_space<vmem>>, vector<16x1xf32>
    %151 = arith.addf %149, %150 : vector<16x1xf32>
    %c32_93 = arith.constant 32 : index
    %c0_94 = arith.constant 0 : index
    %152 = vector.load %arg2[%c32_93, %c0_94] : memref<144x16xf32, #tpu.memory_space<vmem>>, vector<16x16xf32>
    %cst_95 = arith.constant dense<0.000000e+00> : vector<16x1xf32>
    %153 = tpu.matmul %152, %147, %cst_95 {dimension_numbers = #tpu.dot_dimension_numbers<[1], [0], [0], [1], [0, 0, 1, 1], [], []>} : vector<16x16xf32>, vector<16x1xf32>, vector<16x1xf32> -> vector<16x1xf32>
    %c0_96 = arith.constant 0 : index
    %c12_97 = arith.constant 12 : index
    %154 = vector.load %arg3[%c0_96, %c12_97] : memref<32x17xf32, #tpu.memory_space<vmem>>, vector<16x1xf32>
    %155 = arith.addf %153, %154 : vector<16x1xf32>
    %c9_98 = arith.constant 9 : index
    %c0_99 = arith.constant 0 : index
    %156 = vector.load %arg4[%c9_98, %c0_99] : memref<10x512xf32, #tpu.memory_space<vmem>>, vector<1x512xf32>
    %157 = arith.subf %151, %155 : vector<16x1xf32>
    %158 = vector.broadcast %157 : vector<16x1xf32> to vector<16x512xf32>
    %159 = vector.broadcast %156 : vector<1x512xf32> to vector<16x512xf32>
    %160 = arith.mulf %158, %159 : vector<16x512xf32>
    %161 = vector.broadcast %155 : vector<16x1xf32> to vector<16x512xf32>
    %162 = arith.addf %161, %160 : vector<16x512xf32>
    %163 = arith.mulf %137, %162 : vector<16x512xf32>
    %c48 = arith.constant 48 : index
    %c0_100 = arith.constant 0 : index
    %164 = vector.load %arg2[%c48, %c0_100] : memref<144x16xf32, #tpu.memory_space<vmem>>, vector<16x16xf32>
    %cst_101 = arith.constant dense<0.000000e+00> : vector<16x512xf32>
    %165 = tpu.matmul %164, %163, %cst_101 {dimension_numbers = #tpu.dot_dimension_numbers<[1], [0], [0], [1], [0, 0, 1, 1], [], []>} : vector<16x16xf32>, vector<16x512xf32>, vector<16x512xf32> -> vector<16x512xf32>
    %166 = arith.addf %41, %165 : vector<16x512xf32>
    %c0_102 = arith.constant 0 : index
    %c13 = arith.constant 13 : index
    %167 = vector.load %arg3[%c0_102, %c13] : memref<32x17xf32, #tpu.memory_space<vmem>>, vector<16x1xf32>
    %168 = vector.broadcast %167 : vector<16x1xf32> to vector<16x512xf32>
    %169 = arith.addf %166, %168 : vector<16x512xf32>
    %cst_103 = arith.constant dense<0.000000e+00> : vector<512xf32>
    %170 = vector.multi_reduction <add>, %169, %cst_103 [0] : vector<16x512xf32> to vector<512xf32>
    %171 = vector.shape_cast %170 : vector<512xf32> to vector<1x512xf32>
    %cst_104 = arith.constant 1.600000e+01 : f32
    %172 = vector.broadcast %cst_104 : f32 to vector<1x512xf32>
    %173 = arith.divf %171, %172 : vector<1x512xf32>
    %174 = vector.broadcast %173 : vector<1x512xf32> to vector<16x512xf32>
    %175 = arith.subf %169, %174 : vector<16x512xf32>
    %176 = arith.mulf %175, %175 : vector<16x512xf32>
    %cst_105 = arith.constant dense<0.000000e+00> : vector<512xf32>
    %177 = vector.multi_reduction <add>, %176, %cst_105 [0] : vector<16x512xf32> to vector<512xf32>
    %178 = vector.shape_cast %177 : vector<512xf32> to vector<1x512xf32>
    %cst_106 = arith.constant 1.600000e+01 : f32
    %179 = vector.broadcast %cst_106 : f32 to vector<1x512xf32>
    %180 = arith.divf %178, %179 : vector<1x512xf32>
    %181 = vector.broadcast %173 : vector<1x512xf32> to vector<16x512xf32>
    %182 = arith.subf %169, %181 : vector<16x512xf32>
    %cst_107 = arith.constant 9.99999997E-7 : f32
    %183 = vector.broadcast %cst_107 : f32 to vector<1x512xf32>
    %184 = arith.addf %180, %183 : vector<1x512xf32>
    %185 = math.rsqrt %184 : vector<1x512xf32>
    %186 = vector.broadcast %185 : vector<1x512xf32> to vector<16x512xf32>
    %187 = arith.mulf %182, %186 : vector<16x512xf32>
    %c64 = arith.constant 64 : index
    %c0_108 = arith.constant 0 : index
    %188 = vector.load %arg2[%c64, %c0_108] : memref<144x16xf32, #tpu.memory_space<vmem>>, vector<32x16xf32>
    %cst_109 = arith.constant dense<0.000000e+00> : vector<32x512xf32>
    %189 = tpu.matmul %188, %187, %cst_109 {dimension_numbers = #tpu.dot_dimension_numbers<[1], [0], [0], [1], [0, 0, 1, 1], [], []>} : vector<32x16xf32>, vector<16x512xf32>, vector<32x512xf32> -> vector<32x512xf32>
    %c0_110 = arith.constant 0 : index
    %c14 = arith.constant 14 : index
    %190 = vector.load %arg3[%c0_110, %c14] : memref<32x17xf32, #tpu.memory_space<vmem>>, vector<32x1xf32>
    %191 = vector.broadcast %190 : vector<32x1xf32> to vector<32x512xf32>
    %192 = arith.addf %189, %191 : vector<32x512xf32>
    %193 = vector.extract_strided_slice %192 {offsets = [0, 0], sizes = [16, 512], strides = [1, 1]} : vector<32x512xf32> to vector<16x512xf32>
    %194 = vector.extract_strided_slice %192 {offsets = [16, 0], sizes = [16, 512], strides = [1, 1]} : vector<32x512xf32> to vector<16x512xf32>
    %195 = arith.mulf %193, %194 : vector<16x512xf32>
    %c96 = arith.constant 96 : index
    %c0_111 = arith.constant 0 : index
    %196 = vector.load %arg2[%c96, %c0_111] : memref<144x16xf32, #tpu.memory_space<vmem>>, vector<16x16xf32>
    %cst_112 = arith.constant dense<0.000000e+00> : vector<16x512xf32>
    %197 = tpu.matmul %196, %195, %cst_112 {dimension_numbers = #tpu.dot_dimension_numbers<[1], [0], [0], [1], [0, 0, 1, 1], [], []>} : vector<16x16xf32>, vector<16x512xf32>, vector<16x512xf32> -> vector<16x512xf32>
    %198 = arith.addf %169, %197 : vector<16x512xf32>
    %c0_113 = arith.constant 0 : index
    %c15 = arith.constant 15 : index
    %199 = vector.load %arg3[%c0_113, %c15] : memref<32x17xf32, #tpu.memory_space<vmem>>, vector<16x1xf32>
    %200 = vector.broadcast %199 : vector<16x1xf32> to vector<16x512xf32>
    %201 = arith.addf %198, %200 : vector<16x512xf32>
    %c128 = arith.constant 128 : index
    %c0_114 = arith.constant 0 : index
    %202 = vector.load %arg2[%c128, %c0_114] : memref<144x16xf32, #tpu.memory_space<vmem>>, vector<9x16xf32>
    %cst_115 = arith.constant dense<0.000000e+00> : vector<9x512xf32>
    %203 = tpu.matmul %202, %201, %cst_115 {dimension_numbers = #tpu.dot_dimension_numbers<[1], [0], [0], [1], [0, 0, 1, 1], [], []>} : vector<9x16xf32>, vector<16x512xf32>, vector<9x512xf32> -> vector<9x512xf32>
    %c0_116 = arith.constant 0 : index
    %c16 = arith.constant 16 : index
    %204 = vector.load %arg3[%c0_116, %c16] : memref<32x17xf32, #tpu.memory_space<vmem>>, vector<1x1xf32>
    %205 = vector.broadcast %204 : vector<1x1xf32> to vector<1x512xf32>
    %206 = arith.addf %0, %205 : vector<1x512xf32>
    %c0_117 = arith.constant 0 : index
    %c0_118 = arith.constant 0 : index
    %207 = vector.load %arg4[%c0_117, %c0_118] : memref<10x512xf32, #tpu.memory_space<vmem>>, vector<1x512xf32>
    %208 = vector.extract_strided_slice %203 {offsets = [0, 0], sizes = [1, 512], strides = [1, 1]} : vector<9x512xf32> to vector<1x512xf32>
    %c17_i32_119 = arith.constant 17 : i32
    %209 = tpu.dynamic_rotate %208 by %c17_i32_119 dim 1 : vector<1x512xf32>, i32 -> vector<1x512xf32>
    %210 = arith.mulf %207, %209 : vector<1x512xf32>
    %211 = arith.addf %206, %210 : vector<1x512xf32>
    %c1_120 = arith.constant 1 : index
    %c0_121 = arith.constant 0 : index
    %212 = vector.load %arg4[%c1_120, %c0_121] : memref<10x512xf32, #tpu.memory_space<vmem>>, vector<1x512xf32>
    %213 = vector.extract_strided_slice %203 {offsets = [1, 0], sizes = [1, 512], strides = [1, 1]} : vector<9x512xf32> to vector<1x512xf32>
    %c16_i32_122 = arith.constant 16 : i32
    %214 = tpu.dynamic_rotate %213 by %c16_i32_122 dim 1 : vector<1x512xf32>, i32 -> vector<1x512xf32>
    %215 = arith.mulf %212, %214 : vector<1x512xf32>
    %216 = arith.addf %211, %215 : vector<1x512xf32>
    %c2_123 = arith.constant 2 : index
    %c0_124 = arith.constant 0 : index
    %217 = vector.load %arg4[%c2_123, %c0_124] : memref<10x512xf32, #tpu.memory_space<vmem>>, vector<1x512xf32>
    %218 = vector.extract_strided_slice %203 {offsets = [2, 0], sizes = [1, 512], strides = [1, 1]} : vector<9x512xf32> to vector<1x512xf32>
    %c15_i32_125 = arith.constant 15 : i32
    %219 = tpu.dynamic_rotate %218 by %c15_i32_125 dim 1 : vector<1x512xf32>, i32 -> vector<1x512xf32>
    %220 = arith.mulf %217, %219 : vector<1x512xf32>
    %221 = arith.addf %216, %220 : vector<1x512xf32>
    %c3_126 = arith.constant 3 : index
    %c0_127 = arith.constant 0 : index
    %222 = vector.load %arg4[%c3_126, %c0_127] : memref<10x512xf32, #tpu.memory_space<vmem>>, vector<1x512xf32>
    %223 = vector.extract_strided_slice %203 {offsets = [3, 0], sizes = [1, 512], strides = [1, 1]} : vector<9x512xf32> to vector<1x512xf32>
    %c1_i32_128 = arith.constant 1 : i32
    %224 = tpu.dynamic_rotate %223 by %c1_i32_128 dim 1 : vector<1x512xf32>, i32 -> vector<1x512xf32>
    %225 = arith.mulf %222, %224 : vector<1x512xf32>
    %226 = arith.addf %221, %225 : vector<1x512xf32>
    %227 = vector.extract_strided_slice %203 {offsets = [4, 0], sizes = [1, 512], strides = [1, 1]} : vector<9x512xf32> to vector<1x512xf32>
    %228 = arith.addf %226, %227 : vector<1x512xf32>
    %c5_129 = arith.constant 5 : index
    %c0_130 = arith.constant 0 : index
    %229 = vector.load %arg4[%c5_129, %c0_130] : memref<10x512xf32, #tpu.memory_space<vmem>>, vector<1x512xf32>
    %230 = vector.extract_strided_slice %203 {offsets = [5, 0], sizes = [1, 512], strides = [1, 1]} : vector<9x512xf32> to vector<1x512xf32>
    %c511_i32_131 = arith.constant 511 : i32
    %231 = tpu.dynamic_rotate %230 by %c511_i32_131 dim 1 : vector<1x512xf32>, i32 -> vector<1x512xf32>
    %232 = arith.mulf %229, %231 : vector<1x512xf32>
    %233 = arith.addf %228, %232 : vector<1x512xf32>
    %c6_132 = arith.constant 6 : index
    %c0_133 = arith.constant 0 : index
    %234 = vector.load %arg4[%c6_132, %c0_133] : memref<10x512xf32, #tpu.memory_space<vmem>>, vector<1x512xf32>
    %235 = vector.extract_strided_slice %203 {offsets = [6, 0], sizes = [1, 512], strides = [1, 1]} : vector<9x512xf32> to vector<1x512xf32>
    %c497_i32_134 = arith.constant 497 : i32
    %236 = tpu.dynamic_rotate %235 by %c497_i32_134 dim 1 : vector<1x512xf32>, i32 -> vector<1x512xf32>
    %237 = arith.mulf %234, %236 : vector<1x512xf32>
    %238 = arith.addf %233, %237 : vector<1x512xf32>
    %c7_135 = arith.constant 7 : index
    %c0_136 = arith.constant 0 : index
    %239 = vector.load %arg4[%c7_135, %c0_136] : memref<10x512xf32, #tpu.memory_space<vmem>>, vector<1x512xf32>
    %240 = vector.extract_strided_slice %203 {offsets = [7, 0], sizes = [1, 512], strides = [1, 1]} : vector<9x512xf32> to vector<1x512xf32>
    %c496_i32_137 = arith.constant 496 : i32
    %241 = tpu.dynamic_rotate %240 by %c496_i32_137 dim 1 : vector<1x512xf32>, i32 -> vector<1x512xf32>
    %242 = arith.mulf %239, %241 : vector<1x512xf32>
    %243 = arith.addf %238, %242 : vector<1x512xf32>
    %c8_138 = arith.constant 8 : index
    %c0_139 = arith.constant 0 : index
    %244 = vector.load %arg4[%c8_138, %c0_139] : memref<10x512xf32, #tpu.memory_space<vmem>>, vector<1x512xf32>
    %245 = vector.extract_strided_slice %203 {offsets = [8, 0], sizes = [1, 512], strides = [1, 1]} : vector<9x512xf32> to vector<1x512xf32>
    %c495_i32_140 = arith.constant 495 : i32
    %246 = tpu.dynamic_rotate %245 by %c495_i32_140 dim 1 : vector<1x512xf32>, i32 -> vector<1x512xf32>
    %247 = arith.mulf %244, %246 : vector<1x512xf32>
    %248 = arith.addf %243, %247 : vector<1x512xf32>
    %c0_141 = arith.constant 0 : index
    %c0_142 = arith.constant 0 : index
    %249 = vector.load %arg5[%c0_141, %c0_142] : memref<1x512xf32, #tpu.memory_space<vmem>>, vector<1x512xf32>
    tpu.vector_store %arg5[%c0_141, %c0_142], %248 {strides = array<i32>} : memref<1x512xf32, #tpu.memory_space<vmem>>, vector<1x512xf32>,
    return
  }
  func.func @transform_0(%arg0: i32) -> (i32, i32) {
    %c0_i32 = arith.constant 0 : i32
    %c0_i32_0 = arith.constant 0 : i32
    %c0_i32_1 = arith.constant 0 : i32
    return %c0_i32, %c0_i32_0 : i32, i32
  }
  func.func @transform_1(%arg0: i32) -> (i32, i32) {
    %c0_i32 = arith.constant 0 : i32
    %c0_i32_0 = arith.constant 0 : i32
    %c0_i32_1 = arith.constant 0 : i32
    return %c0_i32, %c0_i32_0 : i32, i32
  }
  func.func @transform_2(%arg0: i32) -> (i32, i32) {
    %c0_i32 = arith.constant 0 : i32
    %c0_i32_0 = arith.constant 0 : i32
    %c0_i32_1 = arith.constant 0 : i32
    return %c0_i32, %c0_i32_0 : i32, i32
  }
  func.func @transform_3(%arg0: i32) -> (i32, i32) {
    %c0_i32 = arith.constant 0 : i32
    %c0_i32_0 = arith.constant 0 : i32
    %c0_i32_1 = arith.constant 0 : i32
    return %c0_i32, %c0_i32_0 : i32, i32
  }
  func.func @transform_4(%arg0: i32) -> (i32, i32) {
    %c0_i32 = arith.constant 0 : i32
    %c0_i32_0 = arith.constant 0 : i32
    %c0_i32_1 = arith.constant 0 : i32
    return %c0_i32, %c0_i32_0 : i32, i32
  }
}

</mosaic_0001>

<llo_original>
// kernel: tpu_custom_call.1
$region0: #{tpu_custom_call.1}
  #allocation0 [shape = 'u32[]', space=smem, size = 0x4, offset = 0x4, fixed_abs, tag = 'smem constant byte address 0x4 - core index']
  #allocation1 [shape = 'u32[72,128]{1,0:T(1,128)}', space=vmem, size = 0x9000, scoped, tag = 'internal scratch']
  #allocation2 [shape = 'f32[16,512]{1,0:T(8,128)}', space=vmem, size = 0x8000, scoped, tag = 'scratch operand']
  %s0 = inlined_call_operand.vmem [shape: f32[1,512], index: 0, kind: input, shape index: {}]
  %s1 = inlined_call_operand.vmem [shape: f32[144,16], index: 1, kind: input, shape index: {}]
  %s2 = inlined_call_operand.vmem [shape: f32[32,17], index: 2, kind: input, shape index: {}]
  %s3 = inlined_call_operand.vmem [shape: f32[10,512], index: 3, kind: input, shape index: {}]
  %s4 = inlined_call_operand.hbm [shape: f32[1,512], index: 4, kind: output, shape index: {}]
  %s5 = sld [smem:[#allocation0]]
  $region26: #{tpu_custom_call.1} parent=0
    _
  %s7 = ssub.s32 1, %s5
  %s8 = scalar_select 0, %s7, %s5
  $region1: #{tpu_custom_call.1} parent=0
    #allocation3 [shape = 'u8[2048]{0}', space=vmem, size = 0x800, scoped, tag = 'output window, operand 0, single buffered']
    #allocation4 [shape = 's32[1]{0}', space=sflag, size = 0x4, scoped, tag = 'scoped memory for tpu_custom_call.1']
    %9 = vsyncpa [#allocation4], 0
    // Predicated region
    $region2: #{tpu_custom_call.1} parent=1 // pred_check
      _
    $region3: #{tpu_custom_call.1} parent=1 // pred_check_branch
      %11 = sbr.rel (0) target = $region5
    $region4: #{tpu_custom_call.1} parent=1 // pred_region
      _
    $region5: #{tpu_custom_call.1} parent=1 // pred_fallthru
      _
    // Predicated region
    $region6: #{tpu_custom_call.1} parent=1 // pred_check
      _
    $region7: #{tpu_custom_call.1} parent=1 // pred_check_branch
      %13 = sbr.rel (0) target = $region9
    $region8: #{tpu_custom_call.1} parent=1 // pred_region
      _
    $region9: #{tpu_custom_call.1} parent=1 // pred_fallthru
      _
    // Predicated region
    $region10: #{tpu_custom_call.1} parent=1 // pred_check
      _
    $region11: #{tpu_custom_call.1} parent=1 // pred_check_branch
      %15 = sbr.rel (0) target = $region13
    $region12: #{tpu_custom_call.1} parent=1 // pred_region
      _
    $region13: #{tpu_custom_call.1} parent=1 // pred_fallthru
      _
    // Predicated region
    $region14: #{tpu_custom_call.1} parent=1 // pred_check
      _
    $region15: #{tpu_custom_call.1} parent=1 // pred_check_branch
      %17 = sbr.rel (0) target = $region17
    $region16: #{tpu_custom_call.1} parent=1 // pred_region
      _
    $region17: #{tpu_custom_call.1} parent=1 // pred_fallthru
      _
    %v18 = vld [vmem:[%s0] sm:$0xf]
    %19 = vst [vmem:[#allocation2 + $0x20] sm:$0xfe] 0.0
    %20 = vst [vmem:[#allocation2 + $0x28] sm:$0xfe] 0.0
    %21 = vst [vmem:[#allocation2 + $0x30] sm:$0xfe] 0.0
    %22 = vst [vmem:[#allocation2 + $0x38] sm:$0xfe] 0.0
    %v23 = vld [vmem:[%s3] ss:$8 sm:$0xf]
    %v25 = vperm.slane %v18, 0
    %v26 = vperm.slane %v18, 1
    %v27 = vperm.slane %v18, 2
    %v28 = vperm.slane %v18, 3
    %33 = vrot.lane.b32.xlu0 %v25, 17
    %v34 = vpop.permute.xlu0 %33
    %35 = vrot.lane.b32.xlu0 %v26, 17
    %v36 = vpop.permute.xlu0 %35
    %37 = vrot.lane.b32.xlu0 %v27, 17
    %v38 = vpop.permute.xlu0 %37
    %39 = vrot.lane.b32.xlu0 %v28, 17
    %v40 = vpop.permute.xlu0 %39
    %v41 = vlaneseq
    %v42 = vand.u32 %v41, 127
    %vm43 = vcmp.lt.s32.totalorder %v42, 17
    %v44 = vsel %vm43, %v38, %v40
    %v45 = vsel %vm43, %v36, %v38
    %v46 = vsel %vm43, %v34, %v36
    %v47 = vsel %vm43, %v40, %v34
    %v52 = vrot.slane %v46, 7
    %v53 = vrot.slane %v45, 6
    %v54 = vrot.slane %v44, 5
    %vm55 = vcmask 1040384
    %v56 = vsel %vm55, %v47, %v52
    %vm57 = vcmask 1042434
    %v58 = vsel %vm57, %v53, %v54
    %vm59 = vcmask 1041408
    %v60 = vsel %vm59, %v56, %v58
    %v62 = vmul.f32 %v23, %v60
    %v63 = vlaneseq
    %vm64 = vcmp.ge.s32.totalorder %v63, 0
    %vm65 = vcmp.lt.s32.totalorder %v63, 512
    %vm66 = vmand %vm64, %vm65
    %67 = vst.msk [vmem:[#allocation2] ss:$8 sm:$0xf] %vm66, %v62
    %68 = vst.msk [vmem:[#allocation2] ss:$8 sm:$0x0] %vm66, %v62
    %s69 = scalar_lea.vmem %s3, 1
    %v70 = vld [vmem:[%s69] ss:$8 sm:$0xf]
    %71 = vrot.lane.b32.xlu0 %v25, 16
    %v72 = vpop.permute.xlu0 %71
    %73 = vrot.lane.b32.xlu0 %v26, 16
    %v74 = vpop.permute.xlu0 %73
    %75 = vrot.lane.b32.xlu0 %v27, 16
    %v76 = vpop.permute.xlu0 %75
    %77 = vrot.lane.b32.xlu0 %v28, 16
    %v78 = vpop.permute.xlu0 %77
    %vm79 = vcmp.lt.s32.totalorder %v42, 16
    %v80 = vsel %vm79, %v76, %v78
    %v81 = vsel %vm79, %v74, %v76
    %v82 = vsel %vm79, %v72, %v74
    %v83 = vsel %vm79, %v78, %v72
    %v88 = vrot.slane %v82, 7
    %v89 = vrot.slane %v81, 6
    %v90 = vrot.slane %v80, 5
    %v91 = vsel %vm55, %v83, %v88
    %v92 = vsel %vm57, %v89, %v90
    %v93 = vsel %vm59, %v91, %v92
    %v95 = vmul.f32 %v70, %v93
    %s96 = scalar_lea.vmem [#allocation2], 1
    %97 = vst.msk [vmem:[%s96] ss:$8 sm:$0xf] %vm66, %v95
    %98 = vst.msk [vmem:[%s96] ss:$8 sm:$0x0] %vm66, %v95
    %s99 = scalar_lea.vmem %s3, 2
    %v100 = vld [vmem:[%s99] ss:$8 sm:$0xf]
    %101 = vrot.lane.b32.xlu0 %v25, 15
    %v102 = vpop.permute.xlu0 %101
    %103 = vrot.lane.b32.xlu0 %v26, 15
    %v104 = vpop.permute.xlu0 %103
    %105 = vrot.lane.b32.xlu0 %v27, 15
    %v106 = vpop.permute.xlu0 %105
    %107 = vrot.lane.b32.xlu0 %v28, 15
    %v108 = vpop.permute.xlu0 %107
    %vm109 = vcmp.lt.s32.totalorder %v42, 15
    %v110 = vsel %vm109, %v106, %v108
    %v111 = vsel %vm109, %v104, %v106
    %v112 = vsel %vm109, %v102, %v104
    %v113 = vsel %vm109, %v108, %v102
    %v118 = vrot.slane %v112, 7
    %v119 = vrot.slane %v111, 6
    %v120 = vrot.slane %v110, 5
    %v121 = vsel %vm55, %v113, %v118
    %v122 = vsel %vm57, %v119, %v120
    %v123 = vsel %vm59, %v121, %v122
    %v125 = vmul.f32 %v100, %v123
    %s126 = scalar_lea.vmem [#allocation2], 2
    %127 = vst.msk [vmem:[%s126] ss:$8 sm:$0xf] %vm66, %v125
    %128 = vst.msk [vmem:[%s126] ss:$8 sm:$0x0] %vm66, %v125
    %s129 = scalar_lea.vmem %s3, 3
    %v130 = vld [vmem:[%s129] ss:$8 sm:$0xf]
    %131 = vrot.lane.b32.xlu0 %v25, 1
    %v132 = vpop.permute.xlu0 %131
    %133 = vrot.lane.b32.xlu0 %v26, 1
    %v134 = vpop.permute.xlu0 %133
    %135 = vrot.lane.b32.xlu0 %v27, 1
    %v136 = vpop.permute.xlu0 %135
    %137 = vrot.lane.b32.xlu0 %v28, 1
    %v138 = vpop.permute.xlu0 %137
    %vm139 = vcmp.lt.s32.totalorder %v42, 1
    %v140 = vsel %vm139, %v136, %v138
    %v141 = vsel %vm139, %v134, %v136
    %v142 = vsel %vm139, %v132, %v134
    %v143 = vsel %vm139, %v138, %v132
    %v148 = vrot.slane %v142, 7
    %v149 = vrot.slane %v141, 6
    %v150 = vrot.slane %v140, 5
    %v151 = vsel %vm55, %v143, %v148
    %v152 = vsel %vm57, %v149, %v150
    %v153 = vsel %vm59, %v151, %v152
    %v155 = vmul.f32 %v130, %v153
    %s156 = scalar_lea.vmem [#allocation2], 3
    %157 = vst.msk [vmem:[%s156] ss:$8 sm:$0xf] %vm66, %v155
    %158 = vst.msk [vmem:[%s156] ss:$8 sm:$0x0] %vm66, %v155
    %s159 = scalar_lea.vmem [#allocation2], 4
    %160 = vst.msk [vmem:[%s159] ss:$8 sm:$0xf] %vm66, %v18
    %161 = vst.msk [vmem:[%s159] ss:$8 sm:$0x0] %vm66, %v18
    %s162 = scalar_lea.vmem %s3, 5
    %v163 = vld [vmem:[%s162] ss:$8 sm:$0xf]
    %164 = vrot.lane.b32.xlu0 %v25, 127
    %v165 = vpop.permute.xlu0 %164
    %166 = vrot.lane.b32.xlu0 %v26, 127
    %v167 = vpop.permute.xlu0 %166
    %168 = vrot.lane.b32.xlu0 %v27, 127
    %v169 = vpop.permute.xlu0 %168
    %170 = vrot.lane.b32.xlu0 %v28, 127
    %v171 = vpop.permute.xlu0 %170
    %vm172 = vcmp.lt.s32.totalorder %v42, 127
    %v173 = vsel %vm172, %v169, %v171
    %v174 = vsel %vm172, %v167, %v169
    %v175 = vsel %vm172, %v165, %v167
    %v176 = vsel %vm172, %v171, %v165
    %v181 = vrot.slane %v174, 7
    %v182 = vrot.slane %v173, 6
    %v183 = vrot.slane %v176, 5
    %v184 = vsel %vm55, %v175, %v181
    %v185 = vsel %vm57, %v182, %v183
    %v186 = vsel %vm59, %v184, %v185
    %v188 = vmul.f32 %v163, %v186
    %s189 = scalar_lea.vmem [#allocation2], 5
    %190 = vst.msk [vmem:[%s189] ss:$8 sm:$0xf] %vm66, %v188
    %191 = vst.msk [vmem:[%s189] ss:$8 sm:$0x0] %vm66, %v188
    %s192 = scalar_lea.vmem %s3, 6
    %v193 = vld [vmem:[%s192] ss:$8 sm:$0xf]
    %194 = vrot.lane.b32.xlu0 %v25, 113
    %v195 = vpop.permute.xlu0 %194
    %196 = vrot.lane.b32.xlu0 %v26, 113
    %v197 = vpop.permute.xlu0 %196
    %198 = vrot.lane.b32.xlu0 %v27, 113
    %v199 = vpop.permute.xlu0 %198
    %200 = vrot.lane.b32.xlu0 %v28, 113
    %v201 = vpop.permute.xlu0 %200
    %vm202 = vcmp.lt.s32.totalorder %v42, 113
    %v203 = vsel %vm202, %v199, %v201
    %v204 = vsel %vm202, %v197, %v199
    %v205 = vsel %vm202, %v195, %v197
    %v206 = vsel %vm202, %v201, %v195
    %v211 = vrot.slane %v204, 7
    %v212 = vrot.slane %v203, 6
    %v213 = vrot.slane %v206, 5
    %v214 = vsel %vm55, %v205, %v211
    %v215 = vsel %vm57, %v212, %v213
    %v216 = vsel %vm59, %v214, %v215
    %v218 = vmul.f32 %v193, %v216
    %s219 = scalar_lea.vmem [#allocation2], 6
    %220 = vst.msk [vmem:[%s219] ss:$8 sm:$0xf] %vm66, %v218
    %221 = vst.msk [vmem:[%s219] ss:$8 sm:$0x0] %vm66, %v218
    %s222 = scalar_lea.vmem %s3, 7
    %v223 = vld [vmem:[%s222] ss:$8 sm:$0xf]
    %224 = vrot.lane.b32.xlu0 %v25, 112
    %v225 = vpop.permute.xlu0 %224
    %226 = vrot.lane.b32.xlu0 %v26, 112
    %v227 = vpop.permute.xlu0 %226
    %228 = vrot.lane.b32.xlu0 %v27, 112
    %v229 = vpop.permute.xlu0 %228
    %230 = vrot.lane.b32.xlu0 %v28, 112
    %v231 = vpop.permute.xlu0 %230
    %vm232 = vcmp.lt.s32.totalorder %v42, 112
    %v233 = vsel %vm232, %v229, %v231
    %v234 = vsel %vm232, %v227, %v229
    %v235 = vsel %vm232, %v225, %v227
    %v236 = vsel %vm232, %v231, %v225
    %v241 = vrot.slane %v234, 7
    %v242 = vrot.slane %v233, 6
    %v243 = vrot.slane %v236, 5
    %v244 = vsel %vm55, %v235, %v241
    %v245 = vsel %vm57, %v242, %v243
    %v246 = vsel %vm59, %v244, %v245
    %v248 = vmul.f32 %v223, %v246
    %s249 = scalar_lea.vmem [#allocation2], 7
    %250 = vst.msk [vmem:[%s249] ss:$8 sm:$0xf] %vm66, %v248
    %251 = vst.msk [vmem:[%s249] ss:$8 sm:$0x0] %vm66, %v248
    %s252 = scalar_lea.vmem %s3, 32
    %v253 = vld [vmem:[%s252] ss:$8 sm:$0xf]
    %254 = vrot.lane.b32.xlu0 %v25, 111
    %v255 = vpop.permute.xlu0 %254
    %256 = vrot.lane.b32.xlu0 %v26, 111
    %v257 = vpop.permute.xlu0 %256
    %258 = vrot.lane.b32.xlu0 %v27, 111
    %v259 = vpop.permute.xlu0 %258
    %260 = vrot.lane.b32.xlu0 %v28, 111
    %v261 = vpop.permute.xlu0 %260
    %vm262 = vcmp.lt.s32.totalorder %v42, 111
    %v263 = vsel %vm262, %v259, %v261
    %v264 = vsel %vm262, %v257, %v259
    %v265 = vsel %vm262, %v255, %v257
    %v266 = vsel %vm262, %v261, %v255
    %v271 = vrot.slane %v264, 7
    %v272 = vrot.slane %v263, 6
    %v273 = vrot.slane %v266, 5
    %v274 = vsel %vm55, %v265, %v271
    %v275 = vsel %vm57, %v272, %v273
    %v276 = vsel %vm59, %v274, %v275
    %v278 = vmul.f32 %v253, %v276
    %s279 = scalar_lea.vmem [#allocation2], 32
    %280 = vst.msk [vmem:[%s279] ss:$8 sm:$0xf] %vm66, %v278
    %281 = vst.msk [vmem:[%s279] ss:$8 sm:$0x0] %vm66, %v278
    %v282 = vld [vmem:[%s1 + $0x70] sm:$0xff]
    %v283 = vld [vmem:[%s1 + $0x78] sm:$0xff]
    %v284 = vld [vmem:[#allocation2] sm:$0xff]
    %v285 = vld [vmem:[#allocation2 + $0x8] sm:$0xff]
    %v286 = vld [vmem:[#allocation2 + $0x10] sm:$0xff]
    %v287 = vld [vmem:[#allocation2 + $0x18] sm:$0xff]
    %v288 = vld [vmem:[#allocation2 + $0x20] sm:$0xff]
    %v289 = vld [vmem:[#allocation2 + $0x28] sm:$0xff]
    %v290 = vld [vmem:[#allocation2 + $0x30] sm:$0xff]
    %v291 = vld [vmem:[#allocation2 + $0x38] sm:$0xff]
    %v292 = vld [vmem:[%s2] sm:$0xff]
    %v293 = vld [vmem:[%s2 + $0x8] sm:$0xff]
    %295 = vset.pattern.permute.xlu0 0
    %296 = vperm.xlu0 %295, %v292
    %v297 = vpop.permute.xlu0 %296
    %300 = vset.pattern.permute.xlu0 0
    %301 = vperm.xlu0 %300, %v293
    %v302 = vpop.permute.xlu0 %301
    %vm304 = vcmask 130048
    %v306 = vsel %vm304, %v282, 0
    %v309 = vsel %vm304, %v283, 0
    %311 = vmatpush.msra.mxu0 0.0
    %312 = vmatpush.msra.mxu0 0.0
    %313 = vmatpush.msra.mxu0 0.0
    %314 = vmatpush.msra.mxu0 0.0
    %315 = vmatpush.msra.mxu0 0.0
    %316 = vmatpush.msra.mxu0 0.0
    %317 = vmatpush.msra.mxu0 0.0
    %318 = vmatpush.msra.mxu0 0.0
    %319 = vmatpush.msra.mxu0 0.0
    %320 = vmatpush.msra.mxu0 0.0
    %321 = vmatpush.msra.mxu0 0.0
    %322 = vmatpush.msra.mxu0 0.0
    %323 = vmatpush.msra.mxu0 0.0
    %324 = vmatpush.msra.mxu0 0.0
    %325 = vmatpush.msra.mxu0 %v288
    %326 = vmatpush.msra.mxu0 %v284
    %327 = vmatmul.f32.gmra.mxu0 %v306
    %v328 = vpop.f32.mrf.mxu0
    %v329 = vadd.f32 %v297, %v328
    %330 = vmatmul.f32.gmra.mxu0 %v309
    %v331 = vpop.f32.mrf.mxu0
    %v332 = vadd.f32 %v302, %v331
    %333 = vdwg.mxu0
    %334 = vmatpush.msra.mxu0 0.0
    %335 = vmatpush.msra.mxu0 0.0
    %336 = vmatpush.msra.mxu0 0.0
    %337 = vmatpush.msra.mxu0 0.0
    %338 = vmatpush.msra.mxu0 0.0
    %339 = vmatpush.msra.mxu0 0.0
    %340 = vmatpush.msra.mxu0 0.0
    %341 = vmatpush.msra.mxu0 0.0
    %342 = vmatpush.msra.mxu0 0.0
    %343 = vmatpush.msra.mxu0 0.0
    %344 = vmatpush.msra.mxu0 0.0
    %345 = vmatpush.msra.mxu0 0.0
    %346 = vmatpush.msra.mxu0 0.0
    %347 = vmatpush.msra.mxu0 0.0
    %348 = vmatpush.msra.mxu0 %v289
    %349 = vmatpush.msra.mxu0 %v285
    %350 = vmatmul.f32.gmra.mxu0 %v306
    %v351 = vpop.f32.mrf.mxu0
    %v352 = vadd.f32 %v297, %v351
    %353 = vmatmul.f32.gmra.mxu0 %v309
    %v354 = vpop.f32.mrf.mxu0
    %v355 = vadd.f32 %v302, %v354
    %356 = vdwg.mxu0
    %357 = vmatpush.msra.mxu0 0.0
    %358 = vmatpush.msra.mxu0 0.0
    %359 = vmatpush.msra.mxu0 0.0
    %360 = vmatpush.msra.mxu0 0.0
    %361 = vmatpush.msra.mxu0 0.0
    %362 = vmatpush.msra.mxu0 0.0
    %363 = vmatpush.msra.mxu0 0.0
    %364 = vmatpush.msra.mxu0 0.0
    %365 = vmatpush.msra.mxu0 0.0
    %366 = vmatpush.msra.mxu0 0.0
    %367 = vmatpush.msra.mxu0 0.0
    %368 = vmatpush.msra.mxu0 0.0
    %369 = vmatpush.msra.mxu0 0.0
    %370 = vmatpush.msra.mxu0 0.0
    %371 = vmatpush.msra.mxu0 %v290
    %372 = vmatpush.msra.mxu0 %v286
    %373 = vmatmul.f32.gmra.mxu0 %v306
    %v374 = vpop.f32.mrf.mxu0
    %v375 = vadd.f32 %v297, %v374
    %376 = vmatmul.f32.gmra.mxu0 %v309
    %v377 = vpop.f32.mrf.mxu0
    %v378 = vadd.f32 %v302, %v377
    %379 = vdwg.mxu0
    %380 = vmatpush.msra.mxu0 0.0
    %381 = vmatpush.msra.mxu0 0.0
    %382 = vmatpush.msra.mxu0 0.0
    %383 = vmatpush.msra.mxu0 0.0
    %384 = vmatpush.msra.mxu0 0.0
    %385 = vmatpush.msra.mxu0 0.0
    %386 = vmatpush.msra.mxu0 0.0
    %387 = vmatpush.msra.mxu0 0.0
    %388 = vmatpush.msra.mxu0 0.0
    %389 = vmatpush.msra.mxu0 0.0
    %390 = vmatpush.msra.mxu0 0.0
    %391 = vmatpush.msra.mxu0 0.0
    %392 = vmatpush.msra.mxu0 0.0
    %393 = vmatpush.msra.mxu0 0.0
    %394 = vmatpush.msra.mxu0 %v291
    %395 = vmatpush.msra.mxu0 %v287
    %396 = vmatmul.f32.gmra.mxu0 %v306
    %v397 = vpop.f32.mrf.mxu0
    %v398 = vadd.f32 %v297, %v397
    %399 = vmatmul.f32.gmra.mxu0 %v309
    %v400 = vpop.f32.mrf.mxu0
    %v401 = vadd.f32 %v302, %v400
    %402 = vdwg.mxu0
    %v403 = vadd.f32 %v329, %v332
    %v404 = vrot.slane %v403, 4
    %v405 = vadd.f32 %v403, %v404
    %v406 = vrot.slane %v405, 2
    %v407 = vadd.f32 %v405, %v406
    %v408 = vrot.slane %v407, 1
    %v409 = vadd.f32 %v407, %v408
    %v410 = vadd.f32 %v352, %v355
    %v411 = vrot.slane %v410, 4
    %v412 = vadd.f32 %v410, %v411
    %v413 = vrot.slane %v412, 2
    %v414 = vadd.f32 %v412, %v413
    %v415 = vrot.slane %v414, 1
    %v416 = vadd.f32 %v414, %v415
    %v417 = vadd.f32 %v375, %v378
    %v418 = vrot.slane %v417, 4
    %v419 = vadd.f32 %v417, %v418
    %v420 = vrot.slane %v419, 2
    %v421 = vadd.f32 %v419, %v420
    %v422 = vrot.slane %v421, 1
    %v423 = vadd.f32 %v421, %v422
    %v424 = vadd.f32 %v398, %v401
    %v425 = vrot.slane %v424, 4
    %v426 = vadd.f32 %v424, %v425
    %v427 = vrot.slane %v426, 2
    %v428 = vadd.f32 %v426, %v427
    %v429 = vrot.slane %v428, 1
    %v430 = vadd.f32 %v428, %v429
    %v431 = vrcp.pop 16.0
    %v432 = vmul.f32 16.0, %v431
    %v433 = vsub.f32 1.0, %v432
    %v434 = vmul.f32 %v431, %v433
    %v435 = vadd.f32 %v431, %v434
    %vm436 = vweird.f32 %v431
    %v437 = vsel %vm436, %v431, %v435
    %v438 = vmul.f32 %v409, %v437
    %v439 = vmul.f32 %v416, %v437
    %v440 = vmul.f32 %v423, %v437
    %v441 = vmul.f32 %v430, %v437
    %v442 = vsub.f32 %v329, %v438
    %v443 = vsub.f32 %v352, %v439
    %v444 = vsub.f32 %v375, %v440
    %v445 = vsub.f32 %v398, %v441
    %v446 = vsub.f32 %v332, %v438
    %v447 = vsub.f32 %v355, %v439
    %v448 = vsub.f32 %v378, %v440
    %v449 = vsub.f32 %v401, %v441
    %v450 = vmul.f32 %v442, %v442
    %v451 = vmul.f32 %v443, %v443
    %v452 = vmul.f32 %v444, %v444
    %v453 = vmul.f32 %v445, %v445
    %v454 = vmul.f32 %v446, %v446
    %v455 = vmul.f32 %v447, %v447
    %v456 = vmul.f32 %v448, %v448
    %v457 = vmul.f32 %v449, %v449
    %v458 = vadd.f32 %v450, %v454
    %v459 = vrot.slane %v458, 4
    %v460 = vadd.f32 %v458, %v459
    %v461 = vrot.slane %v460, 2
    %v462 = vadd.f32 %v460, %v461
    %v463 = vrot.slane %v462, 1
    %v464 = vadd.f32 %v462, %v463
    %v465 = vadd.f32 %v451, %v455
    %v466 = vrot.slane %v465, 4
    %v467 = vadd.f32 %v465, %v466
    %v468 = vrot.slane %v467, 2
    %v469 = vadd.f32 %v467, %v468
    %v470 = vrot.slane %v469, 1
    %v471 = vadd.f32 %v469, %v470
    %v472 = vadd.f32 %v452, %v456
    %v473 = vrot.slane %v472, 4
    %v474 = vadd.f32 %v472, %v473
    %v475 = vrot.slane %v474, 2
    %v476 = vadd.f32 %v474, %v475
    %v477 = vrot.slane %v476, 1
    %v478 = vadd.f32 %v476, %v477
    %v479 = vadd.f32 %v453, %v457
    %v480 = vrot.slane %v479, 4
    %v481 = vadd.f32 %v479, %v480
    %v482 = vrot.slane %v481, 2
    %v483 = vadd.f32 %v481, %v482
    %v484 = vrot.slane %v483, 1
    %v485 = vadd.f32 %v483, %v484
    %v486 = vmul.f32 %v464, %v437
    %v487 = vmul.f32 %v471, %v437
    %v488 = vmul.f32 %v478, %v437
    %v489 = vmul.f32 %v485, %v437
    %v490 = vadd.f32 %v486, 1e-06
    %v491 = vadd.f32 %v487, 1e-06
    %v492 = vadd.f32 %v488, 1e-06
    %v493 = vadd.f32 %v489, 1e-06
    %v494 = vrsqrt.pop %v490
    %v495 = vmul.f32 %v494, %v490
    %v496 = vmul.f32 %v495, %v494
    %v497 = vmul.f32 0.5, %v496
    %v498 = vsub.f32 1.5, %v497
    %v499 = vmul.f32 %v494, %v498
    %vm500 = vweird.f32 %v490
    %vm501 = vweird.f32 %v494
    %vm502 = vmor %vm500, %vm501
    %v503 = vsel %vm502, %v494, %v499
    %v504 = vrsqrt.pop %v491
    %v505 = vmul.f32 %v504, %v491
    %v506 = vmul.f32 %v505, %v504
    %v507 = vmul.f32 0.5, %v506
    %v508 = vsub.f32 1.5, %v507
    %v509 = vmul.f32 %v504, %v508
    %vm510 = vweird.f32 %v491
    %vm511 = vweird.f32 %v504
    %vm512 = vmor %vm510, %vm511
    %v513 = vsel %vm512, %v504, %v509
    %v514 = vrsqrt.pop %v492
    %v515 = vmul.f32 %v514, %v492
    %v516 = vmul.f32 %v515, %v514
    %v517 = vmul.f32 0.5, %v516
    %v518 = vsub.f32 1.5, %v517
    %v519 = vmul.f32 %v514, %v518
    %vm520 = vweird.f32 %v492
    %vm521 = vweird.f32 %v514
    %vm522 = vmor %vm520, %vm521
    %v523 = vsel %vm522, %v514, %v519
    %v524 = vrsqrt.pop %v493
    %v525 = vmul.f32 %v524, %v493
    %v526 = vmul.f32 %v525, %v524
    %v527 = vmul.f32 0.5, %v526
    %v528 = vsub.f32 1.5, %v527
    %v529 = vmul.f32 %v524, %v528
    %vm530 = vweird.f32 %v493
    %vm531 = vweird.f32 %v524
    %vm532 = vmor %vm530, %vm531
    %v533 = vsel %vm532, %v524, %v529
    %v534 = vmul.f32 %v442, %v503
    %v535 = vmul.f32 %v443, %v513
    %v536 = vmul.f32 %v444, %v523
    %v537 = vmul.f32 %v445, %v533
    %v538 = vmul.f32 %v446, %v503
    %v539 = vmul.f32 %v447, %v513
    %v540 = vmul.f32 %v448, %v523
    %v541 = vmul.f32 %v449, %v533
    %v542 = vld [vmem:[%s1] sm:$0xff]
    %v543 = vld [vmem:[%s1 + $0x8] sm:$0xff]
    %v544 = vld [vmem:[%s1 + $0x10] sm:$0xff]
    %v545 = vld [vmem:[%s1 + $0x18] sm:$0xff]
    %v546 = vld [vmem:[%s2] sm:$0xff]
    %v547 = vld [vmem:[%s2 + $0x8] sm:$0xff]
    %v548 = vld [vmem:[%s2 + $0x10] sm:$0xff]
    %v549 = vld [vmem:[%s2 + $0x18] sm:$0xff]
    %551 = vset.pattern.permute.xlu0 1
    %552 = vperm.xlu0 %551, %v546
    %v553 = vpop.permute.xlu0 %552
    %556 = vset.pattern.permute.xlu0 1
    %557 = vperm.xlu0 %556, %v547
    %v558 = vpop.permute.xlu0 %557
    %561 = vset.pattern.permute.xlu0 1
    %562 = vperm.xlu0 %561, %v548
    %v563 = vpop.permute.xlu0 %562
    %566 = vset.pattern.permute.xlu0 1
    %567 = vperm.xlu0 %566, %v549
    %v568 = vpop.permute.xlu0 %567
    %v571 = vsel %vm304, %v542, 0
    %v574 = vsel %vm304, %v543, 0
    %v577 = vsel %vm304, %v544, 0
    %v580 = vsel %vm304, %v545, 0
    %582 = vmatpush.msra.mxu0 0.0
    %583 = vmatpush.msra.mxu0 0.0
    %584 = vmatpush.msra.mxu0 0.0
    %585 = vmatpush.msra.mxu0 0.0
    %586 = vmatpush.msra.mxu0 0.0
    %587 = vmatpush.msra.mxu0 0.0
    %588 = vmatpush.msra.mxu0 0.0
    %589 = vmatpush.msra.mxu0 0.0
    %590 = vmatpush.msra.mxu0 0.0
    %591 = vmatpush.msra.mxu0 0.0
    %592 = vmatpush.msra.mxu0 0.0
    %593 = vmatpush.msra.mxu0 0.0
    %594 = vmatpush.msra.mxu0 0.0
    %595 = vmatpush.msra.mxu0 0.0
    %596 = vmatpush.msra.mxu0 %v538
    %597 = vmatpush.msra.mxu0 %v534
    %598 = vmatmul.f32.gmra.mxu0 %v571
    %v599 = vpop.f32.mrf.mxu0
    %v600 = vadd.f32 %v553, %v599
    %601 = vmatmul.f32.gmra.mxu0 %v574
    %v602 = vpop.f32.mrf.mxu0
    %v603 = vadd.f32 %v558, %v602
    %604 = vmatmul.f32.gmra.mxu0 %v577
    %v605 = vpop.f32.mrf.mxu0
    %v606 = vadd.f32 %v563, %v605
    %607 = vmatmul.f32.gmra.mxu0 %v580
    %v608 = vpop.f32.mrf.mxu0
    %v609 = vadd.f32 %v568, %v608
    %610 = vdwg.mxu0
    %611 = vmatpush.msra.mxu0 0.0
    %612 = vmatpush.msra.mxu0 0.0
    %613 = vmatpush.msra.mxu0 0.0
    %614 = vmatpush.msra.mxu0 0.0
    %615 = vmatpush.msra.mxu0 0.0
    %616 = vmatpush.msra.mxu0 0.0
    %617 = vmatpush.msra.mxu0 0.0
    %618 = vmatpush.msra.mxu0 0.0
    %619 = vmatpush.msra.mxu0 0.0
    %620 = vmatpush.msra.mxu0 0.0
    %621 = vmatpush.msra.mxu0 0.0
    %622 = vmatpush.msra.mxu0 0.0
    %623 = vmatpush.msra.mxu0 0.0
    %624 = vmatpush.msra.mxu0 0.0
    %625 = vmatpush.msra.mxu0 %v539
    %626 = vmatpush.msra.mxu0 %v535
    %627 = vmatmul.f32.gmra.mxu0 %v571
    %v628 = vpop.f32.mrf.mxu0
    %v629 = vadd.f32 %v553, %v628
    %630 = vmatmul.f32.gmra.mxu0 %v574
    %v631 = vpop.f32.mrf.mxu0
    %v632 = vadd.f32 %v558, %v631
    %633 = vmatmul.f32.gmra.mxu0 %v577
    %v634 = vpop.f32.mrf.mxu0
    %v635 = vadd.f32 %v563, %v634
    %636 = vmatmul.f32.gmra.mxu0 %v580
    %v637 = vpop.f32.mrf.mxu0
    %v638 = vadd.f32 %v568, %v637
    %639 = vdwg.mxu0
    %640 = vmatpush.msra.mxu0 0.0
    %641 = vmatpush.msra.mxu0 0.0
    %642 = vmatpush.msra.mxu0 0.0
    %643 = vmatpush.msra.mxu0 0.0
    %644 = vmatpush.msra.mxu0 0.0
    %645 = vmatpush.msra.mxu0 0.0
    %646 = vmatpush.msra.mxu0 0.0
    %647 = vmatpush.msra.mxu0 0.0
    %648 = vmatpush.msra.mxu0 0.0
    %649 = vmatpush.msra.mxu0 0.0
    %650 = vmatpush.msra.mxu0 0.0
    %651 = vmatpush.msra.mxu0 0.0
    %652 = vmatpush.msra.mxu0 0.0
    %653 = vmatpush.msra.mxu0 0.0
    %654 = vmatpush.msra.mxu0 %v540
    %655 = vmatpush.msra.mxu0 %v536
    %656 = vmatmul.f32.gmra.mxu0 %v571
    %v657 = vpop.f32.mrf.mxu0
    %v658 = vadd.f32 %v553, %v657
    %659 = vmatmul.f32.gmra.mxu0 %v574
    %v660 = vpop.f32.mrf.mxu0
    %v661 = vadd.f32 %v558, %v660
    %662 = vmatmul.f32.gmra.mxu0 %v577
    %v663 = vpop.f32.mrf.mxu0
    %v664 = vadd.f32 %v563, %v663
    %665 = vmatmul.f32.gmra.mxu0 %v580
    %v666 = vpop.f32.mrf.mxu0
    %v667 = vadd.f32 %v568, %v666
    %668 = vdwg.mxu0
    %669 = vmatpush.msra.mxu0 0.0
    %670 = vmatpush.msra.mxu0 0.0
    %671 = vmatpush.msra.mxu0 0.0
    %672 = vmatpush.msra.mxu0 0.0
    %673 = vmatpush.msra.mxu0 0.0
    %674 = vmatpush.msra.mxu0 0.0
    %675 = vmatpush.msra.mxu0 0.0
    %676 = vmatpush.msra.mxu0 0.0
    %677 = vmatpush.msra.mxu0 0.0
    %678 = vmatpush.msra.mxu0 0.0
    %679 = vmatpush.msra.mxu0 0.0
    %680 = vmatpush.msra.mxu0 0.0
    %681 = vmatpush.msra.mxu0 0.0
    %682 = vmatpush.msra.mxu0 0.0
    %683 = vmatpush.msra.mxu0 %v541
    %684 = vmatpush.msra.mxu0 %v537
    %685 = vmatmul.f32.gmra.mxu0 %v571
    %v686 = vpop.f32.mrf.mxu0
    %v687 = vadd.f32 %v553, %v686
    %688 = vmatmul.f32.gmra.mxu0 %v574
    %v689 = vpop.f32.mrf.mxu0
    %v690 = vadd.f32 %v558, %v689
    %691 = vmatmul.f32.gmra.mxu0 %v577
    %v692 = vpop.f32.mrf.mxu0
    %v693 = vadd.f32 %v563, %v692
    %694 = vmatmul.f32.gmra.mxu0 %v580
    %v695 = vpop.f32.mrf.mxu0
    %v696 = vadd.f32 %v568, %v695
    %697 = vdwg.mxu0
    %698 = vset.pattern.permute.xlu0 6
    %699 = vperm.xlu0 %698, %v546
    %v700 = vpop.permute.xlu0 %699
    %702 = vset.pattern.permute.xlu0 6
    %703 = vperm.xlu0 %702, %v547
    %v704 = vpop.permute.xlu0 %703
    %706 = vset.pattern.permute.xlu0 6
    %707 = vperm.xlu0 %706, %v548
    %v708 = vpop.permute.xlu0 %707
    %710 = vset.pattern.permute.xlu0 6
    %711 = vperm.xlu0 %710, %v549
    %v712 = vpop.permute.xlu0 %711
    %v714 = vmul.f32 %v700, %v600
    %v715 = vmul.f32 %v700, %v629
    %v716 = vmul.f32 %v700, %v658
    %v717 = vmul.f32 %v700, %v687
    %v718 = vmul.f32 %v704, %v603
    %v719 = vmul.f32 %v704, %v632
    %v720 = vmul.f32 %v704, %v661
    %v721 = vmul.f32 %v704, %v690
    %v722 = vmul.f32 %v708, %v606
    %v723 = vmul.f32 %v708, %v635
    %v724 = vmul.f32 %v708, %v664
    %v725 = vmul.f32 %v708, %v693
    %v726 = vmul.f32 %v712, %v609
    %v727 = vmul.f32 %v712, %v638
    %v728 = vmul.f32 %v712, %v667
    %v729 = vmul.f32 %v712, %v696
    %v730 = vld [vmem:[%s3] ss:$8 sm:$0xf]
    %731 = vrot.lane.b32.xlu0 %v600, 17
    %v732 = vpop.permute.xlu0 %731
    %733 = vrot.lane.b32.xlu0 %v603, 17
    %v734 = vpop.permute.xlu0 %733
    %735 = vrot.lane.b32.xlu0 %v606, 17
    %v736 = vpop.permute.xlu0 %735
    %737 = vrot.lane.b32.xlu0 %v609, 17
    %v738 = vpop.permute.xlu0 %737
    %739 = vrot.lane.b32.xlu0 %v629, 17
    %v740 = vpop.permute.xlu0 %739
    %741 = vrot.lane.b32.xlu0 %v632, 17
    %v742 = vpop.permute.xlu0 %741
    %743 = vrot.lane.b32.xlu0 %v635, 17
    %v744 = vpop.permute.xlu0 %743
    %745 = vrot.lane.b32.xlu0 %v638, 17
    %v746 = vpop.permute.xlu0 %745
    %747 = vrot.lane.b32.xlu0 %v658, 17
    %v748 = vpop.permute.xlu0 %747
    %749 = vrot.lane.b32.xlu0 %v661, 17
    %v750 = vpop.permute.xlu0 %749
    %751 = vrot.lane.b32.xlu0 %v664, 17
    %v752 = vpop.permute.xlu0 %751
    %753 = vrot.lane.b32.xlu0 %v667, 17
    %v754 = vpop.permute.xlu0 %753
    %755 = vrot.lane.b32.xlu0 %v687, 17
    %v756 = vpop.permute.xlu0 %755
    %757 = vrot.lane.b32.xlu0 %v690, 17
    %v758 = vpop.permute.xlu0 %757
    %759 = vrot.lane.b32.xlu0 %v693, 17
    %v760 = vpop.permute.xlu0 %759
    %761 = vrot.lane.b32.xlu0 %v696, 17
    %v762 = vpop.permute.xlu0 %761
    %v763 = vsel %vm43, %v748, %v756
    %v764 = vsel %vm43, %v750, %v758
    %v765 = vsel %vm43, %v752, %v760
    %v766 = vsel %vm43, %v754, %v762
    %v767 = vsel %vm43, %v740, %v748
    %v768 = vsel %vm43, %v742, %v750
    %v769 = vsel %vm43, %v744, %v752
    %v770 = vsel %vm43, %v746, %v754
    %v771 = vsel %vm43, %v732, %v740
    %v772 = vsel %vm43, %v734, %v742
    %v773 = vsel %vm43, %v736, %v744
    %v774 = vsel %vm43, %v738, %v746
    %v775 = vsel %vm43, %v756, %v732
    %v776 = vsel %vm43, %v758, %v734
    %v777 = vsel %vm43, %v760, %v736
    %v778 = vsel %vm43, %v762, %v738
    %v780 = vperm.slane %v730, 0
    %v781 = vperm.slane %v730, 1
    %v782 = vperm.slane %v730, 2
    %v783 = vperm.slane %v730, 3
    %v788 = vmul.f32 %v780, %v775
    %v789 = vmul.f32 %v781, %v771
    %v790 = vmul.f32 %v782, %v767
    %v791 = vmul.f32 %v783, %v763
    %v792 = vmul.f32 %v780, %v776
    %v793 = vmul.f32 %v781, %v772
    %v794 = vmul.f32 %v782, %v768
    %v795 = vmul.f32 %v783, %v764
    %v796 = vmul.f32 %v780, %v777
    %v797 = vmul.f32 %v781, %v773
    %v798 = vmul.f32 %v782, %v769
    %v799 = vmul.f32 %v783, %v765
    %v800 = vmul.f32 %v780, %v778
    %v801 = vmul.f32 %v781, %v774
    %v802 = vmul.f32 %v782, %v770
    %v803 = vmul.f32 %v783, %v766
    %804 = vset.pattern.permute.xlu0 2
    %805 = vperm.xlu0 %804, %v546
    %v806 = vpop.permute.xlu0 %805
    %808 = vset.pattern.permute.xlu0 2
    %809 = vperm.xlu0 %808, %v547
    %v810 = vpop.permute.xlu0 %809
    %812 = vset.pattern.permute.xlu0 2
    %813 = vperm.xlu0 %812, %v548
    %v814 = vpop.permute.xlu0 %813
    %816 = vset.pattern.permute.xlu0 2
    %817 = vperm.xlu0 %816, %v549
    %v818 = vpop.permute.xlu0 %817
    %v820 = vmul.f32 %v806, %v788
    %v821 = vmul.f32 %v806, %v789
    %v822 = vmul.f32 %v806, %v790
    %v823 = vmul.f32 %v806, %v791
    %v824 = vmul.f32 %v810, %v792
    %v825 = vmul.f32 %v810, %v793
    %v826 = vmul.f32 %v810, %v794
    %v827 = vmul.f32 %v810, %v795
    %v828 = vmul.f32 %v814, %v796
    %v829 = vmul.f32 %v814, %v797
    %v830 = vmul.f32 %v814, %v798
    %v831 = vmul.f32 %v814, %v799
    %v832 = vmul.f32 %v818, %v800
    %v833 = vmul.f32 %v818, %v801
    %v834 = vmul.f32 %v818, %v802
    %v835 = vmul.f32 %v818, %v803
    %v836 = vadd.f32 %v714, %v820
    %v837 = vadd.f32 %v715, %v821
    %v838 = vadd.f32 %v716, %v822
    %v839 = vadd.f32 %v717, %v823
    %v840 = vadd.f32 %v718, %v824
    %v841 = vadd.f32 %v719, %v825
    %v842 = vadd.f32 %v720, %v826
    %v843 = vadd.f32 %v721, %v827
    %v844 = vadd.f32 %v722, %v828
    %v845 = vadd.f32 %v723, %v829
    %v846 = vadd.f32 %v724, %v830
    %v847 = vadd.f32 %v725, %v831
    %v848 = vadd.f32 %v726, %v832
    %v849 = vadd.f32 %v727, %v833
    %v850 = vadd.f32 %v728, %v834
    %v851 = vadd.f32 %v729, %v835
    %v852 = vld [vmem:[%s69] ss:$8 sm:$0xf]
    %853 = vrot.lane.b32.xlu0 %v600, 16
    %v854 = vpop.permute.xlu0 %853
    %855 = vrot.lane.b32.xlu0 %v603, 16
    %v856 = vpop.permute.xlu0 %855
    %857 = vrot.lane.b32.xlu0 %v606, 16
    %v858 = vpop.permute.xlu0 %857
    %859 = vrot.lane.b32.xlu0 %v609, 16
    %v860 = vpop.permute.xlu0 %859
    %861 = vrot.lane.b32.xlu0 %v629, 16
    %v862 = vpop.permute.xlu0 %861
    %863 = vrot.lane.b32.xlu0 %v632, 16
    %v864 = vpop.permute.xlu0 %863
    %865 = vrot.lane.b32.xlu0 %v635, 16
    %v866 = vpop.permute.xlu0 %865
    %867 = vrot.lane.b32.xlu0 %v638, 16
    %v868 = vpop.permute.xlu0 %867
    %869 = vrot.lane.b32.xlu0 %v658, 16
    %v870 = vpop.permute.xlu0 %869
    %871 = vrot.lane.b32.xlu0 %v661, 16
    %v872 = vpop.permute.xlu0 %871
    %873 = vrot.lane.b32.xlu0 %v664, 16
    %v874 = vpop.permute.xlu0 %873
    %875 = vrot.lane.b32.xlu0 %v667, 16
    %v876 = vpop.permute.xlu0 %875
    %877 = vrot.lane.b32.xlu0 %v687, 16
    %v878 = vpop.permute.xlu0 %877
    %879 = vrot.lane.b32.xlu0 %v690, 16
    %v880 = vpop.permute.xlu0 %879
    %881 = vrot.lane.b32.xlu0 %v693, 16
    %v882 = vpop.permute.xlu0 %881
    %883 = vrot.lane.b32.xlu0 %v696, 16
    %v884 = vpop.permute.xlu0 %883
    %v885 = vsel %vm79, %v870, %v878
    %v886 = vsel %vm79, %v872, %v880
    %v887 = vsel %vm79, %v874, %v882
    %v888 = vsel %vm79, %v876, %v884
    %v889 = vsel %vm79, %v862, %v870
    %v890 = vsel %vm79, %v864, %v872
    %v891 = vsel %vm79, %v866, %v874
    %v892 = vsel %vm79, %v868, %v876
    %v893 = vsel %vm79, %v854, %v862
    %v894 = vsel %vm79, %v856, %v864
    %v895 = vsel %vm79, %v858, %v866
    %v896 = vsel %vm79, %v860, %v868
    %v897 = vsel %vm79, %v878, %v854
    %v898 = vsel %vm79, %v880, %v856
    %v899 = vsel %vm79, %v882, %v858
    %v900 = vsel %vm79, %v884, %v860
    %v902 = vperm.slane %v852, 0
    %v903 = vperm.slane %v852, 1
    %v904 = vperm.slane %v852, 2
    %v905 = vperm.slane %v852, 3
    %v910 = vmul.f32 %v902, %v897
    %v911 = vmul.f32 %v903, %v893
    %v912 = vmul.f32 %v904, %v889
    %v913 = vmul.f32 %v905, %v885
    %v914 = vmul.f32 %v902, %v898
    %v915 = vmul.f32 %v903, %v894
    %v916 = vmul.f32 %v904, %v890
    %v917 = vmul.f32 %v905, %v886
    %v918 = vmul.f32 %v902, %v899
    %v919 = vmul.f32 %v903, %v895
    %v920 = vmul.f32 %v904, %v891
    %v921 = vmul.f32 %v905, %v887
    %v922 = vmul.f32 %v902, %v900
    %v923 = vmul.f32 %v903, %v896
    %v924 = vmul.f32 %v904, %v892
    %v925 = vmul.f32 %v905, %v888
    %926 = vset.pattern.permute.xlu0 3
    %927 = vperm.xlu0 %926, %v546
    %v928 = vpop.permute.xlu0 %927
    %930 = vset.pattern.permute.xlu0 3
    %931 = vperm.xlu0 %930, %v547
    %v932 = vpop.permute.xlu0 %931
    %934 = vset.pattern.permute.xlu0 3
    %935 = vperm.xlu0 %934, %v548
    %v936 = vpop.permute.xlu0 %935
    %938 = vset.pattern.permute.xlu0 3
    %939 = vperm.xlu0 %938, %v549
    %v940 = vpop.permute.xlu0 %939
    %v942 = vmul.f32 %v928, %v910
    %v943 = vmul.f32 %v928, %v911
    %v944 = vmul.f32 %v928, %v912
    %v945 = vmul.f32 %v928, %v913
    %v946 = vmul.f32 %v932, %v914
    %v947 = vmul.f32 %v932, %v915
    %v948 = vmul.f32 %v932, %v916
    %v949 = vmul.f32 %v932, %v917
    %v950 = vmul.f32 %v936, %v918
    %v951 = vmul.f32 %v936, %v919
    %v952 = vmul.f32 %v936, %v920
    %v953 = vmul.f32 %v936, %v921
    %v954 = vmul.f32 %v940, %v922
    %v955 = vmul.f32 %v940, %v923
    %v956 = vmul.f32 %v940, %v924
    %v957 = vmul.f32 %v940, %v925
    %v958 = vadd.f32 %v836, %v942
    %v959 = vadd.f32 %v837, %v943
    %v960 = vadd.f32 %v838, %v944
    %v961 = vadd.f32 %v839, %v945
    %v962 = vadd.f32 %v840, %v946
    %v963 = vadd.f32 %v841, %v947
    %v964 = vadd.f32 %v842, %v948
    %v965 = vadd.f32 %v843, %v949
    %v966 = vadd.f32 %v844, %v950
    %v967 = vadd.f32 %v845, %v951
    %v968 = vadd.f32 %v846, %v952
    %v969 = vadd.f32 %v847, %v953
    %v970 = vadd.f32 %v848, %v954
    %v971 = vadd.f32 %v849, %v955
    %v972 = vadd.f32 %v850, %v956
    %v973 = vadd.f32 %v851, %v957
    %v974 = vld [vmem:[%s99] ss:$8 sm:$0xf]
    %975 = vrot.lane.b32.xlu0 %v600, 15
    %v976 = vpop.permute.xlu0 %975
    %977 = vrot.lane.b32.xlu0 %v603, 15
    %v978 = vpop.permute.xlu0 %977
    %979 = vrot.lane.b32.xlu0 %v606, 15
    %v980 = vpop.permute.xlu0 %979
    %981 = vrot.lane.b32.xlu0 %v609, 15
    %v982 = vpop.permute.xlu0 %981
    %983 = vrot.lane.b32.xlu0 %v629, 15
    %v984 = vpop.permute.xlu0 %983
    %985 = vrot.lane.b32.xlu0 %v632, 15
    %v986 = vpop.permute.xlu0 %985
    %987 = vrot.lane.b32.xlu0 %v635, 15
    %v988 = vpop.permute.xlu0 %987
    %989 = vrot.lane.b32.xlu0 %v638, 15
    %v990 = vpop.permute.xlu0 %989
    %991 = vrot.lane.b32.xlu0 %v658, 15
    %v992 = vpop.permute.xlu0 %991
    %993 = vrot.lane.b32.xlu0 %v661, 15
    %v994 = vpop.permute.xlu0 %993
    %995 = vrot.lane.b32.xlu0 %v664, 15
    %v996 = vpop.permute.xlu0 %995
    %997 = vrot.lane.b32.xlu0 %v667, 15
    %v998 = vpop.permute.xlu0 %997
    %999 = vrot.lane.b32.xlu0 %v687, 15
    %v1000 = vpop.permute.xlu0 %999
    %1001 = vrot.lane.b32.xlu0 %v690, 15
    %v1002 = vpop.permute.xlu0 %1001
    %1003 = vrot.lane.b32.xlu0 %v693, 15
    %v1004 = vpop.permute.xlu0 %1003
    %1005 = vrot.lane.b32.xlu0 %v696, 15
    %v1006 = vpop.permute.xlu0 %1005
    %v1007 = vsel %vm109, %v992, %v1000
    %v1008 = vsel %vm109, %v994, %v1002
    %v1009 = vsel %vm109, %v996, %v1004
    %v1010 = vsel %vm109, %v998, %v1006
    %v1011 = vsel %vm109, %v984, %v992
    %v1012 = vsel %vm109, %v986, %v994
    %v1013 = vsel %vm109, %v988, %v996
    %v1014 = vsel %vm109, %v990, %v998
    %v1015 = vsel %vm109, %v976, %v984
    %v1016 = vsel %vm109, %v978, %v986
    %v1017 = vsel %vm109, %v980, %v988
    %v1018 = vsel %vm109, %v982, %v990
    %v1019 = vsel %vm109, %v1000, %v976
    %v1020 = vsel %vm109, %v1002, %v978
    %v1021 = vsel %vm109, %v1004, %v980
    %v1022 = vsel %vm109, %v1006, %v982
    %v1024 = vperm.slane %v974, 0
    %v1025 = vperm.slane %v974, 1
    %v1026 = vperm.slane %v974, 2
    %v1027 = vperm.slane %v974, 3
    %v1032 = vmul.f32 %v1024, %v1019
    %v1033 = vmul.f32 %v1025, %v1015
    %v1034 = vmul.f32 %v1026, %v1011
    %v1035 = vmul.f32 %v1027, %v1007
    %v1036 = vmul.f32 %v1024, %v1020
    %v1037 = vmul.f32 %v1025, %v1016
    %v1038 = vmul.f32 %v1026, %v1012
    %v1039 = vmul.f32 %v1027, %v1008
    %v1040 = vmul.f32 %v1024, %v1021
    %v1041 = vmul.f32 %v1025, %v1017
    %v1042 = vmul.f32 %v1026, %v1013
    %v1043 = vmul.f32 %v1027, %v1009
    %v1044 = vmul.f32 %v1024, %v1022
    %v1045 = vmul.f32 %v1025, %v1018
    %v1046 = vmul.f32 %v1026, %v1014
    %v1047 = vmul.f32 %v1027, %v1010
    %1048 = vset.pattern.permute.xlu0 4
    %1049 = vperm.xlu0 %1048, %v546
    %v1050 = vpop.permute.xlu0 %1049
    %1052 = vset.pattern.permute.xlu0 4
    %1053 = vperm.xlu0 %1052, %v547
    %v1054 = vpop.permute.xlu0 %1053
    %1056 = vset.pattern.permute.xlu0 4
    %1057 = vperm.xlu0 %1056, %v548
    %v1058 = vpop.permute.xlu0 %1057
    %1060 = vset.pattern.permute.xlu0 4
    %1061 = vperm.xlu0 %1060, %v549
    %v1062 = vpop.permute.xlu0 %1061
    %v1064 = vmul.f32 %v1050, %v1032
    %v1065 = vmul.f32 %v1050, %v1033
    %v1066 = vmul.f32 %v1050, %v1034
    %v1067 = vmul.f32 %v1050, %v1035
    %v1068 = vmul.f32 %v1054, %v1036
    %v1069 = vmul.f32 %v1054, %v1037
    %v1070 = vmul.f32 %v1054, %v1038
    %v1071 = vmul.f32 %v1054, %v1039
    %v1072 = vmul.f32 %v1058, %v1040
    %v1073 = vmul.f32 %v1058, %v1041
    %v1074 = vmul.f32 %v1058, %v1042
    %v1075 = vmul.f32 %v1058, %v1043
    %v1076 = vmul.f32 %v1062, %v1044
    %v1077 = vmul.f32 %v1062, %v1045
    %v1078 = vmul.f32 %v1062, %v1046
    %v1079 = vmul.f32 %v1062, %v1047
    %v1080 = vadd.f32 %v958, %v1064
    %v1081 = vadd.f32 %v959, %v1065
    %v1082 = vadd.f32 %v960, %v1066
    %v1083 = vadd.f32 %v961, %v1067
    %v1084 = vadd.f32 %v962, %v1068
    %v1085 = vadd.f32 %v963, %v1069
    %v1086 = vadd.f32 %v964, %v1070
    %v1087 = vadd.f32 %v965, %v1071
    %v1088 = vadd.f32 %v966, %v1072
    %v1089 = vadd.f32 %v967, %v1073
    %v1090 = vadd.f32 %v968, %v1074
    %v1091 = vadd.f32 %v969, %v1075
    %v1092 = vadd.f32 %v970, %v1076
    %v1093 = vadd.f32 %v971, %v1077
    %v1094 = vadd.f32 %v972, %v1078
    %v1095 = vadd.f32 %v973, %v1079
    %v1096 = vld [vmem:[%s129] ss:$8 sm:$0xf]
    %1097 = vrot.lane.b32.xlu0 %v600, 1
    %v1098 = vpop.permute.xlu0 %1097
    %1099 = vrot.lane.b32.xlu0 %v603, 1
    %v1100 = vpop.permute.xlu0 %1099
    %1101 = vrot.lane.b32.xlu0 %v606, 1
    %v1102 = vpop.permute.xlu0 %1101
    %1103 = vrot.lane.b32.xlu0 %v609, 1
    %v1104 = vpop.permute.xlu0 %1103
    %1105 = vrot.lane.b32.xlu0 %v629, 1
    %v1106 = vpop.permute.xlu0 %1105
    %1107 = vrot.lane.b32.xlu0 %v632, 1
    %v1108 = vpop.permute.xlu0 %1107
    %1109 = vrot.lane.b32.xlu0 %v635, 1
    %v1110 = vpop.permute.xlu0 %1109
    %1111 = vrot.lane.b32.xlu0 %v638, 1
    %v1112 = vpop.permute.xlu0 %1111
    %1113 = vrot.lane.b32.xlu0 %v658, 1
    %v1114 = vpop.permute.xlu0 %1113
    %1115 = vrot.lane.b32.xlu0 %v661, 1
    %v1116 = vpop.permute.xlu0 %1115
    %1117 = vrot.lane.b32.xlu0 %v664, 1
    %v1118 = vpop.permute.xlu0 %1117
    %1119 = vrot.lane.b32.xlu0 %v667, 1
    %v1120 = vpop.permute.xlu0 %1119
    %1121 = vrot.lane.b32.xlu0 %v687, 1
    %v1122 = vpop.permute.xlu0 %1121
    %1123 = vrot.lane.b32.xlu0 %v690, 1
    %v1124 = vpop.permute.xlu0 %1123
    %1125 = vrot.lane.b32.xlu0 %v693, 1
    %v1126 = vpop.permute.xlu0 %1125
    %1127 = vrot.lane.b32.xlu0 %v696, 1
    %v1128 = vpop.permute.xlu0 %1127
    %v1129 = vsel %vm139, %v1114, %v1122
    %v1130 = vsel %vm139, %v1116, %v1124
    %v1131 = vsel %vm139, %v1118, %v1126
    %v1132 = vsel %vm139, %v1120, %v1128
    %v1133 = vsel %vm139, %v1106, %v1114
    %v1134 = vsel %vm139, %v1108, %v1116
    %v1135 = vsel %vm139, %v1110, %v1118
    %v1136 = vsel %vm139, %v1112, %v1120
    %v1137 = vsel %vm139, %v1098, %v1106
    %v1138 = vsel %vm139, %v1100, %v1108
    %v1139 = vsel %vm139, %v1102, %v1110
    %v1140 = vsel %vm139, %v1104, %v1112
    %v1141 = vsel %vm139, %v1122, %v1098
    %v1142 = vsel %vm139, %v1124, %v1100
    %v1143 = vsel %vm139, %v1126, %v1102
    %v1144 = vsel %vm139, %v1128, %v1104
    %v1146 = vperm.slane %v1096, 0
    %v1147 = vperm.slane %v1096, 1
    %v1148 = vperm.slane %v1096, 2
    %v1149 = vperm.slane %v1096, 3
    %v1154 = vmul.f32 %v1146, %v1141
    %v1155 = vmul.f32 %v1147, %v1137
    %v1156 = vmul.f32 %v1148, %v1133
    %v1157 = vmul.f32 %v1149, %v1129
    %v1158 = vmul.f32 %v1146, %v1142
    %v1159 = vmul.f32 %v1147, %v1138
    %v1160 = vmul.f32 %v1148, %v1134
    %v1161 = vmul.f32 %v1149, %v1130
    %v1162 = vmul.f32 %v1146, %v1143
    %v1163 = vmul.f32 %v1147, %v1139
    %v1164 = vmul.f32 %v1148, %v1135
    %v1165 = vmul.f32 %v1149, %v1131
    %v1166 = vmul.f32 %v1146, %v1144
    %v1167 = vmul.f32 %v1147, %v1140
    %v1168 = vmul.f32 %v1148, %v1136
    %v1169 = vmul.f32 %v1149, %v1132
    %1170 = vset.pattern.permute.xlu0 5
    %1171 = vperm.xlu0 %1170, %v546
    %v1172 = vpop.permute.xlu0 %1171
    %1174 = vset.pattern.permute.xlu0 5
    %1175 = vperm.xlu0 %1174, %v547
    %v1176 = vpop.permute.xlu0 %1175
    %1178 = vset.pattern.permute.xlu0 5
    %1179 = vperm.xlu0 %1178, %v548
    %v1180 = vpop.permute.xlu0 %1179
    %1182 = vset.pattern.permute.xlu0 5
    %1183 = vperm.xlu0 %1182, %v549
    %v1184 = vpop.permute.xlu0 %1183
    %v1186 = vmul.f32 %v1172, %v1154
    %v1187 = vmul.f32 %v1172, %v1155
    %v1188 = vmul.f32 %v1172, %v1156
    %v1189 = vmul.f32 %v1172, %v1157
    %v1190 = vmul.f32 %v1176, %v1158
    %v1191 = vmul.f32 %v1176, %v1159
    %v1192 = vmul.f32 %v1176, %v1160
    %v1193 = vmul.f32 %v1176, %v1161
    %v1194 = vmul.f32 %v1180, %v1162
    %v1195 = vmul.f32 %v1180, %v1163
    %v1196 = vmul.f32 %v1180, %v1164
    %v1197 = vmul.f32 %v1180, %v1165
    %v1198 = vmul.f32 %v1184, %v1166
    %v1199 = vmul.f32 %v1184, %v1167
    %v1200 = vmul.f32 %v1184, %v1168
    %v1201 = vmul.f32 %v1184, %v1169
    %v1202 = vadd.f32 %v1080, %v1186
    %v1203 = vadd.f32 %v1081, %v1187
    %v1204 = vadd.f32 %v1082, %v1188
    %v1205 = vadd.f32 %v1083, %v1189
    %v1206 = vadd.f32 %v1084, %v1190
    %v1207 = vadd.f32 %v1085, %v1191
    %v1208 = vadd.f32 %v1086, %v1192
    %v1209 = vadd.f32 %v1087, %v1193
    %v1210 = vadd.f32 %v1088, %v1194
    %v1211 = vadd.f32 %v1089, %v1195
    %v1212 = vadd.f32 %v1090, %v1196
    %v1213 = vadd.f32 %v1091, %v1197
    %v1214 = vadd.f32 %v1092, %v1198
    %v1215 = vadd.f32 %v1093, %v1199
    %v1216 = vadd.f32 %v1094, %v1200
    %v1217 = vadd.f32 %v1095, %v1201
    %v1218 = vld [vmem:[%s162] ss:$8 sm:$0xf]
    %1219 = vrot.lane.b32.xlu0 %v600, 127
    %v1220 = vpop.permute.xlu0 %1219
    %1221 = vrot.lane.b32.xlu0 %v603, 127
    %v1222 = vpop.permute.xlu0 %1221
    %1223 = vrot.lane.b32.xlu0 %v606, 127
    %v1224 = vpop.permute.xlu0 %1223
    %1225 = vrot.lane.b32.xlu0 %v609, 127
    %v1226 = vpop.permute.xlu0 %1225
    %1227 = vrot.lane.b32.xlu0 %v629, 127
    %v1228 = vpop.permute.xlu0 %1227
    %1229 = vrot.lane.b32.xlu0 %v632, 127
    %v1230 = vpop.permute.xlu0 %1229
    %1231 = vrot.lane.b32.xlu0 %v635, 127
    %v1232 = vpop.permute.xlu0 %1231
    %1233 = vrot.lane.b32.xlu0 %v638, 127
    %v1234 = vpop.permute.xlu0 %1233
    %1235 = vrot.lane.b32.xlu0 %v658, 127
    %v1236 = vpop.permute.xlu0 %1235
    %1237 = vrot.lane.b32.xlu0 %v661, 127
    %v1238 = vpop.permute.xlu0 %1237
    %1239 = vrot.lane.b32.xlu0 %v664, 127
    %v1240 = vpop.permute.xlu0 %1239
    %1241 = vrot.lane.b32.xlu0 %v667, 127
    %v1242 = vpop.permute.xlu0 %1241
    %1243 = vrot.lane.b32.xlu0 %v687, 127
    %v1244 = vpop.permute.xlu0 %1243
    %1245 = vrot.lane.b32.xlu0 %v690, 127
    %v1246 = vpop.permute.xlu0 %1245
    %1247 = vrot.lane.b32.xlu0 %v693, 127
    %v1248 = vpop.permute.xlu0 %1247
    %1249 = vrot.lane.b32.xlu0 %v696, 127
    %v1250 = vpop.permute.xlu0 %1249
    %v1251 = vsel %vm172, %v1236, %v1244
    %v1252 = vsel %vm172, %v1238, %v1246
    %v1253 = vsel %vm172, %v1240, %v1248
    %v1254 = vsel %vm172, %v1242, %v1250
    %v1255 = vsel %vm172, %v1228, %v1236
    %v1256 = vsel %vm172, %v1230, %v1238
    %v1257 = vsel %vm172, %v1232, %v1240
    %v1258 = vsel %vm172, %v1234, %v1242
    %v1259 = vsel %vm172, %v1220, %v1228
    %v1260 = vsel %vm172, %v1222, %v1230
    %v1261 = vsel %vm172, %v1224, %v1232
    %v1262 = vsel %vm172, %v1226, %v1234
    %v1263 = vsel %vm172, %v1244, %v1220
    %v1264 = vsel %vm172, %v1246, %v1222
    %v1265 = vsel %vm172, %v1248, %v1224
    %v1266 = vsel %vm172, %v1250, %v1226
    %v1268 = vperm.slane %v1218, 0
    %v1269 = vperm.slane %v1218, 1
    %v1270 = vperm.slane %v1218, 2
    %v1271 = vperm.slane %v1218, 3
    %v1276 = vmul.f32 %v1268, %v1259
    %v1277 = vmul.f32 %v1269, %v1255
    %v1278 = vmul.f32 %v1270, %v1251
    %v1279 = vmul.f32 %v1271, %v1263
    %v1280 = vmul.f32 %v1268, %v1260
    %v1281 = vmul.f32 %v1269, %v1256
    %v1282 = vmul.f32 %v1270, %v1252
    %v1283 = vmul.f32 %v1271, %v1264
    %v1284 = vmul.f32 %v1268, %v1261
    %v1285 = vmul.f32 %v1269, %v1257
    %v1286 = vmul.f32 %v1270, %v1253
    %v1287 = vmul.f32 %v1271, %v1265
    %v1288 = vmul.f32 %v1268, %v1262
    %v1289 = vmul.f32 %v1269, %v1258
    %v1290 = vmul.f32 %v1270, %v1254
    %v1291 = vmul.f32 %v1271, %v1266
    %1292 = vset.pattern.permute.xlu0 7
    %1293 = vperm.xlu0 %1292, %v546
    %v1294 = vpop.permute.xlu0 %1293
    %1296 = vset.pattern.permute.xlu0 7
    %1297 = vperm.xlu0 %1296, %v547
    %v1298 = vpop.permute.xlu0 %1297
    %1300 = vset.pattern.permute.xlu0 7
    %1301 = vperm.xlu0 %1300, %v548
    %v1302 = vpop.permute.xlu0 %1301
    %1304 = vset.pattern.permute.xlu0 7
    %1305 = vperm.xlu0 %1304, %v549
    %v1306 = vpop.permute.xlu0 %1305
    %v1308 = vmul.f32 %v1294, %v1276
    %v1309 = vmul.f32 %v1294, %v1277
    %v1310 = vmul.f32 %v1294, %v1278
    %v1311 = vmul.f32 %v1294, %v1279
    %v1312 = vmul.f32 %v1298, %v1280
    %v1313 = vmul.f32 %v1298, %v1281
    %v1314 = vmul.f32 %v1298, %v1282
    %v1315 = vmul.f32 %v1298, %v1283
    %v1316 = vmul.f32 %v1302, %v1284
    %v1317 = vmul.f32 %v1302, %v1285
    %v1318 = vmul.f32 %v1302, %v1286
    %v1319 = vmul.f32 %v1302, %v1287
    %v1320 = vmul.f32 %v1306, %v1288
    %v1321 = vmul.f32 %v1306, %v1289
    %v1322 = vmul.f32 %v1306, %v1290
    %v1323 = vmul.f32 %v1306, %v1291
    %v1324 = vadd.f32 %v1202, %v1308
    %v1325 = vadd.f32 %v1203, %v1309
    %v1326 = vadd.f32 %v1204, %v1310
    %v1327 = vadd.f32 %v1205, %v1311
    %v1328 = vadd.f32 %v1206, %v1312
    %v1329 = vadd.f32 %v1207, %v1313
    %v1330 = vadd.f32 %v1208, %v1314
    %v1331 = vadd.f32 %v1209, %v1315
    %v1332 = vadd.f32 %v1210, %v1316
    %v1333 = vadd.f32 %v1211, %v1317
    %v1334 = vadd.f32 %v1212, %v1318
    %v1335 = vadd.f32 %v1213, %v1319
    %v1336 = vadd.f32 %v1214, %v1320
    %v1337 = vadd.f32 %v1215, %v1321
    %v1338 = vadd.f32 %v1216, %v1322
    %v1339 = vadd.f32 %v1217, %v1323
    %v1340 = vld [vmem:[%s192] ss:$8 sm:$0xf]
    %1341 = vrot.lane.b32.xlu0 %v600, 113
    %v1342 = vpop.permute.xlu0 %1341
    %1343 = vrot.lane.b32.xlu0 %v603, 113
    %v1344 = vpop.permute.xlu0 %1343
    %1345 = vrot.lane.b32.xlu0 %v606, 113
    %v1346 = vpop.permute.xlu0 %1345
    %1347 = vrot.lane.b32.xlu0 %v609, 113
    %v1348 = vpop.permute.xlu0 %1347
    %1349 = vrot.lane.b32.xlu0 %v629, 113
    %v1350 = vpop.permute.xlu0 %1349
    %1351 = vrot.lane.b32.xlu0 %v632, 113
    %v1352 = vpop.permute.xlu0 %1351
    %1353 = vrot.lane.b32.xlu0 %v635, 113
    %v1354 = vpop.permute.xlu0 %1353
    %1355 = vrot.lane.b32.xlu0 %v638, 113
    %v1356 = vpop.permute.xlu0 %1355
    %1357 = vrot.lane.b32.xlu0 %v658, 113
    %v1358 = vpop.permute.xlu0 %1357
    %1359 = vrot.lane.b32.xlu0 %v661, 113
    %v1360 = vpop.permute.xlu0 %1359
    %1361 = vrot.lane.b32.xlu0 %v664, 113
    %v1362 = vpop.permute.xlu0 %1361
    %1363 = vrot.lane.b32.xlu0 %v667, 113
    %v1364 = vpop.permute.xlu0 %1363
    %1365 = vrot.lane.b32.xlu0 %v687, 113
    %v1366 = vpop.permute.xlu0 %1365
    %1367 = vrot.lane.b32.xlu0 %v690, 113
    %v1368 = vpop.permute.xlu0 %1367
    %1369 = vrot.lane.b32.xlu0 %v693, 113
    %v1370 = vpop.permute.xlu0 %1369
    %1371 = vrot.lane.b32.xlu0 %v696, 113
    %v1372 = vpop.permute.xlu0 %1371
    %v1373 = vsel %vm202, %v1358, %v1366
    %v1374 = vsel %vm202, %v1360, %v1368
    %v1375 = vsel %vm202, %v1362, %v1370
    %v1376 = vsel %vm202, %v1364, %v1372
    %v1377 = vsel %vm202, %v1350, %v1358
    %v1378 = vsel %vm202, %v1352, %v1360
    %v1379 = vsel %vm202, %v1354, %v1362
    %v1380 = vsel %vm202, %v1356, %v1364
    %v1381 = vsel %vm202, %v1342, %v1350
    %v1382 = vsel %vm202, %v1344, %v1352
    %v1383 = vsel %vm202, %v1346, %v1354
    %v1384 = vsel %vm202, %v1348, %v1356
    %v1385 = vsel %vm202, %v1366, %v1342
    %v1386 = vsel %vm202, %v1368, %v1344
    %v1387 = vsel %vm202, %v1370, %v1346
    %v1388 = vsel %vm202, %v1372, %v1348
    %v1390 = vperm.slane %v1340, 0
    %v1391 = vperm.slane %v1340, 1
    %v1392 = vperm.slane %v1340, 2
    %v1393 = vperm.slane %v1340, 3
    %v1398 = vmul.f32 %v1390, %v1381
    %v1399 = vmul.f32 %v1391, %v1377
    %v1400 = vmul.f32 %v1392, %v1373
    %v1401 = vmul.f32 %v1393, %v1385
    %v1402 = vmul.f32 %v1390, %v1382
    %v1403 = vmul.f32 %v1391, %v1378
    %v1404 = vmul.f32 %v1392, %v1374
    %v1405 = vmul.f32 %v1393, %v1386
    %v1406 = vmul.f32 %v1390, %v1383
    %v1407 = vmul.f32 %v1391, %v1379
    %v1408 = vmul.f32 %v1392, %v1375
    %v1409 = vmul.f32 %v1393, %v1387
    %v1410 = vmul.f32 %v1390, %v1384
    %v1411 = vmul.f32 %v1391, %v1380
    %v1412 = vmul.f32 %v1392, %v1376
    %v1413 = vmul.f32 %v1393, %v1388
    %1414 = vset.pattern.permute.xlu0 8
    %1415 = vperm.xlu0 %1414, %v546
    %v1416 = vpop.permute.xlu0 %1415
    %1418 = vset.pattern.permute.xlu0 8
    %1419 = vperm.xlu0 %1418, %v547
    %v1420 = vpop.permute.xlu0 %1419
    %1422 = vset.pattern.permute.xlu0 8
    %1423 = vperm.xlu0 %1422, %v548
    %v1424 = vpop.permute.xlu0 %1423
    %1426 = vset.pattern.permute.xlu0 8
    %1427 = vperm.xlu0 %1426, %v549
    %v1428 = vpop.permute.xlu0 %1427
    %v1430 = vmul.f32 %v1416, %v1398
    %v1431 = vmul.f32 %v1416, %v1399
    %v1432 = vmul.f32 %v1416, %v1400
    %v1433 = vmul.f32 %v1416, %v1401
    %v1434 = vmul.f32 %v1420, %v1402
    %v1435 = vmul.f32 %v1420, %v1403
    %v1436 = vmul.f32 %v1420, %v1404
    %v1437 = vmul.f32 %v1420, %v1405
    %v1438 = vmul.f32 %v1424, %v1406
    %v1439 = vmul.f32 %v1424, %v1407
    %v1440 = vmul.f32 %v1424, %v1408
    %v1441 = vmul.f32 %v1424, %v1409
    %v1442 = vmul.f32 %v1428, %v1410
    %v1443 = vmul.f32 %v1428, %v1411
    %v1444 = vmul.f32 %v1428, %v1412
    %v1445 = vmul.f32 %v1428, %v1413
    %v1446 = vadd.f32 %v1324, %v1430
    %v1447 = vadd.f32 %v1325, %v1431
    %v1448 = vadd.f32 %v1326, %v1432
    %v1449 = vadd.f32 %v1327, %v1433
    %v1450 = vadd.f32 %v1328, %v1434
    %v1451 = vadd.f32 %v1329, %v1435
    %v1452 = vadd.f32 %v1330, %v1436
    %v1453 = vadd.f32 %v1331, %v1437
    %v1454 = vadd.f32 %v1332, %v1438
    %v1455 = vadd.f32 %v1333, %v1439
    %v1456 = vadd.f32 %v1334, %v1440
    %v1457 = vadd.f32 %v1335, %v1441
    %v1458 = vadd.f32 %v1336, %v1442
    %v1459 = vadd.f32 %v1337, %v1443
    %v1460 = vadd.f32 %v1338, %v1444
    %v1461 = vadd.f32 %v1339, %v1445
    %v1462 = vld [vmem:[%s222] ss:$8 sm:$0xf]
    %1463 = vrot.lane.b32.xlu0 %v600, 112
    %v1464 = vpop.permute.xlu0 %1463
    %1465 = vrot.lane.b32.xlu0 %v603, 112
    %v1466 = vpop.permute.xlu0 %1465
    %1467 = vrot.lane.b32.xlu0 %v606, 112
    %v1468 = vpop.permute.xlu0 %1467
    %1469 = vrot.lane.b32.xlu0 %v609, 112
    %v1470 = vpop.permute.xlu0 %1469
    %1471 = vrot.lane.b32.xlu0 %v629, 112
    %v1472 = vpop.permute.xlu0 %1471
    %1473 = vrot.lane.b32.xlu0 %v632, 112
    %v1474 = vpop.permute.xlu0 %1473
    %1475 = vrot.lane.b32.xlu0 %v635, 112
    %v1476 = vpop.permute.xlu0 %1475
    %1477 = vrot.lane.b32.xlu0 %v638, 112
    %v1478 = vpop.permute.xlu0 %1477
    %1479 = vrot.lane.b32.xlu0 %v658, 112
    %v1480 = vpop.permute.xlu0 %1479
    %1481 = vrot.lane.b32.xlu0 %v661, 112
    %v1482 = vpop.permute.xlu0 %1481
    %1483 = vrot.lane.b32.xlu0 %v664, 112
    %v1484 = vpop.permute.xlu0 %1483
    %1485 = vrot.lane.b32.xlu0 %v667, 112
    %v1486 = vpop.permute.xlu0 %1485
    %1487 = vrot.lane.b32.xlu0 %v687, 112
    %v1488 = vpop.permute.xlu0 %1487
    %1489 = vrot.lane.b32.xlu0 %v690, 112
    %v1490 = vpop.permute.xlu0 %1489
    %1491 = vrot.lane.b32.xlu0 %v693, 112
    %v1492 = vpop.permute.xlu0 %1491
    %1493 = vrot.lane.b32.xlu0 %v696, 112
    %v1494 = vpop.permute.xlu0 %1493
    %v1495 = vsel %vm232, %v1480, %v1488
    %v1496 = vsel %vm232, %v1482, %v1490
    %v1497 = vsel %vm232, %v1484, %v1492
    %v1498 = vsel %vm232, %v1486, %v1494
    %v1499 = vsel %vm232, %v1472, %v1480
    %v1500 = vsel %vm232, %v1474, %v1482
    %v1501 = vsel %vm232, %v1476, %v1484
    %v1502 = vsel %vm232, %v1478, %v1486
    %v1503 = vsel %vm232, %v1464, %v1472
    %v1504 = vsel %vm232, %v1466, %v1474
    %v1505 = vsel %vm232, %v1468, %v1476
    %v1506 = vsel %vm232, %v1470, %v1478
    %v1507 = vsel %vm232, %v1488, %v1464
    %v1508 = vsel %vm232, %v1490, %v1466
    %v1509 = vsel %vm232, %v1492, %v1468
    %v1510 = vsel %vm232, %v1494, %v1470
    %v1512 = vperm.slane %v1462, 0
    %v1513 = vperm.slane %v1462, 1
    %v1514 = vperm.slane %v1462, 2
    %v1515 = vperm.slane %v1462, 3
    %v1520 = vmul.f32 %v1512, %v1503
    %v1521 = vmul.f32 %v1513, %v1499
    %v1522 = vmul.f32 %v1514, %v1495
    %v1523 = vmul.f32 %v1515, %v1507
    %v1524 = vmul.f32 %v1512, %v1504
    %v1525 = vmul.f32 %v1513, %v1500
    %v1526 = vmul.f32 %v1514, %v1496
    %v1527 = vmul.f32 %v1515, %v1508
    %v1528 = vmul.f32 %v1512, %v1505
    %v1529 = vmul.f32 %v1513, %v1501
    %v1530 = vmul.f32 %v1514, %v1497
    %v1531 = vmul.f32 %v1515, %v1509
    %v1532 = vmul.f32 %v1512, %v1506
    %v1533 = vmul.f32 %v1513, %v1502
    %v1534 = vmul.f32 %v1514, %v1498
    %v1535 = vmul.f32 %v1515, %v1510
    %1536 = vset.pattern.permute.xlu0 9
    %1537 = vperm.xlu0 %1536, %v546
    %v1538 = vpop.permute.xlu0 %1537
    %1540 = vset.pattern.permute.xlu0 9
    %1541 = vperm.xlu0 %1540, %v547
    %v1542 = vpop.permute.xlu0 %1541
    %1544 = vset.pattern.permute.xlu0 9
    %1545 = vperm.xlu0 %1544, %v548
    %v1546 = vpop.permute.xlu0 %1545
    %1548 = vset.pattern.permute.xlu0 9
    %1549 = vperm.xlu0 %1548, %v549
    %v1550 = vpop.permute.xlu0 %1549
    %v1552 = vmul.f32 %v1538, %v1520
    %v1553 = vmul.f32 %v1538, %v1521
    %v1554 = vmul.f32 %v1538, %v1522
    %v1555 = vmul.f32 %v1538, %v1523
    %v1556 = vmul.f32 %v1542, %v1524
    %v1557 = vmul.f32 %v1542, %v1525
    %v1558 = vmul.f32 %v1542, %v1526
    %v1559 = vmul.f32 %v1542, %v1527
    %v1560 = vmul.f32 %v1546, %v1528
    %v1561 = vmul.f32 %v1546, %v1529
    %v1562 = vmul.f32 %v1546, %v1530
    %v1563 = vmul.f32 %v1546, %v1531
    %v1564 = vmul.f32 %v1550, %v1532
    %v1565 = vmul.f32 %v1550, %v1533
    %v1566 = vmul.f32 %v1550, %v1534
    %v1567 = vmul.f32 %v1550, %v1535
    %v1568 = vadd.f32 %v1446, %v1552
    %v1569 = vadd.f32 %v1447, %v1553
    %v1570 = vadd.f32 %v1448, %v1554
    %v1571 = vadd.f32 %v1449, %v1555
    %v1572 = vadd.f32 %v1450, %v1556
    %v1573 = vadd.f32 %v1451, %v1557
    %v1574 = vadd.f32 %v1452, %v1558
    %v1575 = vadd.f32 %v1453, %v1559
    %v1576 = vadd.f32 %v1454, %v1560
    %v1577 = vadd.f32 %v1455, %v1561
    %v1578 = vadd.f32 %v1456, %v1562
    %v1579 = vadd.f32 %v1457, %v1563
    %v1580 = vadd.f32 %v1458, %v1564
    %v1581 = vadd.f32 %v1459, %v1565
    %v1582 = vadd.f32 %v1460, %v1566
    %v1583 = vadd.f32 %v1461, %v1567
    %v1584 = vld [vmem:[%s252] ss:$8 sm:$0xf]
    %1585 = vrot.lane.b32.xlu0 %v600, 111
    %v1586 = vpop.permute.xlu0 %1585
    %1587 = vrot.lane.b32.xlu0 %v603, 111
    %v1588 = vpop.permute.xlu0 %1587
    %1589 = vrot.lane.b32.xlu0 %v606, 111
    %v1590 = vpop.permute.xlu0 %1589
    %1591 = vrot.lane.b32.xlu0 %v609, 111
    %v1592 = vpop.permute.xlu0 %1591
    %1593 = vrot.lane.b32.xlu0 %v629, 111
    %v1594 = vpop.permute.xlu0 %1593
    %1595 = vrot.lane.b32.xlu0 %v632, 111
    %v1596 = vpop.permute.xlu0 %1595
    %1597 = vrot.lane.b32.xlu0 %v635, 111
    %v1598 = vpop.permute.xlu0 %1597
    %1599 = vrot.lane.b32.xlu0 %v638, 111
    %v1600 = vpop.permute.xlu0 %1599
    %1601 = vrot.lane.b32.xlu0 %v658, 111
    %v1602 = vpop.permute.xlu0 %1601
    %1603 = vrot.lane.b32.xlu0 %v661, 111
    %v1604 = vpop.permute.xlu0 %1603
    %1605 = vrot.lane.b32.xlu0 %v664, 111
    %v1606 = vpop.permute.xlu0 %1605
    %1607 = vrot.lane.b32.xlu0 %v667, 111
    %v1608 = vpop.permute.xlu0 %1607
    %1609 = vrot.lane.b32.xlu0 %v687, 111
    %v1610 = vpop.permute.xlu0 %1609
    %1611 = vrot.lane.b32.xlu0 %v690, 111
    %v1612 = vpop.permute.xlu0 %1611
    %1613 = vrot.lane.b32.xlu0 %v693, 111
    %v1614 = vpop.permute.xlu0 %1613
    %1615 = vrot.lane.b32.xlu0 %v696, 111
    %v1616 = vpop.permute.xlu0 %1615
    %v1617 = vsel %vm262, %v1602, %v1610
    %v1618 = vsel %vm262, %v1604, %v1612
    %v1619 = vsel %vm262, %v1606, %v1614
    %v1620 = vsel %vm262, %v1608, %v1616
    %v1621 = vsel %vm262, %v1594, %v1602
    %v1622 = vsel %vm262, %v1596, %v1604
    %v1623 = vsel %vm262, %v1598, %v1606
    %v1624 = vsel %vm262, %v1600, %v1608
    %v1625 = vsel %vm262, %v1586, %v1594
    %v1626 = vsel %vm262, %v1588, %v1596
    %v1627 = vsel %vm262, %v1590, %v1598
    %v1628 = vsel %vm262, %v1592, %v1600
    %v1629 = vsel %vm262, %v1610, %v1586
    %v1630 = vsel %vm262, %v1612, %v1588
    %v1631 = vsel %vm262, %v1614, %v1590
    %v1632 = vsel %vm262, %v1616, %v1592
    %v1634 = vperm.slane %v1584, 0
    %v1635 = vperm.slane %v1584, 1
    %v1636 = vperm.slane %v1584, 2
    %v1637 = vperm.slane %v1584, 3
    %v1642 = vmul.f32 %v1634, %v1625
    %v1643 = vmul.f32 %v1635, %v1621
    %v1644 = vmul.f32 %v1636, %v1617
    %v1645 = vmul.f32 %v1637, %v1629
    %v1646 = vmul.f32 %v1634, %v1626
    %v1647 = vmul.f32 %v1635, %v1622
    %v1648 = vmul.f32 %v1636, %v1618
    %v1649 = vmul.f32 %v1637, %v1630
    %v1650 = vmul.f32 %v1634, %v1627
    %v1651 = vmul.f32 %v1635, %v1623
    %v1652 = vmul.f32 %v1636, %v1619
    %v1653 = vmul.f32 %v1637, %v1631
    %v1654 = vmul.f32 %v1634, %v1628
    %v1655 = vmul.f32 %v1635, %v1624
    %v1656 = vmul.f32 %v1636, %v1620
    %v1657 = vmul.f32 %v1637, %v1632
    %1658 = vset.pattern.permute.xlu0 10
    %1659 = vperm.xlu0 %1658, %v546
    %v1660 = vpop.permute.xlu0 %1659
    %1662 = vset.pattern.permute.xlu0 10
    %1663 = vperm.xlu0 %1662, %v547
    %v1664 = vpop.permute.xlu0 %1663
    %1666 = vset.pattern.permute.xlu0 10
    %1667 = vperm.xlu0 %1666, %v548
    %v1668 = vpop.permute.xlu0 %1667
    %1670 = vset.pattern.permute.xlu0 10
    %1671 = vperm.xlu0 %1670, %v549
    %v1672 = vpop.permute.xlu0 %1671
    %v1674 = vmul.f32 %v1660, %v1642
    %v1675 = vmul.f32 %v1660, %v1643
    %v1676 = vmul.f32 %v1660, %v1644
    %v1677 = vmul.f32 %v1660, %v1645
    %v1678 = vmul.f32 %v1664, %v1646
    %v1679 = vmul.f32 %v1664, %v1647
    %v1680 = vmul.f32 %v1664, %v1648
    %v1681 = vmul.f32 %v1664, %v1649
    %v1682 = vmul.f32 %v1668, %v1650
    %v1683 = vmul.f32 %v1668, %v1651
    %v1684 = vmul.f32 %v1668, %v1652
    %v1685 = vmul.f32 %v1668, %v1653
    %v1686 = vmul.f32 %v1672, %v1654
    %v1687 = vmul.f32 %v1672, %v1655
    %v1688 = vmul.f32 %v1672, %v1656
    %v1689 = vmul.f32 %v1672, %v1657
    %v1690 = vadd.f32 %v1568, %v1674
    %v1691 = vadd.f32 %v1569, %v1675
    %v1692 = vadd.f32 %v1570, %v1676
    %v1693 = vadd.f32 %v1571, %v1677
    %v1694 = vadd.f32 %v1572, %v1678
    %v1695 = vadd.f32 %v1573, %v1679
    %v1696 = vadd.f32 %v1574, %v1680
    %v1697 = vadd.f32 %v1575, %v1681
    %v1698 = vadd.f32 %v1576, %v1682
    %v1699 = vadd.f32 %v1577, %v1683
    %v1700 = vadd.f32 %v1578, %v1684
    %v1701 = vadd.f32 %v1579, %v1685
    %v1702 = vadd.f32 %v1580, %v1686
    %v1703 = vadd.f32 %v1581, %v1687
    %v1704 = vadd.f32 %v1582, %v1688
    %v1705 = vadd.f32 %v1583, %v1689
    %1706 = vset.pattern.permute.xlu0 11
    %1707 = vperm.xlu0 %1706, %v546
    %v1708 = vpop.permute.xlu0 %1707
    %1710 = vset.pattern.permute.xlu0 11
    %1711 = vperm.xlu0 %1710, %v547
    %v1712 = vpop.permute.xlu0 %1711
    %1714 = vset.pattern.permute.xlu0 11
    %1715 = vperm.xlu0 %1714, %v548
    %v1716 = vpop.permute.xlu0 %1715
    %1718 = vset.pattern.permute.xlu0 11
    %1719 = vperm.xlu0 %1718, %v549
    %v1720 = vpop.permute.xlu0 %1719
    %v1722 = vadd.f32 %v1690, %v1708
    %v1723 = vadd.f32 %v1691, %v1708
    %v1724 = vadd.f32 %v1692, %v1708
    %v1725 = vadd.f32 %v1693, %v1708
    %v1726 = vadd.f32 %v1694, %v1712
    %v1727 = vadd.f32 %v1695, %v1712
    %v1728 = vadd.f32 %v1696, %v1712
    %v1729 = vadd.f32 %v1697, %v1712
    %v1730 = vadd.f32 %v1698, %v1716
    %v1731 = vadd.f32 %v1699, %v1716
    %v1732 = vadd.f32 %v1700, %v1716
    %v1733 = vadd.f32 %v1701, %v1716
    %v1734 = vadd.f32 %v1702, %v1720
    %v1735 = vadd.f32 %v1703, %v1720
    %v1736 = vadd.f32 %v1704, %v1720
    %v1737 = vadd.f32 %v1705, %v1720
    %v1738 = vmul.f32 %v1722, %v1730
    %v1739 = vmul.f32 %v1723, %v1731
    %v1740 = vmul.f32 %v1724, %v1732
    %v1741 = vmul.f32 %v1725, %v1733
    %v1742 = vmul.f32 %v1726, %v1734
    %v1743 = vmul.f32 %v1727, %v1735
    %v1744 = vmul.f32 %v1728, %v1736
    %v1745 = vmul.f32 %v1729, %v1737
    %v1746 = vadd.f32 %v1738, %v1739
    %1747 = vadd.xlane.f32.xlu0 %v1746
    %v1748 = vpop.xlane.xlu0 %1747
    %v1749 = vadd.f32 %v1742, %v1743
    %1750 = vadd.xlane.f32.xlu0 %v1749
    %v1751 = vpop.xlane.xlu0 %1750
    %v1752 = vrcp.pop 256.0
    %v1753 = vmul.f32 256.0, %v1752
    %v1754 = vsub.f32 1.0, %v1753
    %v1755 = vmul.f32 %v1752, %v1754
    %v1756 = vadd.f32 %v1752, %v1755
    %vm1757 = vweird.f32 %v1752
    %v1758 = vsel %vm1757, %v1752, %v1756
    %v1759 = vmul.f32 %v1748, %v1758
    %v1760 = vmul.f32 %v1751, %v1758
    %v1761 = vadd.f32 %v1740, %v1741
    %1762 = vadd.xlane.f32.xlu0 %v1761
    %v1763 = vpop.xlane.xlu0 %1762
    %v1764 = vadd.f32 %v1744, %v1745
    %1765 = vadd.xlane.f32.xlu0 %v1764
    %v1766 = vpop.xlane.xlu0 %1765
    %v1767 = vmul.f32 %v1763, %v1758
    %v1768 = vmul.f32 %v1766, %v1758
    %v1769 = vld [vmem:[%s1 + $0x20] sm:$0xff]
    %v1770 = vld [vmem:[%s1 + $0x28] sm:$0xff]
    %1771 = vrot.lane.b32.xlu0 %v292, 116
    %v1772 = vpop.permute.xlu0 %1771
    %1773 = vrot.lane.b32.xlu0 %v293, 116
    %v1774 = vpop.permute.xlu0 %1773
    %v1778 = vsel %vm304, %v1769, 0
    %v1781 = vsel %vm304, %v1770, 0
    %1783 = vmatpush.msra.mxu0 0.0
    %1784 = vmatpush.msra.mxu0 0.0
    %1785 = vmatpush.msra.mxu0 0.0
    %1786 = vmatpush.msra.mxu0 0.0
    %1787 = vmatpush.msra.mxu0 0.0
    %1788 = vmatpush.msra.mxu0 0.0
    %1789 = vmatpush.msra.mxu0 0.0
    %1790 = vmatpush.msra.mxu0 0.0
    %1791 = vmatpush.msra.mxu0 0.0
    %1792 = vmatpush.msra.mxu0 0.0
    %1793 = vmatpush.msra.mxu0 0.0
    %1794 = vmatpush.msra.mxu0 0.0
    %1795 = vmatpush.msra.mxu0 0.0
    %1796 = vmatpush.msra.mxu0 0.0
    %1797 = vmatpush.msra.mxu0 %v1760
    %1798 = vmatpush.msra.mxu0 %v1759
    %1799 = vmatmul.f32.gmra.mxu0 %v1778
    %v1800 = vpop.f32.mrf.mxu0
    %v1801 = vadd.f32 %v1772, %v1800
    %1802 = vmatmul.f32.gmra.mxu0 %v1781
    %v1803 = vpop.f32.mrf.mxu0
    %v1804 = vadd.f32 %v1774, %v1803
    %1805 = vdwg.mxu0
    %1806 = vmatpush.msra.mxu0 0.0
    %1807 = vmatpush.msra.mxu0 0.0
    %1808 = vmatpush.msra.mxu0 0.0
    %1809 = vmatpush.msra.mxu0 0.0
    %1810 = vmatpush.msra.mxu0 0.0
    %1811 = vmatpush.msra.mxu0 0.0
    %1812 = vmatpush.msra.mxu0 0.0
    %1813 = vmatpush.msra.mxu0 0.0
    %1814 = vmatpush.msra.mxu0 0.0
    %1815 = vmatpush.msra.mxu0 0.0
    %1816 = vmatpush.msra.mxu0 0.0
    %1817 = vmatpush.msra.mxu0 0.0
    %1818 = vmatpush.msra.mxu0 0.0
    %1819 = vmatpush.msra.mxu0 0.0
    %1820 = vmatpush.msra.mxu0 %v1768
    %1821 = vmatpush.msra.mxu0 %v1767
    %1822 = vmatmul.f32.gmra.mxu0 %v1778
    %v1823 = vpop.f32.mrf.mxu0
    %v1824 = vadd.f32 %v1772, %v1823
    %1825 = vmatmul.f32.gmra.mxu0 %v1781
    %v1826 = vpop.f32.mrf.mxu0
    %v1827 = vadd.f32 %v1774, %v1826
    %1828 = vdwg.mxu0
    %s1829 = scalar_lea.vmem %s3, 33
    %v1830 = vld [vmem:[%s1829] ss:$8 sm:$0xf]
    %v1831 = vsub.f32 %v1801, %v1824
    %v1832 = vsub.f32 %v1804, %v1827
    %1834 = vset.pattern.permute.xlu0 0
    %1835 = vperm.xlu0 %1834, %v1831
    %v1836 = vpop.permute.xlu0 %1835
    %1839 = vset.pattern.permute.xlu0 0
    %1840 = vperm.xlu0 %1839, %v1832
    %v1841 = vpop.permute.xlu0 %1840
    %v1844 = vperm.slane %v1830, 0
    %v1845 = vperm.slane %v1830, 1
    %v1846 = vperm.slane %v1830, 2
    %v1847 = vperm.slane %v1830, 3
    %v1852 = vmul.f32 %v1836, %v1844
    %v1853 = vmul.f32 %v1836, %v1845
    %v1854 = vmul.f32 %v1836, %v1846
    %v1855 = vmul.f32 %v1836, %v1847
    %v1856 = vmul.f32 %v1841, %v1844
    %v1857 = vmul.f32 %v1841, %v1845
    %v1858 = vmul.f32 %v1841, %v1846
    %v1859 = vmul.f32 %v1841, %v1847
    %1861 = vset.pattern.permute.xlu0 0
    %1862 = vperm.xlu0 %1861, %v1824
    %v1863 = vpop.permute.xlu0 %1862
    %1866 = vset.pattern.permute.xlu0 0
    %1867 = vperm.xlu0 %1866, %v1827
    %v1868 = vpop.permute.xlu0 %1867
    %v1870 = vadd.f32 %v1863, %v1852
    %v1871 = vadd.f32 %v1863, %v1853
    %v1872 = vadd.f32 %v1863, %v1854
    %v1873 = vadd.f32 %v1863, %v1855
    %v1874 = vadd.f32 %v1868, %v1856
    %v1875 = vadd.f32 %v1868, %v1857
    %v1876 = vadd.f32 %v1868, %v1858
    %v1877 = vadd.f32 %v1868, %v1859
    %v1878 = vmul.f32 %v1738, %v1870
    %v1879 = vmul.f32 %v1739, %v1871
    %v1880 = vmul.f32 %v1740, %v1872
    %v1881 = vmul.f32 %v1741, %v1873
    %v1882 = vmul.f32 %v1742, %v1874
    %v1883 = vmul.f32 %v1743, %v1875
    %v1884 = vmul.f32 %v1744, %v1876
    %v1885 = vmul.f32 %v1745, %v1877
    %v1886 = vld [vmem:[%s1 + $0x30] sm:$0xff]
    %v1887 = vld [vmem:[%s1 + $0x38] sm:$0xff]
    %v1889 = vsel %vm304, %v1886, 0
    %v1892 = vsel %vm304, %v1887, 0
    %1894 = vmatpush.msra.mxu0 0.0
    %1895 = vmatpush.msra.mxu0 0.0
    %1896 = vmatpush.msra.mxu0 0.0
    %1897 = vmatpush.msra.mxu0 0.0
    %1898 = vmatpush.msra.mxu0 0.0
    %1899 = vmatpush.msra.mxu0 0.0
    %1900 = vmatpush.msra.mxu0 0.0
    %1901 = vmatpush.msra.mxu0 0.0
    %1902 = vmatpush.msra.mxu0 0.0
    %1903 = vmatpush.msra.mxu0 0.0
    %1904 = vmatpush.msra.mxu0 0.0
    %1905 = vmatpush.msra.mxu0 0.0
    %1906 = vmatpush.msra.mxu0 0.0
    %1907 = vmatpush.msra.mxu0 0.0
    %1908 = vmatpush.msra.mxu0 %v1882
    %1909 = vmatpush.msra.mxu0 %v1878
    %1910 = vmatmul.f32.gmra.mxu0 %v1889
    %v1911 = vpop.f32.mrf.mxu0
    %v1912 = vadd.f32 0.0, %v1911
    %1913 = vmatmul.f32.gmra.mxu0 %v1892
    %v1914 = vpop.f32.mrf.mxu0
    %v1915 = vadd.f32 0.0, %v1914
    %1916 = vdwg.mxu0
    %1917 = vmatpush.msra.mxu0 0.0
    %1918 = vmatpush.msra.mxu0 0.0
    %1919 = vmatpush.msra.mxu0 0.0
    %1920 = vmatpush.msra.mxu0 0.0
    %1921 = vmatpush.msra.mxu0 0.0
    %1922 = vmatpush.msra.mxu0 0.0
    %1923 = vmatpush.msra.mxu0 0.0
    %1924 = vmatpush.msra.mxu0 0.0
    %1925 = vmatpush.msra.mxu0 0.0
    %1926 = vmatpush.msra.mxu0 0.0
    %1927 = vmatpush.msra.mxu0 0.0
    %1928 = vmatpush.msra.mxu0 0.0
    %1929 = vmatpush.msra.mxu0 0.0
    %1930 = vmatpush.msra.mxu0 0.0
    %1931 = vmatpush.msra.mxu0 %v1883
    %1932 = vmatpush.msra.mxu0 %v1879
    %1933 = vmatmul.f32.gmra.mxu0 %v1889
    %v1934 = vpop.f32.mrf.mxu0
    %v1935 = vadd.f32 0.0, %v1934
    %1936 = vmatmul.f32.gmra.mxu0 %v1892
    %v1937 = vpop.f32.mrf.mxu0
    %v1938 = vadd.f32 0.0, %v1937
    %1939 = vdwg.mxu0
    %1940 = vmatpush.msra.mxu0 0.0
    %1941 = vmatpush.msra.mxu0 0.0
    %1942 = vmatpush.msra.mxu0 0.0
    %1943 = vmatpush.msra.mxu0 0.0
    %1944 = vmatpush.msra.mxu0 0.0
    %1945 = vmatpush.msra.mxu0 0.0
    %1946 = vmatpush.msra.mxu0 0.0
    %1947 = vmatpush.msra.mxu0 0.0
    %1948 = vmatpush.msra.mxu0 0.0
    %1949 = vmatpush.msra.mxu0 0.0
    %1950 = vmatpush.msra.mxu0 0.0
    %1951 = vmatpush.msra.mxu0 0.0
    %1952 = vmatpush.msra.mxu0 0.0
    %1953 = vmatpush.msra.mxu0 0.0
    %1954 = vmatpush.msra.mxu0 %v1884
    %1955 = vmatpush.msra.mxu0 %v1880
    %1956 = vmatmul.f32.gmra.mxu0 %v1889
    %v1957 = vpop.f32.mrf.mxu0
    %v1958 = vadd.f32 0.0, %v1957
    %1959 = vmatmul.f32.gmra.mxu0 %v1892
    %v1960 = vpop.f32.mrf.mxu0
    %v1961 = vadd.f32 0.0, %v1960
    %1962 = vdwg.mxu0
    %1963 = vmatpush.msra.mxu0 0.0
    %1964 = vmatpush.msra.mxu0 0.0
    %1965 = vmatpush.msra.mxu0 0.0
    %1966 = vmatpush.msra.mxu0 0.0
    %1967 = vmatpush.msra.mxu0 0.0
    %1968 = vmatpush.msra.mxu0 0.0
    %1969 = vmatpush.msra.mxu0 0.0
    %1970 = vmatpush.msra.mxu0 0.0
    %1971 = vmatpush.msra.mxu0 0.0
    %1972 = vmatpush.msra.mxu0 0.0
    %1973 = vmatpush.msra.mxu0 0.0
    %1974 = vmatpush.msra.mxu0 0.0
    %1975 = vmatpush.msra.mxu0 0.0
    %1976 = vmatpush.msra.mxu0 0.0
    %1977 = vmatpush.msra.mxu0 %v1885
    %1978 = vmatpush.msra.mxu0 %v1881
    %1979 = vmatmul.f32.gmra.mxu0 %v1889
    %v1980 = vpop.f32.mrf.mxu0
    %v1981 = vadd.f32 0.0, %v1980
    %1982 = vmatmul.f32.gmra.mxu0 %v1892
    %v1983 = vpop.f32.mrf.mxu0
    %v1984 = vadd.f32 0.0, %v1983
    %1985 = vdwg.mxu0
    %v1986 = vadd.f32 %v329, %v1912
    %v1987 = vadd.f32 %v352, %v1935
    %v1988 = vadd.f32 %v375, %v1958
    %v1989 = vadd.f32 %v398, %v1981
    %v1990 = vadd.f32 %v332, %v1915
    %v1991 = vadd.f32 %v355, %v1938
    %v1992 = vadd.f32 %v378, %v1961
    %v1993 = vadd.f32 %v401, %v1984
    %1994 = vset.pattern.permute.xlu0 13
    %1995 = vperm.xlu0 %1994, %v292
    %v1996 = vpop.permute.xlu0 %1995
    %1998 = vset.pattern.permute.xlu0 13
    %1999 = vperm.xlu0 %1998, %v293
    %v2000 = vpop.permute.xlu0 %1999
    %v2002 = vadd.f32 %v1986, %v1996
    %v2003 = vadd.f32 %v1987, %v1996
    %v2004 = vadd.f32 %v1988, %v1996
    %v2005 = vadd.f32 %v1989, %v1996
    %v2006 = vadd.f32 %v1990, %v2000
    %v2007 = vadd.f32 %v1991, %v2000
    %v2008 = vadd.f32 %v1992, %v2000
    %v2009 = vadd.f32 %v1993, %v2000
    %v2010 = vadd.f32 %v2002, %v2006
    %v2011 = vrot.slane %v2010, 4
    %v2012 = vadd.f32 %v2010, %v2011
    %v2013 = vrot.slane %v2012, 2
    %v2014 = vadd.f32 %v2012, %v2013
    %v2015 = vrot.slane %v2014, 1
    %v2016 = vadd.f32 %v2014, %v2015
    %v2017 = vadd.f32 %v2003, %v2007
    %v2018 = vrot.slane %v2017, 4
    %v2019 = vadd.f32 %v2017, %v2018
    %v2020 = vrot.slane %v2019, 2
    %v2021 = vadd.f32 %v2019, %v2020
    %v2022 = vrot.slane %v2021, 1
    %v2023 = vadd.f32 %v2021, %v2022
    %v2024 = vadd.f32 %v2004, %v2008
    %v2025 = vrot.slane %v2024, 4
    %v2026 = vadd.f32 %v2024, %v2025
    %v2027 = vrot.slane %v2026, 2
    %v2028 = vadd.f32 %v2026, %v2027
    %v2029 = vrot.slane %v2028, 1
    %v2030 = vadd.f32 %v2028, %v2029
    %v2031 = vadd.f32 %v2005, %v2009
    %v2032 = vrot.slane %v2031, 4
    %v2033 = vadd.f32 %v2031, %v2032
    %v2034 = vrot.slane %v2033, 2
    %v2035 = vadd.f32 %v2033, %v2034
    %v2036 = vrot.slane %v2035, 1
    %v2037 = vadd.f32 %v2035, %v2036
    %v2038 = vmul.f32 %v2016, %v437
    %v2039 = vmul.f32 %v2023, %v437
    %v2040 = vmul.f32 %v2030, %v437
    %v2041 = vmul.f32 %v2037, %v437
    %v2042 = vsub.f32 %v2002, %v2038
    %v2043 = vsub.f32 %v2003, %v2039
    %v2044 = vsub.f32 %v2004, %v2040
    %v2045 = vsub.f32 %v2005, %v2041
    %v2046 = vsub.f32 %v2006, %v2038
    %v2047 = vsub.f32 %v2007, %v2039
    %v2048 = vsub.f32 %v2008, %v2040
    %v2049 = vsub.f32 %v2009, %v2041
    %v2050 = vmul.f32 %v2042, %v2042
    %v2051 = vmul.f32 %v2043, %v2043
    %v2052 = vmul.f32 %v2044, %v2044
    %v2053 = vmul.f32 %v2045, %v2045
    %v2054 = vmul.f32 %v2046, %v2046
    %v2055 = vmul.f32 %v2047, %v2047
    %v2056 = vmul.f32 %v2048, %v2048
    %v2057 = vmul.f32 %v2049, %v2049
    %v2058 = vadd.f32 %v2050, %v2054
    %v2059 = vrot.slane %v2058, 4
    %v2060 = vadd.f32 %v2058, %v2059
    %v2061 = vrot.slane %v2060, 2
    %v2062 = vadd.f32 %v2060, %v2061
    %v2063 = vrot.slane %v2062, 1
    %v2064 = vadd.f32 %v2062, %v2063
    %v2065 = vadd.f32 %v2051, %v2055
    %v2066 = vrot.slane %v2065, 4
    %v2067 = vadd.f32 %v2065, %v2066
    %v2068 = vrot.slane %v2067, 2
    %v2069 = vadd.f32 %v2067, %v2068
    %v2070 = vrot.slane %v2069, 1
    %v2071 = vadd.f32 %v2069, %v2070
    %v2072 = vadd.f32 %v2052, %v2056
    %v2073 = vrot.slane %v2072, 4
    %v2074 = vadd.f32 %v2072, %v2073
    %v2075 = vrot.slane %v2074, 2
    %v2076 = vadd.f32 %v2074, %v2075
    %v2077 = vrot.slane %v2076, 1
    %v2078 = vadd.f32 %v2076, %v2077
    %v2079 = vadd.f32 %v2053, %v2057
    %v2080 = vrot.slane %v2079, 4
    %v2081 = vadd.f32 %v2079, %v2080
    %v2082 = vrot.slane %v2081, 2
    %v2083 = vadd.f32 %v2081, %v2082
    %v2084 = vrot.slane %v2083, 1
    %v2085 = vadd.f32 %v2083, %v2084
    %v2086 = vmul.f32 %v2064, %v437
    %v2087 = vmul.f32 %v2071, %v437
    %v2088 = vmul.f32 %v2078, %v437
    %v2089 = vmul.f32 %v2085, %v437
    %v2090 = vadd.f32 %v2086, 1e-06
    %v2091 = vadd.f32 %v2087, 1e-06
    %v2092 = vadd.f32 %v2088, 1e-06
    %v2093 = vadd.f32 %v2089, 1e-06
    %v2094 = vrsqrt.pop %v2090
    %v2095 = vmul.f32 %v2094, %v2090
    %v2096 = vmul.f32 %v2095, %v2094
    %v2097 = vmul.f32 0.5, %v2096
    %v2098 = vsub.f32 1.5, %v2097
    %v2099 = vmul.f32 %v2094, %v2098
    %vm2100 = vweird.f32 %v2090
    %vm2101 = vweird.f32 %v2094
    %vm2102 = vmor %vm2100, %vm2101
    %v2103 = vsel %vm2102, %v2094, %v2099
    %v2104 = vrsqrt.pop %v2091
    %v2105 = vmul.f32 %v2104, %v2091
    %v2106 = vmul.f32 %v2105, %v2104
    %v2107 = vmul.f32 0.5, %v2106
    %v2108 = vsub.f32 1.5, %v2107
    %v2109 = vmul.f32 %v2104, %v2108
    %vm2110 = vweird.f32 %v2091
    %vm2111 = vweird.f32 %v2104
    %vm2112 = vmor %vm2110, %vm2111
    %v2113 = vsel %vm2112, %v2104, %v2109
    %v2114 = vrsqrt.pop %v2092
    %v2115 = vmul.f32 %v2114, %v2092
    %v2116 = vmul.f32 %v2115, %v2114
    %v2117 = vmul.f32 0.5, %v2116
    %v2118 = vsub.f32 1.5, %v2117
    %v2119 = vmul.f32 %v2114, %v2118
    %vm2120 = vweird.f32 %v2092
    %vm2121 = vweird.f32 %v2114
    %vm2122 = vmor %vm2120, %vm2121
    %v2123 = vsel %vm2122, %v2114, %v2119
    %v2124 = vrsqrt.pop %v2093
    %v2125 = vmul.f32 %v2124, %v2093
    %v2126 = vmul.f32 %v2125, %v2124
    %v2127 = vmul.f32 0.5, %v2126
    %v2128 = vsub.f32 1.5, %v2127
    %v2129 = vmul.f32 %v2124, %v2128
    %vm2130 = vweird.f32 %v2093
    %vm2131 = vweird.f32 %v2124
    %vm2132 = vmor %vm2130, %vm2131
    %v2133 = vsel %vm2132, %v2124, %v2129
    %v2134 = vmul.f32 %v2042, %v2103
    %v2135 = vmul.f32 %v2043, %v2113
    %v2136 = vmul.f32 %v2044, %v2123
    %v2137 = vmul.f32 %v2045, %v2133
    %v2138 = vmul.f32 %v2046, %v2103
    %v2139 = vmul.f32 %v2047, %v2113
    %v2140 = vmul.f32 %v2048, %v2123
    %v2141 = vmul.f32 %v2049, %v2133
    %v2142 = vld [vmem:[%s1 + $0x40] sm:$0xff]
    %v2143 = vld [vmem:[%s1 + $0x48] sm:$0xff]
    %v2144 = vld [vmem:[%s1 + $0x50] sm:$0xff]
    %v2145 = vld [vmem:[%s1 + $0x58] sm:$0xff]
    %2146 = vset.pattern.permute.xlu0 14
    %2147 = vperm.xlu0 %2146, %v546
    %v2148 = vpop.permute.xlu0 %2147
    %2150 = vset.pattern.permute.xlu0 14
    %2151 = vperm.xlu0 %2150, %v547
    %v2152 = vpop.permute.xlu0 %2151
    %2154 = vset.pattern.permute.xlu0 14
    %2155 = vperm.xlu0 %2154, %v548
    %v2156 = vpop.permute.xlu0 %2155
    %2158 = vset.pattern.permute.xlu0 14
    %2159 = vperm.xlu0 %2158, %v549
    %v2160 = vpop.permute.xlu0 %2159
    %v2163 = vsel %vm304, %v2142, 0
    %v2166 = vsel %vm304, %v2143, 0
    %v2169 = vsel %vm304, %v2144, 0
    %v2172 = vsel %vm304, %v2145, 0
    %2174 = vmatpush.msra.mxu0 0.0
    %2175 = vmatpush.msra.mxu0 0.0
    %2176 = vmatpush.msra.mxu0 0.0
    %2177 = vmatpush.msra.mxu0 0.0
    %2178 = vmatpush.msra.mxu0 0.0
    %2179 = vmatpush.msra.mxu0 0.0
    %2180 = vmatpush.msra.mxu0 0.0
    %2181 = vmatpush.msra.mxu0 0.0
    %2182 = vmatpush.msra.mxu0 0.0
    %2183 = vmatpush.msra.mxu0 0.0
    %2184 = vmatpush.msra.mxu0 0.0
    %2185 = vmatpush.msra.mxu0 0.0
    %2186 = vmatpush.msra.mxu0 0.0
    %2187 = vmatpush.msra.mxu0 0.0
    %2188 = vmatpush.msra.mxu0 %v2138
    %2189 = vmatpush.msra.mxu0 %v2134
    %2190 = vmatmul.f32.gmra.mxu0 %v2163
    %v2191 = vpop.f32.mrf.mxu0
    %v2192 = vadd.f32 %v2148, %v2191
    %2193 = vmatmul.f32.gmra.mxu0 %v2166
    %v2194 = vpop.f32.mrf.mxu0
    %v2195 = vadd.f32 %v2152, %v2194
    %2196 = vmatmul.f32.gmra.mxu0 %v2169
    %v2197 = vpop.f32.mrf.mxu0
    %v2198 = vadd.f32 %v2156, %v2197
    %2199 = vmatmul.f32.gmra.mxu0 %v2172
    %v2200 = vpop.f32.mrf.mxu0
    %v2201 = vadd.f32 %v2160, %v2200
    %2202 = vdwg.mxu0
    %2203 = vmatpush.msra.mxu0 0.0
    %2204 = vmatpush.msra.mxu0 0.0
    %2205 = vmatpush.msra.mxu0 0.0
    %2206 = vmatpush.msra.mxu0 0.0
    %2207 = vmatpush.msra.mxu0 0.0
    %2208 = vmatpush.msra.mxu0 0.0
    %2209 = vmatpush.msra.mxu0 0.0
    %2210 = vmatpush.msra.mxu0 0.0
    %2211 = vmatpush.msra.mxu0 0.0
    %2212 = vmatpush.msra.mxu0 0.0
    %2213 = vmatpush.msra.mxu0 0.0
    %2214 = vmatpush.msra.mxu0 0.0
    %2215 = vmatpush.msra.mxu0 0.0
    %2216 = vmatpush.msra.mxu0 0.0
    %2217 = vmatpush.msra.mxu0 %v2139
    %2218 = vmatpush.msra.mxu0 %v2135
    %2219 = vmatmul.f32.gmra.mxu0 %v2163
    %v2220 = vpop.f32.mrf.mxu0
    %v2221 = vadd.f32 %v2148, %v2220
    %2222 = vmatmul.f32.gmra.mxu0 %v2166
    %v2223 = vpop.f32.mrf.mxu0
    %v2224 = vadd.f32 %v2152, %v2223
    %2225 = vmatmul.f32.gmra.mxu0 %v2169
    %v2226 = vpop.f32.mrf.mxu0
    %v2227 = vadd.f32 %v2156, %v2226
    %2228 = vmatmul.f32.gmra.mxu0 %v2172
    %v2229 = vpop.f32.mrf.mxu0
    %v2230 = vadd.f32 %v2160, %v2229
    %2231 = vdwg.mxu0
    %2232 = vmatpush.msra.mxu0 0.0
    %2233 = vmatpush.msra.mxu0 0.0
    %2234 = vmatpush.msra.mxu0 0.0
    %2235 = vmatpush.msra.mxu0 0.0
    %2236 = vmatpush.msra.mxu0 0.0
    %2237 = vmatpush.msra.mxu0 0.0
    %2238 = vmatpush.msra.mxu0 0.0
    %2239 = vmatpush.msra.mxu0 0.0
    %2240 = vmatpush.msra.mxu0 0.0
    %2241 = vmatpush.msra.mxu0 0.0
    %2242 = vmatpush.msra.mxu0 0.0
    %2243 = vmatpush.msra.mxu0 0.0
    %2244 = vmatpush.msra.mxu0 0.0
    %2245 = vmatpush.msra.mxu0 0.0
    %2246 = vmatpush.msra.mxu0 %v2140
    %2247 = vmatpush.msra.mxu0 %v2136
    %2248 = vmatmul.f32.gmra.mxu0 %v2163
    %v2249 = vpop.f32.mrf.mxu0
    %v2250 = vadd.f32 %v2148, %v2249
    %2251 = vmatmul.f32.gmra.mxu0 %v2166
    %v2252 = vpop.f32.mrf.mxu0
    %v2253 = vadd.f32 %v2152, %v2252
    %2254 = vmatmul.f32.gmra.mxu0 %v2169
    %v2255 = vpop.f32.mrf.mxu0
    %v2256 = vadd.f32 %v2156, %v2255
    %2257 = vmatmul.f32.gmra.mxu0 %v2172
    %v2258 = vpop.f32.mrf.mxu0
    %v2259 = vadd.f32 %v2160, %v2258
    %2260 = vdwg.mxu0
    %2261 = vmatpush.msra.mxu0 0.0
    %2262 = vmatpush.msra.mxu0 0.0
    %2263 = vmatpush.msra.mxu0 0.0
    %2264 = vmatpush.msra.mxu0 0.0
    %2265 = vmatpush.msra.mxu0 0.0
    %2266 = vmatpush.msra.mxu0 0.0
    %2267 = vmatpush.msra.mxu0 0.0
    %2268 = vmatpush.msra.mxu0 0.0
    %2269 = vmatpush.msra.mxu0 0.0
    %2270 = vmatpush.msra.mxu0 0.0
    %2271 = vmatpush.msra.mxu0 0.0
    %2272 = vmatpush.msra.mxu0 0.0
    %2273 = vmatpush.msra.mxu0 0.0
    %2274 = vmatpush.msra.mxu0 0.0
    %2275 = vmatpush.msra.mxu0 %v2141
    %2276 = vmatpush.msra.mxu0 %v2137
    %2277 = vmatmul.f32.gmra.mxu0 %v2163
    %v2278 = vpop.f32.mrf.mxu0
    %v2279 = vadd.f32 %v2148, %v2278
    %2280 = vmatmul.f32.gmra.mxu0 %v2166
    %v2281 = vpop.f32.mrf.mxu0
    %v2282 = vadd.f32 %v2152, %v2281
    %2283 = vmatmul.f32.gmra.mxu0 %v2169
    %v2284 = vpop.f32.mrf.mxu0
    %v2285 = vadd.f32 %v2156, %v2284
    %2286 = vmatmul.f32.gmra.mxu0 %v2172
    %v2287 = vpop.f32.mrf.mxu0
    %v2288 = vadd.f32 %v2160, %v2287
    %2289 = vdwg.mxu0
    %v2290 = vmul.f32 %v2192, %v2198
    %v2291 = vmul.f32 %v2221, %v2227
    %v2292 = vmul.f32 %v2250, %v2256
    %v2293 = vmul.f32 %v2279, %v2285
    %v2294 = vmul.f32 %v2195, %v2201
    %v2295 = vmul.f32 %v2224, %v2230
    %v2296 = vmul.f32 %v2253, %v2259
    %v2297 = vmul.f32 %v2282, %v2288
    %v2298 = vld [vmem:[%s1 + $0x60] sm:$0xff]
    %v2299 = vld [vmem:[%s1 + $0x68] sm:$0xff]
    %v2301 = vsel %vm304, %v2298, 0
    %v2304 = vsel %vm304, %v2299, 0
    %2306 = vmatpush.msra.mxu0 0.0
    %2307 = vmatpush.msra.mxu0 0.0
    %2308 = vmatpush.msra.mxu0 0.0
    %2309 = vmatpush.msra.mxu0 0.0
    %2310 = vmatpush.msra.mxu0 0.0
    %2311 = vmatpush.msra.mxu0 0.0
    %2312 = vmatpush.msra.mxu0 0.0
    %2313 = vmatpush.msra.mxu0 0.0
    %2314 = vmatpush.msra.mxu0 0.0
    %2315 = vmatpush.msra.mxu0 0.0
    %2316 = vmatpush.msra.mxu0 0.0
    %2317 = vmatpush.msra.mxu0 0.0
    %2318 = vmatpush.msra.mxu0 0.0
    %2319 = vmatpush.msra.mxu0 0.0
    %2320 = vmatpush.msra.mxu0 %v2294
    %2321 = vmatpush.msra.mxu0 %v2290
    %2322 = vmatmul.f32.gmra.mxu0 %v2301
    %v2323 = vpop.f32.mrf.mxu0
    %v2324 = vadd.f32 0.0, %v2323
    %2325 = vmatmul.f32.gmra.mxu0 %v2304
    %v2326 = vpop.f32.mrf.mxu0
    %v2327 = vadd.f32 0.0, %v2326
    %2328 = vdwg.mxu0
    %2329 = vmatpush.msra.mxu0 0.0
    %2330 = vmatpush.msra.mxu0 0.0
    %2331 = vmatpush.msra.mxu0 0.0
    %2332 = vmatpush.msra.mxu0 0.0
    %2333 = vmatpush.msra.mxu0 0.0
    %2334 = vmatpush.msra.mxu0 0.0
    %2335 = vmatpush.msra.mxu0 0.0
    %2336 = vmatpush.msra.mxu0 0.0
    %2337 = vmatpush.msra.mxu0 0.0
    %2338 = vmatpush.msra.mxu0 0.0
    %2339 = vmatpush.msra.mxu0 0.0
    %2340 = vmatpush.msra.mxu0 0.0
    %2341 = vmatpush.msra.mxu0 0.0
    %2342 = vmatpush.msra.mxu0 0.0
    %2343 = vmatpush.msra.mxu0 %v2295
    %2344 = vmatpush.msra.mxu0 %v2291
    %2345 = vmatmul.f32.gmra.mxu0 %v2301
    %v2346 = vpop.f32.mrf.mxu0
    %v2347 = vadd.f32 0.0, %v2346
    %2348 = vmatmul.f32.gmra.mxu0 %v2304
    %v2349 = vpop.f32.mrf.mxu0
    %v2350 = vadd.f32 0.0, %v2349
    %2351 = vdwg.mxu0
    %2352 = vmatpush.msra.mxu0 0.0
    %2353 = vmatpush.msra.mxu0 0.0
    %2354 = vmatpush.msra.mxu0 0.0
    %2355 = vmatpush.msra.mxu0 0.0
    %2356 = vmatpush.msra.mxu0 0.0
    %2357 = vmatpush.msra.mxu0 0.0
    %2358 = vmatpush.msra.mxu0 0.0
    %2359 = vmatpush.msra.mxu0 0.0
    %2360 = vmatpush.msra.mxu0 0.0
    %2361 = vmatpush.msra.mxu0 0.0
    %2362 = vmatpush.msra.mxu0 0.0
    %2363 = vmatpush.msra.mxu0 0.0
    %2364 = vmatpush.msra.mxu0 0.0
    %2365 = vmatpush.msra.mxu0 0.0
    %2366 = vmatpush.msra.mxu0 %v2296
    %2367 = vmatpush.msra.mxu0 %v2292
    %2368 = vmatmul.f32.gmra.mxu0 %v2301
    %v2369 = vpop.f32.mrf.mxu0
    %v2370 = vadd.f32 0.0, %v2369
    %2371 = vmatmul.f32.gmra.mxu0 %v2304
    %v2372 = vpop.f32.mrf.mxu0
    %v2373 = vadd.f32 0.0, %v2372
    %2374 = vdwg.mxu0
    %2375 = vmatpush.msra.mxu0 0.0
    %2376 = vmatpush.msra.mxu0 0.0
    %2377 = vmatpush.msra.mxu0 0.0
    %2378 = vmatpush.msra.mxu0 0.0
    %2379 = vmatpush.msra.mxu0 0.0
    %2380 = vmatpush.msra.mxu0 0.0
    %2381 = vmatpush.msra.mxu0 0.0
    %2382 = vmatpush.msra.mxu0 0.0
    %2383 = vmatpush.msra.mxu0 0.0
    %2384 = vmatpush.msra.mxu0 0.0
    %2385 = vmatpush.msra.mxu0 0.0
    %2386 = vmatpush.msra.mxu0 0.0
    %2387 = vmatpush.msra.mxu0 0.0
    %2388 = vmatpush.msra.mxu0 0.0
    %2389 = vmatpush.msra.mxu0 %v2297
    %2390 = vmatpush.msra.mxu0 %v2293
    %2391 = vmatmul.f32.gmra.mxu0 %v2301
    %v2392 = vpop.f32.mrf.mxu0
    %v2393 = vadd.f32 0.0, %v2392
    %2394 = vmatmul.f32.gmra.mxu0 %v2304
    %v2395 = vpop.f32.mrf.mxu0
    %v2396 = vadd.f32 0.0, %v2395
    %2397 = vdwg.mxu0
    %v2398 = vadd.f32 %v2002, %v2324
    %v2399 = vadd.f32 %v2003, %v2347
    %v2400 = vadd.f32 %v2004, %v2370
    %v2401 = vadd.f32 %v2005, %v2393
    %v2402 = vadd.f32 %v2006, %v2327
    %v2403 = vadd.f32 %v2007, %v2350
    %v2404 = vadd.f32 %v2008, %v2373
    %v2405 = vadd.f32 %v2009, %v2396
    %2406 = vset.pattern.permute.xlu0 15
    %2407 = vperm.xlu0 %2406, %v292
    %v2408 = vpop.permute.xlu0 %2407
    %2410 = vset.pattern.permute.xlu0 15
    %2411 = vperm.xlu0 %2410, %v293
    %v2412 = vpop.permute.xlu0 %2411
    %v2414 = vadd.f32 %v2398, %v2408
    %v2415 = vadd.f32 %v2399, %v2408
    %v2416 = vadd.f32 %v2400, %v2408
    %v2417 = vadd.f32 %v2401, %v2408
    %v2418 = vadd.f32 %v2402, %v2412
    %v2419 = vadd.f32 %v2403, %v2412
    %v2420 = vadd.f32 %v2404, %v2412
    %v2421 = vadd.f32 %v2405, %v2412
    %v2422 = vld [vmem:[%s1 + $0x80] sm:$0xff]
    %v2423 = vld [vmem:[%s1 + $0x88] sm:$0x1]
    %v2425 = vsel %vm304, %v2422, 0
    %v2428 = vsel %vm304, %v2423, 0
    %2430 = vmatpush.msra.mxu0 0.0
    %2431 = vmatpush.msra.mxu0 0.0
    %2432 = vmatpush.msra.mxu0 0.0
    %2433 = vmatpush.msra.mxu0 0.0
    %2434 = vmatpush.msra.mxu0 0.0
    %2435 = vmatpush.msra.mxu0 0.0
    %2436 = vmatpush.msra.mxu0 0.0
    %2437 = vmatpush.msra.mxu0 0.0
    %2438 = vmatpush.msra.mxu0 0.0
    %2439 = vmatpush.msra.mxu0 0.0
    %2440 = vmatpush.msra.mxu0 0.0
    %2441 = vmatpush.msra.mxu0 0.0
    %2442 = vmatpush.msra.mxu0 0.0
    %2443 = vmatpush.msra.mxu0 0.0
    %2444 = vmatpush.msra.mxu0 %v2418
    %2445 = vmatpush.msra.mxu0 %v2414
    %2446 = vmatmul.f32.gmra.mxu0 %v2425
    %v2447 = vpop.f32.mrf.mxu0
    %v2448 = vadd.f32 0.0, %v2447
    %2449 = vmatmul.f32.gmra.mxu0 %v2428
    %v2450 = vpop.f32.mrf.mxu0
    %v2451 = vadd.f32 0.0, %v2450
    %2452 = vdwg.mxu0
    %2453 = vmatpush.msra.mxu0 0.0
    %2454 = vmatpush.msra.mxu0 0.0
    %2455 = vmatpush.msra.mxu0 0.0
    %2456 = vmatpush.msra.mxu0 0.0
    %2457 = vmatpush.msra.mxu0 0.0
    %2458 = vmatpush.msra.mxu0 0.0
    %2459 = vmatpush.msra.mxu0 0.0
    %2460 = vmatpush.msra.mxu0 0.0
    %2461 = vmatpush.msra.mxu0 0.0
    %2462 = vmatpush.msra.mxu0 0.0
    %2463 = vmatpush.msra.mxu0 0.0
    %2464 = vmatpush.msra.mxu0 0.0
    %2465 = vmatpush.msra.mxu0 0.0
    %2466 = vmatpush.msra.mxu0 0.0
    %2467 = vmatpush.msra.mxu0 %v2419
    %2468 = vmatpush.msra.mxu0 %v2415
    %2469 = vmatmul.f32.gmra.mxu0 %v2425
    %v2470 = vpop.f32.mrf.mxu0
    %v2471 = vadd.f32 0.0, %v2470
    %2472 = vmatmul.f32.gmra.mxu0 %v2428
    %v2473 = vpop.f32.mrf.mxu0
    %v2474 = vadd.f32 0.0, %v2473
    %2475 = vdwg.mxu0
    %2476 = vmatpush.msra.mxu0 0.0
    %2477 = vmatpush.msra.mxu0 0.0
    %2478 = vmatpush.msra.mxu0 0.0
    %2479 = vmatpush.msra.mxu0 0.0
    %2480 = vmatpush.msra.mxu0 0.0
    %2481 = vmatpush.msra.mxu0 0.0
    %2482 = vmatpush.msra.mxu0 0.0
    %2483 = vmatpush.msra.mxu0 0.0
    %2484 = vmatpush.msra.mxu0 0.0
    %2485 = vmatpush.msra.mxu0 0.0
    %2486 = vmatpush.msra.mxu0 0.0
    %2487 = vmatpush.msra.mxu0 0.0
    %2488 = vmatpush.msra.mxu0 0.0
    %2489 = vmatpush.msra.mxu0 0.0
    %2490 = vmatpush.msra.mxu0 %v2420
    %2491 = vmatpush.msra.mxu0 %v2416
    %2492 = vmatmul.f32.gmra.mxu0 %v2425
    %v2493 = vpop.f32.mrf.mxu0
    %v2494 = vadd.f32 0.0, %v2493
    %2495 = vmatmul.f32.gmra.mxu0 %v2428
    %v2496 = vpop.f32.mrf.mxu0
    %v2497 = vadd.f32 0.0, %v2496
    %2498 = vdwg.mxu0
    %2499 = vmatpush.msra.mxu0 0.0
    %2500 = vmatpush.msra.mxu0 0.0
    %2501 = vmatpush.msra.mxu0 0.0
    %2502 = vmatpush.msra.mxu0 0.0
    %2503 = vmatpush.msra.mxu0 0.0
    %2504 = vmatpush.msra.mxu0 0.0
    %2505 = vmatpush.msra.mxu0 0.0
    %2506 = vmatpush.msra.mxu0 0.0
    %2507 = vmatpush.msra.mxu0 0.0
    %2508 = vmatpush.msra.mxu0 0.0
    %2509 = vmatpush.msra.mxu0 0.0
    %2510 = vmatpush.msra.mxu0 0.0
    %2511 = vmatpush.msra.mxu0 0.0
    %2512 = vmatpush.msra.mxu0 0.0
    %2513 = vmatpush.msra.mxu0 %v2421
    %2514 = vmatpush.msra.mxu0 %v2417
    %2515 = vmatmul.f32.gmra.mxu0 %v2425
    %v2516 = vpop.f32.mrf.mxu0
    %v2517 = vadd.f32 0.0, %v2516
    %2518 = vmatmul.f32.gmra.mxu0 %v2428
    %v2519 = vpop.f32.mrf.mxu0
    %v2520 = vadd.f32 0.0, %v2519
    %2521 = vdwg.mxu0
    %v2522 = vld [vmem:[%s2] sm:$0x1]
    %2524 = vset.pattern.permute.xlu0 16
    %2525 = vperm.xlu0 %2524, %v2522
    %v2526 = vpop.permute.xlu0 %2525
    %v2527 = vperm.slane %v2526, 0
    %v2529 = vadd.f32 %v18, %v2527
    %2530 = vrot.lane.b32.xlu0 %v2448, 17
    %v2531 = vpop.permute.xlu0 %2530
    %2532 = vrot.lane.b32.xlu0 %v2471, 17
    %v2533 = vpop.permute.xlu0 %2532
    %2534 = vrot.lane.b32.xlu0 %v2494, 17
    %v2535 = vpop.permute.xlu0 %2534
    %2536 = vrot.lane.b32.xlu0 %v2517, 17
    %v2537 = vpop.permute.xlu0 %2536
    %v2538 = vsel %vm43, %v2535, %v2537
    %v2539 = vsel %vm43, %v2533, %v2535
    %v2540 = vsel %vm43, %v2531, %v2533
    %v2541 = vsel %vm43, %v2537, %v2531
    %v2546 = vrot.slane %v2540, 7
    %v2547 = vrot.slane %v2539, 6
    %v2548 = vrot.slane %v2538, 5
    %v2549 = vsel %vm55, %v2541, %v2546
    %v2550 = vsel %vm57, %v2547, %v2548
    %v2551 = vsel %vm59, %v2549, %v2550
    %v2553 = vmul.f32 %v730, %v2551
    %v2554 = vadd.f32 %v2529, %v2553
    %v2559 = vrot.slane %v2448, 1
    %v2560 = vrot.slane %v2471, 1
    %v2561 = vrot.slane %v2494, 1
    %v2562 = vrot.slane %v2517, 1
    %2567 = vrot.lane.b32.xlu0 %v2559, 16
    %v2568 = vpop.permute.xlu0 %2567
    %2569 = vrot.lane.b32.xlu0 %v2560, 16
    %v2570 = vpop.permute.xlu0 %2569
    %2571 = vrot.lane.b32.xlu0 %v2561, 16
    %v2572 = vpop.permute.xlu0 %2571
    %2573 = vrot.lane.b32.xlu0 %v2562, 16
    %v2574 = vpop.permute.xlu0 %2573
    %v2575 = vsel %vm79, %v2572, %v2574
    %v2576 = vsel %vm79, %v2570, %v2572
    %v2577 = vsel %vm79, %v2568, %v2570
    %v2578 = vsel %vm79, %v2574, %v2568
    %v2583 = vrot.slane %v2577, 7
    %v2584 = vrot.slane %v2576, 6
    %v2585 = vrot.slane %v2575, 5
    %v2586 = vsel %vm55, %v2578, %v2583
    %v2587 = vsel %vm57, %v2584, %v2585
    %v2588 = vsel %vm59, %v2586, %v2587
    %v2590 = vmul.f32 %v852, %v2588
    %v2591 = vadd.f32 %v2554, %v2590
    %v2592 = vrot.slane %v2448, 2
    %v2593 = vrot.slane %v2471, 2
    %v2594 = vrot.slane %v2494, 2
    %v2595 = vrot.slane %v2517, 2
    %2600 = vrot.lane.b32.xlu0 %v2592, 15
    %v2601 = vpop.permute.xlu0 %2600
    %2602 = vrot.lane.b32.xlu0 %v2593, 15
    %v2603 = vpop.permute.xlu0 %2602
    %2604 = vrot.lane.b32.xlu0 %v2594, 15
    %v2605 = vpop.permute.xlu0 %2604
    %2606 = vrot.lane.b32.xlu0 %v2595, 15
    %v2607 = vpop.permute.xlu0 %2606
    %v2608 = vsel %vm109, %v2605, %v2607
    %v2609 = vsel %vm109, %v2603, %v2605
    %v2610 = vsel %vm109, %v2601, %v2603
    %v2611 = vsel %vm109, %v2607, %v2601
    %v2616 = vrot.slane %v2610, 7
    %v2617 = vrot.slane %v2609, 6
    %v2618 = vrot.slane %v2608, 5
    %v2619 = vsel %vm55, %v2611, %v2616
    %v2620 = vsel %vm57, %v2617, %v2618
    %v2621 = vsel %vm59, %v2619, %v2620
    %v2623 = vmul.f32 %v974, %v2621
    %v2624 = vadd.f32 %v2591, %v2623
    %v2625 = vrot.slane %v2448, 3
    %v2626 = vrot.slane %v2471, 3
    %v2627 = vrot.slane %v2494, 3
    %v2628 = vrot.slane %v2517, 3
    %2633 = vrot.lane.b32.xlu0 %v2625, 1
    %v2634 = vpop.permute.xlu0 %2633
    %2635 = vrot.lane.b32.xlu0 %v2626, 1
    %v2636 = vpop.permute.xlu0 %2635
    %2637 = vrot.lane.b32.xlu0 %v2627, 1
    %v2638 = vpop.permute.xlu0 %2637
    %2639 = vrot.lane.b32.xlu0 %v2628, 1
    %v2640 = vpop.permute.xlu0 %2639
    %v2641 = vsel %vm139, %v2638, %v2640
    %v2642 = vsel %vm139, %v2636, %v2638
    %v2643 = vsel %vm139, %v2634, %v2636
    %v2644 = vsel %vm139, %v2640, %v2634
    %v2649 = vrot.slane %v2643, 7
    %v2650 = vrot.slane %v2642, 6
    %v2651 = vrot.slane %v2641, 5
    %v2652 = vsel %vm55, %v2644, %v2649
    %v2653 = vsel %vm57, %v2650, %v2651
    %v2654 = vsel %vm59, %v2652, %v2653
    %v2656 = vmul.f32 %v1096, %v2654
    %v2657 = vadd.f32 %v2624, %v2656
    %2658 = vst [vmem:[#allocation1] sm:$0xff] %v2448
    %2659 = vst [vmem:[#allocation1 + $0x9] sm:$0xff] %v2471
    %2660 = vst [vmem:[#allocation1 + $0x12] sm:$0xff] %v2494
    %2661 = vst [vmem:[#allocation1 + $0x1b] sm:$0xff] %v2517
    %s2662 = scalar_lea.vmem [#allocation1], 4
    %v2663 = vld [vmem:[%s2662] ss:$9 sm:$0xff]
    %v2665 = vadd.f32 %v2657, %v2663
    %v2666 = vrot.slane %v2448, 5
    %v2667 = vrot.slane %v2471, 5
    %v2668 = vrot.slane %v2494, 5
    %v2669 = vrot.slane %v2517, 5
    %2674 = vrot.lane.b32.xlu0 %v2666, 127
    %v2675 = vpop.permute.xlu0 %2674
    %2676 = vrot.lane.b32.xlu0 %v2667, 127
    %v2677 = vpop.permute.xlu0 %2676
    %2678 = vrot.lane.b32.xlu0 %v2668, 127
    %v2679 = vpop.permute.xlu0 %2678
    %2680 = vrot.lane.b32.xlu0 %v2669, 127
    %v2681 = vpop.permute.xlu0 %2680
    %v2682 = vsel %vm172, %v2679, %v2681
    %v2683 = vsel %vm172, %v2677, %v2679
    %v2684 = vsel %vm172, %v2675, %v2677
    %v2685 = vsel %vm172, %v2681, %v2675
    %v2690 = vrot.slane %v2683, 7
    %v2691 = vrot.slane %v2682, 6
    %v2692 = vrot.slane %v2685, 5
    %v2693 = vsel %vm55, %v2684, %v2690
    %v2694 = vsel %vm57, %v2691, %v2692
    %v2695 = vsel %vm59, %v2693, %v2694
    %v2697 = vmul.f32 %v1218, %v2695
    %v2698 = vadd.f32 %v2665, %v2697
    %v2699 = vrot.slane %v2448, 6
    %v2700 = vrot.slane %v2471, 6
    %v2701 = vrot.slane %v2494, 6
    %v2702 = vrot.slane %v2517, 6
    %2707 = vrot.lane.b32.xlu0 %v2699, 113
    %v2708 = vpop.permute.xlu0 %2707
    %2709 = vrot.lane.b32.xlu0 %v2700, 113
    %v2710 = vpop.permute.xlu0 %2709
    %2711 = vrot.lane.b32.xlu0 %v2701, 113
    %v2712 = vpop.permute.xlu0 %2711
    %2713 = vrot.lane.b32.xlu0 %v2702, 113
    %v2714 = vpop.permute.xlu0 %2713
    %v2715 = vsel %vm202, %v2712, %v2714
    %v2716 = vsel %vm202, %v2710, %v2712
    %v2717 = vsel %vm202, %v2708, %v2710
    %v2718 = vsel %vm202, %v2714, %v2708
    %v2723 = vrot.slane %v2716, 7
    %v2724 = vrot.slane %v2715, 6
    %v2725 = vrot.slane %v2718, 5
    %v2726 = vsel %vm55, %v2717, %v2723
    %v2727 = vsel %vm57, %v2724, %v2725
    %v2728 = vsel %vm59, %v2726, %v2727
    %v2730 = vmul.f32 %v1340, %v2728
    %v2731 = vadd.f32 %v2698, %v2730
    %v2732 = vrot.slane %v2448, 7
    %v2733 = vrot.slane %v2471, 7
    %v2734 = vrot.slane %v2494, 7
    %v2735 = vrot.slane %v2517, 7
    %2740 = vrot.lane.b32.xlu0 %v2732, 112
    %v2741 = vpop.permute.xlu0 %2740
    %2742 = vrot.lane.b32.xlu0 %v2733, 112
    %v2743 = vpop.permute.xlu0 %2742
    %2744 = vrot.lane.b32.xlu0 %v2734, 112
    %v2745 = vpop.permute.xlu0 %2744
    %2746 = vrot.lane.b32.xlu0 %v2735, 112
    %v2747 = vpop.permute.xlu0 %2746
    %v2748 = vsel %vm232, %v2745, %v2747
    %v2749 = vsel %vm232, %v2743, %v2745
    %v2750 = vsel %vm232, %v2741, %v2743
    %v2751 = vsel %vm232, %v2747, %v2741
    %v2756 = vrot.slane %v2749, 7
    %v2757 = vrot.slane %v2748, 6
    %v2758 = vrot.slane %v2751, 5
    %v2759 = vsel %vm55, %v2750, %v2756
    %v2760 = vsel %vm57, %v2757, %v2758
    %v2761 = vsel %vm59, %v2759, %v2760
    %v2763 = vmul.f32 %v1462, %v2761
    %v2764 = vadd.f32 %v2731, %v2763
    %2765 = vrot.lane.b32.xlu0 %v2451, 111
    %v2766 = vpop.permute.xlu0 %2765
    %2767 = vrot.lane.b32.xlu0 %v2474, 111
    %v2768 = vpop.permute.xlu0 %2767
    %2769 = vrot.lane.b32.xlu0 %v2497, 111
    %v2770 = vpop.permute.xlu0 %2769
    %2771 = vrot.lane.b32.xlu0 %v2520, 111
    %v2772 = vpop.permute.xlu0 %2771
    %v2773 = vsel %vm262, %v2770, %v2772
    %v2774 = vsel %vm262, %v2768, %v2770
    %v2775 = vsel %vm262, %v2766, %v2768
    %v2776 = vsel %vm262, %v2772, %v2766
    %v2781 = vrot.slane %v2774, 7
    %v2782 = vrot.slane %v2773, 6
    %v2783 = vrot.slane %v2776, 5
    %v2784 = vsel %vm55, %v2775, %v2781
    %v2785 = vsel %vm57, %v2782, %v2783
    %v2786 = vsel %vm59, %v2784, %v2785
    %v2788 = vmul.f32 %v1584, %v2786
    %v2789 = vadd.f32 %v2764, %v2788
    %2790 = vst.msk [vmem:[#allocation3] sm:$0xf] %vm66, %v2789
    // Predicated region
    $region18: #{tpu_custom_call.1} parent=1 // pred_check
      _
    $region19: #{tpu_custom_call.1} parent=1 // pred_check_branch
      %2792 = sbr.rel (0) target = $region21
    $region20: #{tpu_custom_call.1} parent=1 // pred_region
      %2794 = vsyncadd [#allocation4], 0
      %s2796 = sshll.u32 [#allocation3], 4
      %s2797 = int_to_ptr.vmem [resolvable:$true] %s2796
      %s2798 = sshll.u32 %s4, 4
      %s2799 = int_to_ptr.hbm [resolvable:$true] %s2798
      %2801 = dma.vmem_to_hbm [thread:$0]  %s2797, 64, %s2799, [#allocation4]
    $region21: #{tpu_custom_call.1} parent=1 // pred_fallthru
      _
    // Predicated region
    $region22: #{tpu_custom_call.1} parent=1 // pred_check
      _
    $region23: #{tpu_custom_call.1} parent=1 // pred_check_branch
      %2803 = sbr.rel (0) target = $region25
    $region24: #{tpu_custom_call.1} parent=1 // pred_region
      %2805 = dma.done [#allocation4], 64
    $region25: #{tpu_custom_call.1} parent=1 // pred_fallthru
      _
    %2806 = vsyncpa [#allocation4], 1

</llo_original>
